<compile_context>
chip_gen: v6e
topology: v6e:2x2x1
jax: 0.10.0
libtpu: 0.0.40
codegen_flags: <defaults>
</compile_context>

<pallas_src>
import functools

import jax
import jax.numpy as jnp
from jax import lax
from jax.experimental import pallas as pl
from jax.experimental.pallas import tpu as pltpu

NUM = 2          # number of SK branches (PyTorch default num=2, dilations 1..NUM)
BN_EPS = 1e-5


def _sk_block_kernel(x_ref, w0_ref, s0_ref, b0_ref, w1_ref, s1_ref, b1_ref,
                     fc1_ref, fc2a_ref, fc2b_ref, o_ref, *,
                     img_h, img_w, cin, cout, pad):
    """Whole SK block for one batch element.

    x_ref:    (1, Hp, Wp, Cin)  bf16, input padded by `pad` on H and W
    w{0,1}:   (9, Cin, Cout)    bf16, per-tap conv weights (tap = ky*3 + kx)
    s/b{0,1}: (1, Cout)         f32, folded BatchNorm scale / bias
    fc1:      (Cout, Cr)        f32, GAP 1/(H*W) already folded in
    fc2a/b:   (Cr, Cout)        f32, branch-0 / branch-1 attention logits
    o_ref:    (1, H*W, Cout)    f32
    """
    hw = img_h * img_w
    # One bf16 HBM->VMEM copy per grid step; upcast once so all spatial
    # slicing / relayouts happen on 32-bit layouts, then cast each im2col tap
    # back to bf16 right before it feeds the MXU.
    x = x_ref[0].astype(jnp.float32)                       # (Hp, Wp, Cin)

    def conv_bn_relu(w_ref, scale_ref, bias_ref, dilation):
        off = pad - dilation                               # start in padded coords

        def tap_dot(ky, kx):
            r0 = off + ky * dilation
            c0 = off + kx * dilation
            tap = x[r0:r0 + img_h, c0:c0 + img_w, :].reshape(hw, cin)
            # bf16 x bf16 MXU dot, f32 accumulation.
            return jnp.dot(tap.astype(jnp.bfloat16), w_ref[3 * ky + kx],
                           preferred_element_type=jnp.float32)

        acc = tap_dot(0, 0)
        for k in range(1, 9):
            acc = acc + tap_dot(k // 3, k % 3)
        # Folded (inference-mode) BatchNorm + ReLU, in f32.
        return jnp.maximum(acc * scale_ref[...] + bias_ref[...], 0.0)

    # ---- Split: two dilated-conv branches from the same padded input.
    f0 = conv_bn_relu(w0_ref, s0_ref, b0_ref, dilation=1)   # (HW, Cout)
    f1 = conv_bn_relu(w1_ref, s1_ref, b1_ref, dilation=2)   # (HW, Cout)

    # ---- Fuse: global average pool (1/HW folded into fc1) -> fc1 -> ReLU -> fc2.
    s = jnp.sum(f0 + f1, axis=0, keepdims=True)             # (1, Cout)
    hid = jnp.maximum(
        jnp.dot(s, fc1_ref[...], preferred_element_type=jnp.float32), 0.0)
    z0 = jnp.dot(hid, fc2a_ref[...], preferred_element_type=jnp.float32)
    z1 = jnp.dot(hid, fc2b_ref[...], preferred_element_type=jnp.float32)

    # ---- Select: softmax over the branch axis (per channel), weighted sum.
    m = jnp.maximum(z0, z1)
    e0 = jnp.exp(z0 - m)
    e1 = jnp.exp(z1 - m)
    inv = 1.0 / (e0 + e1)
    o_ref[0] = (e0 * inv) * f0 + (e1 * inv) * f1


def sk_block_forward(x_nchw, params):
    b, c, h, w = x_nchw.shape
    cout = params["out_chans"]
    pad = NUM                       # max dilation among the branches
    hp, wp = h + 2 * pad, w + 2 * pad
    hw = h * w

    # NCHW -> NHWC (channels on the lane axis), bf16 activations, padded once
    # with the max dilation so both branches share one padded input read.
    # TODO(synk): in a channels-last pipeline these boundary transposes would
    #             be dropped entirely.
    x = jnp.transpose(x_nchw, (0, 2, 3, 1)).astype(jnp.bfloat16)
    xp = jnp.pad(x, ((0, 0), (pad, pad), (pad, pad), (0, 0)))

    fc1 = params["fc_w1"] * (1.0 / hw)     # fold GAP normalization host-side
    fc2a = params["fc_w2"][:, :cout]       # branch-0 attention logits
    fc2b = params["fc_w2"][:, cout:]       # branch-1 attention logits

    # Weights / BN params / fc weights are resident across the batch grid.
    rep2 = lambda a: pl.BlockSpec(a.shape, lambda i: (0, 0))
    rep3 = lambda a: pl.BlockSpec(a.shape, lambda i: (0, 0, 0))

    kernel = functools.partial(_sk_block_kernel, img_h=h, img_w=w,
                               cin=c, cout=cout, pad=pad)

    out = pl.pallas_call(
        kernel,
        out_shape=jax.ShapeDtypeStruct((b, hw, cout), jnp.float32),
        grid=(b,),
        in_specs=[
            pl.BlockSpec((1, hp, wp, c), lambda i: (i, 0, 0, 0)),   # padded x
            rep3(params["w_taps"][0]),
            rep2(params["bn_scale"][0]),
            rep2(params["bn_bias"][0]),
            rep3(params["w_taps"][1]),
            rep2(params["bn_scale"][1]),
            rep2(params["bn_bias"][1]),
            rep2(fc1),
            rep2(fc2a),
            rep2(fc2b),
        ],
        out_specs=pl.BlockSpec((1, hw, cout), lambda i: (i, 0, 0)),
        compiler_params=pltpu.CompilerParams(
            dimension_semantics=("parallel",)),
    )(xp,
      params["w_taps"][0], params["bn_scale"][0], params["bn_bias"][0],
      params["w_taps"][1], params["bn_scale"][1], params["bn_bias"][1],
      fc1, fc2a, fc2b)

    return jnp.transpose(out.reshape(b, h, w, cout), (0, 3, 1, 2))   # -> NCHW


def init_params(key, in_chans, out_chans, reduction=16):
    # The PyTorch module feeds the GAP'd fused feature (out_chans channels)
    # into an fc whose first layer takes in_chans inputs, so the module only
    # works when in_chans == out_chans; we keep that assumption here.
    assert in_chans == out_chans
    cr = max(out_chans // reduction, 1)
    keys = jax.random.split(key, 4 * NUM + 2)
    w_oihw, w_taps, bn_scale, bn_bias = [], [], [], []
    for i in range(NUM):
        kw, kg, kb, km = keys[4 * i:4 * i + 4]
        wgt = jax.random.normal(kw, (out_chans, in_chans, 3, 3), jnp.float32)
        wgt = wgt * (2.0 / (9 * in_chans)) ** 0.5
        wgt_bf16 = wgt.astype(jnp.bfloat16)          # what the MXU consumes
        wgt_q = wgt_bf16.astype(jnp.float32)         # same values, f32, for ref
        gamma = 1.0 + 0.1 * jax.random.normal(kg, (out_chans,), jnp.float32)
        beta = 0.1 * jax.random.normal(kb, (out_chans,), jnp.float32)
        mean = 0.1 * jax.random.normal(km, (out_chans,), jnp.float32)
        var = jnp.ones((out_chans,), jnp.float32)    # PyTorch BN default init
        scale = gamma / jnp.sqrt(var + BN_EPS)
        bias = beta - mean * scale
        w_oihw.append(wgt_q)
        # (O,I,Ky,Kx) -> (Ky,Kx,I,O) -> (9, Cin, Cout): tap k = ky*3 + kx
        w_taps.append(jnp.transpose(wgt_bf16, (2, 3, 1, 0))
                      .reshape(9, in_chans, out_chans))
        bn_scale.append(scale.reshape(1, out_chans))
        bn_bias.append(bias.reshape(1, out_chans))
    k1, k2 = keys[4 * NUM:4 * NUM + 2]
    fc1 = jax.random.normal(k1, (cr, in_chans), jnp.float32) * (1.0 / in_chans) ** 0.5
    fc2 = jax.random.normal(k2, (out_chans * NUM, cr), jnp.float32) * (1.0 / cr) ** 0.5
    return dict(out_chans=out_chans, w_oihw=w_oihw, w_taps=w_taps,
                bn_scale=bn_scale, bn_bias=bn_bias,
                fc_w1=fc1.T, fc_w2=fc2.T)


def sk_block_reference(x_nchw, params):
    """Pure-JAX reference (mirrors the PyTorch forward) on the same
    bf16-quantized operands the kernel consumes, with f32 math."""
    xq = x_nchw.astype(jnp.bfloat16).astype(jnp.float32)
    feats = []
    for i in range(NUM):
        d = i + 1
        y = lax.conv_general_dilated(
            xq, params["w_oihw"][i], window_strides=(1, 1),
            padding=[(d, d), (d, d)], rhs_dilation=(d, d),
            dimension_numbers=("NCHW", "OIHW", "NCHW"),
            preferred_element_type=jnp.float32)
        sc = params["bn_scale"][i].reshape(1, -1, 1, 1)
        bi = params["bn_bias"][i].reshape(1, -1, 1, 1)
        feats.append(jnp.maximum(y * sc + bi, 0.0))
    u = feats[0] + feats[1]
    s = jnp.mean(u, axis=(2, 3))                        # GAP -> (B, C)
    h = jnp.maximum(s @ params["fc_w1"], 0.0)
    z = (h @ params["fc_w2"]).reshape(s.shape[0], NUM, -1)
    a = jax.nn.softmax(z, axis=1)
    return (a[:, 0][:, :, None, None] * feats[0]
            + a[:, 1][:, :, None, None] * feats[1])


if __name__ == "__main__":
    # in_chans = out_chans = 32 (reduction=16 -> hidden fc dim 2), 16x16 maps
    B, C, H, W = 2, 32, 16, 16
    key = jax.random.PRNGKey(0)
    kx_, kp_ = jax.random.split(key)
    x = jax.random.normal(kx_, (B, C, H, W), jnp.float32)
    params = init_params(kp_, C, C, reduction=16)

    out = jax.block_until_ready(sk_block_forward(x, params))
    ref = jax.block_until_ready(sk_block_reference(x, params))

    assert out.shape == (B, C, H, W), out.shape
    # Kernel and reference see identically bf16-quantized conv operands; the
    # only divergence is f32 accumulation order, so this tolerance is loose.
    max_err = float(jnp.max(jnp.abs(out - ref)))
    assert max_err < 2e-3, f"max abs error {max_err}"
    print("KERNEL_OK")
</pallas_src>

<mosaic_0001>
module attributes {stable_mosaic.version = 11 : i64} {
  func.func @_sk_block_kernel(%arg0: i32, %arg1: memref<1x20x20x32xbf16, #tpu.memory_space<vmem>>, %arg2: memref<9x32x32xbf16, #tpu.memory_space<vmem>>, %arg3: memref<1x32xf32, #tpu.memory_space<vmem>>, %arg4: memref<1x32xf32, #tpu.memory_space<vmem>>, %arg5: memref<9x32x32xbf16, #tpu.memory_space<vmem>>, %arg6: memref<1x32xf32, #tpu.memory_space<vmem>>, %arg7: memref<1x32xf32, #tpu.memory_space<vmem>>, %arg8: memref<32x2xf32, #tpu.memory_space<vmem>>, %arg9: memref<2x32xf32, #tpu.memory_space<vmem>>, %arg10: memref<2x32xf32, #tpu.memory_space<vmem>>, %arg11: memref<1x256x32xf32, #tpu.memory_space<vmem>>) attributes {dimension_semantics = [#tpu.dimension_semantics<parallel>], iteration_bounds = array<i64: 2>, scalar_prefetch = 0 : i64, scratch_operands = 0 : i64, tpu.core_type = #tpu.core_type<tc>, window_params = [{transform_indices = @transform_0, window_bounds = array<i64: 1, 20, 20, 32>}, {pipeline_mode = #tpu.pipeline_mode<synchronous>, transform_indices = @transform_1, window_bounds = array<i64: 9, 32, 32>}, {pipeline_mode = #tpu.pipeline_mode<synchronous>, transform_indices = @transform_2, window_bounds = array<i64: 1, 32>}, {pipeline_mode = #tpu.pipeline_mode<synchronous>, transform_indices = @transform_3, window_bounds = array<i64: 1, 32>}, {pipeline_mode = #tpu.pipeline_mode<synchronous>, transform_indices = @transform_4, window_bounds = array<i64: 9, 32, 32>}, {pipeline_mode = #tpu.pipeline_mode<synchronous>, transform_indices = @transform_5, window_bounds = array<i64: 1, 32>}, {pipeline_mode = #tpu.pipeline_mode<synchronous>, transform_indices = @transform_6, window_bounds = array<i64: 1, 32>}, {pipeline_mode = #tpu.pipeline_mode<synchronous>, transform_indices = @transform_7, window_bounds = array<i64: 32, 2>}, {pipeline_mode = #tpu.pipeline_mode<synchronous>, transform_indices = @transform_8, window_bounds = array<i64: 2, 32>}, {pipeline_mode = #tpu.pipeline_mode<synchronous>, transform_indices = @transform_9, window_bounds = array<i64: 2, 32>}, {transform_indices = @transform_10, window_bounds = array<i64: 1, 256, 32>}]} {
    %c0 = arith.constant 0 : index
    %c0_0 = arith.constant 0 : index
    %c0_1 = arith.constant 0 : index
    %c0_2 = arith.constant 0 : index
    %0 = vector.load %arg1[%c0, %c0_0, %c0_1, %c0_2] : memref<1x20x20x32xbf16, #tpu.memory_space<vmem>>, vector<1x20x20x32xbf16>
    %1 = vector.shape_cast %0 : vector<1x20x20x32xbf16> to vector<20x20x32xbf16>
    %2 = arith.extf %1 : vector<20x20x32xbf16> to vector<20x20x32xf32>
    %3 = vector.extract_strided_slice %2 {offsets = [1, 1, 0], sizes = [16, 16, 32], strides = [1, 1, 1]} : vector<20x20x32xf32> to vector<16x16x32xf32>
    %4 = vector.shape_cast %3 : vector<16x16x32xf32> to vector<256x32xf32>
    %5 = arith.truncf %4 : vector<256x32xf32> to vector<256x32xbf16>
    %c0_3 = arith.constant 0 : index
    %c0_4 = arith.constant 0 : index
    %c0_5 = arith.constant 0 : index
    %6 = vector.load %arg2[%c0_3, %c0_4, %c0_5] : memref<9x32x32xbf16, #tpu.memory_space<vmem>>, vector<1x32x32xbf16>
    %7 = vector.shape_cast %6 : vector<1x32x32xbf16> to vector<32x32xbf16>
    %cst = arith.constant dense<0.000000e+00> : vector<256x32xf32>
    %8 = tpu.matmul %5, %7, %cst {dimension_numbers = #tpu.dot_dimension_numbers<[1], [0], [0], [1], [0, 0, 1, 1], [], []>} : vector<256x32xbf16>, vector<32x32xbf16>, vector<256x32xf32> -> vector<256x32xf32>
    %9 = vector.extract_strided_slice %2 {offsets = [1, 2, 0], sizes = [16, 16, 32], strides = [1, 1, 1]} : vector<20x20x32xf32> to vector<16x16x32xf32>
    %10 = vector.shape_cast %9 : vector<16x16x32xf32> to vector<256x32xf32>
    %11 = arith.truncf %10 : vector<256x32xf32> to vector<256x32xbf16>
    %c1 = arith.constant 1 : index
    %c0_6 = arith.constant 0 : index
    %c0_7 = arith.constant 0 : index
    %12 = vector.load %arg2[%c1, %c0_6, %c0_7] : memref<9x32x32xbf16, #tpu.memory_space<vmem>>, vector<1x32x32xbf16>
    %13 = vector.shape_cast %12 : vector<1x32x32xbf16> to vector<32x32xbf16>
    %cst_8 = arith.constant dense<0.000000e+00> : vector<256x32xf32>
    %14 = tpu.matmul %11, %13, %cst_8 {dimension_numbers = #tpu.dot_dimension_numbers<[1], [0], [0], [1], [0, 0, 1, 1], [], []>} : vector<256x32xbf16>, vector<32x32xbf16>, vector<256x32xf32> -> vector<256x32xf32>
    %15 = arith.addf %8, %14 : vector<256x32xf32>
    %16 = vector.extract_strided_slice %2 {offsets = [1, 3, 0], sizes = [16, 16, 32], strides = [1, 1, 1]} : vector<20x20x32xf32> to vector<16x16x32xf32>
    %17 = vector.shape_cast %16 : vector<16x16x32xf32> to vector<256x32xf32>
    %18 = arith.truncf %17 : vector<256x32xf32> to vector<256x32xbf16>
    %c2 = arith.constant 2 : index
    %c0_9 = arith.constant 0 : index
    %c0_10 = arith.constant 0 : index
    %19 = vector.load %arg2[%c2, %c0_9, %c0_10] : memref<9x32x32xbf16, #tpu.memory_space<vmem>>, vector<1x32x32xbf16>
    %20 = vector.shape_cast %19 : vector<1x32x32xbf16> to vector<32x32xbf16>
    %cst_11 = arith.constant dense<0.000000e+00> : vector<256x32xf32>
    %21 = tpu.matmul %18, %20, %cst_11 {dimension_numbers = #tpu.dot_dimension_numbers<[1], [0], [0], [1], [0, 0, 1, 1], [], []>} : vector<256x32xbf16>, vector<32x32xbf16>, vector<256x32xf32> -> vector<256x32xf32>
    %22 = arith.addf %15, %21 : vector<256x32xf32>
    %23 = vector.extract_strided_slice %2 {offsets = [2, 1, 0], sizes = [16, 16, 32], strides = [1, 1, 1]} : vector<20x20x32xf32> to vector<16x16x32xf32>
    %24 = vector.shape_cast %23 : vector<16x16x32xf32> to vector<256x32xf32>
    %25 = arith.truncf %24 : vector<256x32xf32> to vector<256x32xbf16>
    %c3 = arith.constant 3 : index
    %c0_12 = arith.constant 0 : index
    %c0_13 = arith.constant 0 : index
    %26 = vector.load %arg2[%c3, %c0_12, %c0_13] : memref<9x32x32xbf16, #tpu.memory_space<vmem>>, vector<1x32x32xbf16>
    %27 = vector.shape_cast %26 : vector<1x32x32xbf16> to vector<32x32xbf16>
    %cst_14 = arith.constant dense<0.000000e+00> : vector<256x32xf32>
    %28 = tpu.matmul %25, %27, %cst_14 {dimension_numbers = #tpu.dot_dimension_numbers<[1], [0], [0], [1], [0, 0, 1, 1], [], []>} : vector<256x32xbf16>, vector<32x32xbf16>, vector<256x32xf32> -> vector<256x32xf32>
    %29 = arith.addf %22, %28 : vector<256x32xf32>
    %30 = vector.extract_strided_slice %2 {offsets = [2, 2, 0], sizes = [16, 16, 32], strides = [1, 1, 1]} : vector<20x20x32xf32> to vector<16x16x32xf32>
    %31 = vector.shape_cast %30 : vector<16x16x32xf32> to vector<256x32xf32>
    %32 = arith.truncf %31 : vector<256x32xf32> to vector<256x32xbf16>
    %c4 = arith.constant 4 : index
    %c0_15 = arith.constant 0 : index
    %c0_16 = arith.constant 0 : index
    %33 = vector.load %arg2[%c4, %c0_15, %c0_16] : memref<9x32x32xbf16, #tpu.memory_space<vmem>>, vector<1x32x32xbf16>
    %34 = vector.shape_cast %33 : vector<1x32x32xbf16> to vector<32x32xbf16>
    %cst_17 = arith.constant dense<0.000000e+00> : vector<256x32xf32>
    %35 = tpu.matmul %32, %34, %cst_17 {dimension_numbers = #tpu.dot_dimension_numbers<[1], [0], [0], [1], [0, 0, 1, 1], [], []>} : vector<256x32xbf16>, vector<32x32xbf16>, vector<256x32xf32> -> vector<256x32xf32>
    %36 = arith.addf %29, %35 : vector<256x32xf32>
    %37 = vector.extract_strided_slice %2 {offsets = [2, 3, 0], sizes = [16, 16, 32], strides = [1, 1, 1]} : vector<20x20x32xf32> to vector<16x16x32xf32>
    %38 = vector.shape_cast %37 : vector<16x16x32xf32> to vector<256x32xf32>
    %39 = arith.truncf %38 : vector<256x32xf32> to vector<256x32xbf16>
    %c5 = arith.constant 5 : index
    %c0_18 = arith.constant 0 : index
    %c0_19 = arith.constant 0 : index
    %40 = vector.load %arg2[%c5, %c0_18, %c0_19] : memref<9x32x32xbf16, #tpu.memory_space<vmem>>, vector<1x32x32xbf16>
    %41 = vector.shape_cast %40 : vector<1x32x32xbf16> to vector<32x32xbf16>
    %cst_20 = arith.constant dense<0.000000e+00> : vector<256x32xf32>
    %42 = tpu.matmul %39, %41, %cst_20 {dimension_numbers = #tpu.dot_dimension_numbers<[1], [0], [0], [1], [0, 0, 1, 1], [], []>} : vector<256x32xbf16>, vector<32x32xbf16>, vector<256x32xf32> -> vector<256x32xf32>
    %43 = arith.addf %36, %42 : vector<256x32xf32>
    %44 = vector.extract_strided_slice %2 {offsets = [3, 1, 0], sizes = [16, 16, 32], strides = [1, 1, 1]} : vector<20x20x32xf32> to vector<16x16x32xf32>
    %45 = vector.shape_cast %44 : vector<16x16x32xf32> to vector<256x32xf32>
    %46 = arith.truncf %45 : vector<256x32xf32> to vector<256x32xbf16>
    %c6 = arith.constant 6 : index
    %c0_21 = arith.constant 0 : index
    %c0_22 = arith.constant 0 : index
    %47 = vector.load %arg2[%c6, %c0_21, %c0_22] : memref<9x32x32xbf16, #tpu.memory_space<vmem>>, vector<1x32x32xbf16>
    %48 = vector.shape_cast %47 : vector<1x32x32xbf16> to vector<32x32xbf16>
    %cst_23 = arith.constant dense<0.000000e+00> : vector<256x32xf32>
    %49 = tpu.matmul %46, %48, %cst_23 {dimension_numbers = #tpu.dot_dimension_numbers<[1], [0], [0], [1], [0, 0, 1, 1], [], []>} : vector<256x32xbf16>, vector<32x32xbf16>, vector<256x32xf32> -> vector<256x32xf32>
    %50 = arith.addf %43, %49 : vector<256x32xf32>
    %51 = vector.extract_strided_slice %2 {offsets = [3, 2, 0], sizes = [16, 16, 32], strides = [1, 1, 1]} : vector<20x20x32xf32> to vector<16x16x32xf32>
    %52 = vector.shape_cast %51 : vector<16x16x32xf32> to vector<256x32xf32>
    %53 = arith.truncf %52 : vector<256x32xf32> to vector<256x32xbf16>
    %c7 = arith.constant 7 : index
    %c0_24 = arith.constant 0 : index
    %c0_25 = arith.constant 0 : index
    %54 = vector.load %arg2[%c7, %c0_24, %c0_25] : memref<9x32x32xbf16, #tpu.memory_space<vmem>>, vector<1x32x32xbf16>
    %55 = vector.shape_cast %54 : vector<1x32x32xbf16> to vector<32x32xbf16>
    %cst_26 = arith.constant dense<0.000000e+00> : vector<256x32xf32>
    %56 = tpu.matmul %53, %55, %cst_26 {dimension_numbers = #tpu.dot_dimension_numbers<[1], [0], [0], [1], [0, 0, 1, 1], [], []>} : vector<256x32xbf16>, vector<32x32xbf16>, vector<256x32xf32> -> vector<256x32xf32>
    %57 = arith.addf %50, %56 : vector<256x32xf32>
    %58 = vector.extract_strided_slice %2 {offsets = [3, 3, 0], sizes = [16, 16, 32], strides = [1, 1, 1]} : vector<20x20x32xf32> to vector<16x16x32xf32>
    %59 = vector.shape_cast %58 : vector<16x16x32xf32> to vector<256x32xf32>
    %60 = arith.truncf %59 : vector<256x32xf32> to vector<256x32xbf16>
    %c8 = arith.constant 8 : index
    %c0_27 = arith.constant 0 : index
    %c0_28 = arith.constant 0 : index
    %61 = vector.load %arg2[%c8, %c0_27, %c0_28] : memref<9x32x32xbf16, #tpu.memory_space<vmem>>, vector<1x32x32xbf16>
    %62 = vector.shape_cast %61 : vector<1x32x32xbf16> to vector<32x32xbf16>
    %cst_29 = arith.constant dense<0.000000e+00> : vector<256x32xf32>
    %63 = tpu.matmul %60, %62, %cst_29 {dimension_numbers = #tpu.dot_dimension_numbers<[1], [0], [0], [1], [0, 0, 1, 1], [], []>} : vector<256x32xbf16>, vector<32x32xbf16>, vector<256x32xf32> -> vector<256x32xf32>
    %64 = arith.addf %57, %63 : vector<256x32xf32>
    %c0_30 = arith.constant 0 : index
    %c0_31 = arith.constant 0 : index
    %65 = vector.load %arg3[%c0_30, %c0_31] : memref<1x32xf32, #tpu.memory_space<vmem>>, vector<1x32xf32>
    %66 = vector.broadcast %65 : vector<1x32xf32> to vector<256x32xf32>
    %67 = arith.mulf %64, %66 : vector<256x32xf32>
    %c0_32 = arith.constant 0 : index
    %c0_33 = arith.constant 0 : index
    %68 = vector.load %arg4[%c0_32, %c0_33] : memref<1x32xf32, #tpu.memory_space<vmem>>, vector<1x32xf32>
    %69 = vector.broadcast %68 : vector<1x32xf32> to vector<256x32xf32>
    %70 = arith.addf %67, %69 : vector<256x32xf32>
    %cst_34 = arith.constant 0.000000e+00 : f32
    %71 = vector.broadcast %cst_34 : f32 to vector<256x32xf32>
    %72 = arith.maximumf %70, %71 : vector<256x32xf32>
    %73 = vector.extract_strided_slice %2 {offsets = [0, 0, 0], sizes = [16, 16, 32], strides = [1, 1, 1]} : vector<20x20x32xf32> to vector<16x16x32xf32>
    %74 = vector.shape_cast %73 : vector<16x16x32xf32> to vector<256x32xf32>
    %75 = arith.truncf %74 : vector<256x32xf32> to vector<256x32xbf16>
    %c0_35 = arith.constant 0 : index
    %c0_36 = arith.constant 0 : index
    %c0_37 = arith.constant 0 : index
    %76 = vector.load %arg5[%c0_35, %c0_36, %c0_37] : memref<9x32x32xbf16, #tpu.memory_space<vmem>>, vector<1x32x32xbf16>
    %77 = vector.shape_cast %76 : vector<1x32x32xbf16> to vector<32x32xbf16>
    %cst_38 = arith.constant dense<0.000000e+00> : vector<256x32xf32>
    %78 = tpu.matmul %75, %77, %cst_38 {dimension_numbers = #tpu.dot_dimension_numbers<[1], [0], [0], [1], [0, 0, 1, 1], [], []>} : vector<256x32xbf16>, vector<32x32xbf16>, vector<256x32xf32> -> vector<256x32xf32>
    %79 = vector.extract_strided_slice %2 {offsets = [0, 2, 0], sizes = [16, 16, 32], strides = [1, 1, 1]} : vector<20x20x32xf32> to vector<16x16x32xf32>
    %80 = vector.shape_cast %79 : vector<16x16x32xf32> to vector<256x32xf32>
    %81 = arith.truncf %80 : vector<256x32xf32> to vector<256x32xbf16>
    %c1_39 = arith.constant 1 : index
    %c0_40 = arith.constant 0 : index
    %c0_41 = arith.constant 0 : index
    %82 = vector.load %arg5[%c1_39, %c0_40, %c0_41] : memref<9x32x32xbf16, #tpu.memory_space<vmem>>, vector<1x32x32xbf16>
    %83 = vector.shape_cast %82 : vector<1x32x32xbf16> to vector<32x32xbf16>
    %cst_42 = arith.constant dense<0.000000e+00> : vector<256x32xf32>
    %84 = tpu.matmul %81, %83, %cst_42 {dimension_numbers = #tpu.dot_dimension_numbers<[1], [0], [0], [1], [0, 0, 1, 1], [], []>} : vector<256x32xbf16>, vector<32x32xbf16>, vector<256x32xf32> -> vector<256x32xf32>
    %85 = arith.addf %78, %84 : vector<256x32xf32>
    %86 = vector.extract_strided_slice %2 {offsets = [0, 4, 0], sizes = [16, 16, 32], strides = [1, 1, 1]} : vector<20x20x32xf32> to vector<16x16x32xf32>
    %87 = vector.shape_cast %86 : vector<16x16x32xf32> to vector<256x32xf32>
    %88 = arith.truncf %87 : vector<256x32xf32> to vector<256x32xbf16>
    %c2_43 = arith.constant 2 : index
    %c0_44 = arith.constant 0 : index
    %c0_45 = arith.constant 0 : index
    %89 = vector.load %arg5[%c2_43, %c0_44, %c0_45] : memref<9x32x32xbf16, #tpu.memory_space<vmem>>, vector<1x32x32xbf16>
    %90 = vector.shape_cast %89 : vector<1x32x32xbf16> to vector<32x32xbf16>
    %cst_46 = arith.constant dense<0.000000e+00> : vector<256x32xf32>
    %91 = tpu.matmul %88, %90, %cst_46 {dimension_numbers = #tpu.dot_dimension_numbers<[1], [0], [0], [1], [0, 0, 1, 1], [], []>} : vector<256x32xbf16>, vector<32x32xbf16>, vector<256x32xf32> -> vector<256x32xf32>
    %92 = arith.addf %85, %91 : vector<256x32xf32>
    %93 = vector.extract_strided_slice %2 {offsets = [2, 0, 0], sizes = [16, 16, 32], strides = [1, 1, 1]} : vector<20x20x32xf32> to vector<16x16x32xf32>
    %94 = vector.shape_cast %93 : vector<16x16x32xf32> to vector<256x32xf32>
    %95 = arith.truncf %94 : vector<256x32xf32> to vector<256x32xbf16>
    %c3_47 = arith.constant 3 : index
    %c0_48 = arith.constant 0 : index
    %c0_49 = arith.constant 0 : index
    %96 = vector.load %arg5[%c3_47, %c0_48, %c0_49] : memref<9x32x32xbf16, #tpu.memory_space<vmem>>, vector<1x32x32xbf16>
    %97 = vector.shape_cast %96 : vector<1x32x32xbf16> to vector<32x32xbf16>
    %cst_50 = arith.constant dense<0.000000e+00> : vector<256x32xf32>
    %98 = tpu.matmul %95, %97, %cst_50 {dimension_numbers = #tpu.dot_dimension_numbers<[1], [0], [0], [1], [0, 0, 1, 1], [], []>} : vector<256x32xbf16>, vector<32x32xbf16>, vector<256x32xf32> -> vector<256x32xf32>
    %99 = arith.addf %92, %98 : vector<256x32xf32>
    %100 = vector.extract_strided_slice %2 {offsets = [2, 2, 0], sizes = [16, 16, 32], strides = [1, 1, 1]} : vector<20x20x32xf32> to vector<16x16x32xf32>
    %101 = vector.shape_cast %100 : vector<16x16x32xf32> to vector<256x32xf32>
    %102 = arith.truncf %101 : vector<256x32xf32> to vector<256x32xbf16>
    %c4_51 = arith.constant 4 : index
    %c0_52 = arith.constant 0 : index
    %c0_53 = arith.constant 0 : index
    %103 = vector.load %arg5[%c4_51, %c0_52, %c0_53] : memref<9x32x32xbf16, #tpu.memory_space<vmem>>, vector<1x32x32xbf16>
    %104 = vector.shape_cast %103 : vector<1x32x32xbf16> to vector<32x32xbf16>
    %cst_54 = arith.constant dense<0.000000e+00> : vector<256x32xf32>
    %105 = tpu.matmul %102, %104, %cst_54 {dimension_numbers = #tpu.dot_dimension_numbers<[1], [0], [0], [1], [0, 0, 1, 1], [], []>} : vector<256x32xbf16>, vector<32x32xbf16>, vector<256x32xf32> -> vector<256x32xf32>
    %106 = arith.addf %99, %105 : vector<256x32xf32>
    %107 = vector.extract_strided_slice %2 {offsets = [2, 4, 0], sizes = [16, 16, 32], strides = [1, 1, 1]} : vector<20x20x32xf32> to vector<16x16x32xf32>
    %108 = vector.shape_cast %107 : vector<16x16x32xf32> to vector<256x32xf32>
    %109 = arith.truncf %108 : vector<256x32xf32> to vector<256x32xbf16>
    %c5_55 = arith.constant 5 : index
    %c0_56 = arith.constant 0 : index
    %c0_57 = arith.constant 0 : index
    %110 = vector.load %arg5[%c5_55, %c0_56, %c0_57] : memref<9x32x32xbf16, #tpu.memory_space<vmem>>, vector<1x32x32xbf16>
    %111 = vector.shape_cast %110 : vector<1x32x32xbf16> to vector<32x32xbf16>
    %cst_58 = arith.constant dense<0.000000e+00> : vector<256x32xf32>
    %112 = tpu.matmul %109, %111, %cst_58 {dimension_numbers = #tpu.dot_dimension_numbers<[1], [0], [0], [1], [0, 0, 1, 1], [], []>} : vector<256x32xbf16>, vector<32x32xbf16>, vector<256x32xf32> -> vector<256x32xf32>
    %113 = arith.addf %106, %112 : vector<256x32xf32>
    %114 = vector.extract_strided_slice %2 {offsets = [4, 0, 0], sizes = [16, 16, 32], strides = [1, 1, 1]} : vector<20x20x32xf32> to vector<16x16x32xf32>
    %115 = vector.shape_cast %114 : vector<16x16x32xf32> to vector<256x32xf32>
    %116 = arith.truncf %115 : vector<256x32xf32> to vector<256x32xbf16>
    %c6_59 = arith.constant 6 : index
    %c0_60 = arith.constant 0 : index
    %c0_61 = arith.constant 0 : index
    %117 = vector.load %arg5[%c6_59, %c0_60, %c0_61] : memref<9x32x32xbf16, #tpu.memory_space<vmem>>, vector<1x32x32xbf16>
    %118 = vector.shape_cast %117 : vector<1x32x32xbf16> to vector<32x32xbf16>
    %cst_62 = arith.constant dense<0.000000e+00> : vector<256x32xf32>
    %119 = tpu.matmul %116, %118, %cst_62 {dimension_numbers = #tpu.dot_dimension_numbers<[1], [0], [0], [1], [0, 0, 1, 1], [], []>} : vector<256x32xbf16>, vector<32x32xbf16>, vector<256x32xf32> -> vector<256x32xf32>
    %120 = arith.addf %113, %119 : vector<256x32xf32>
    %121 = vector.extract_strided_slice %2 {offsets = [4, 2, 0], sizes = [16, 16, 32], strides = [1, 1, 1]} : vector<20x20x32xf32> to vector<16x16x32xf32>
    %122 = vector.shape_cast %121 : vector<16x16x32xf32> to vector<256x32xf32>
    %123 = arith.truncf %122 : vector<256x32xf32> to vector<256x32xbf16>
    %c7_63 = arith.constant 7 : index
    %c0_64 = arith.constant 0 : index
    %c0_65 = arith.constant 0 : index
    %124 = vector.load %arg5[%c7_63, %c0_64, %c0_65] : memref<9x32x32xbf16, #tpu.memory_space<vmem>>, vector<1x32x32xbf16>
    %125 = vector.shape_cast %124 : vector<1x32x32xbf16> to vector<32x32xbf16>
    %cst_66 = arith.constant dense<0.000000e+00> : vector<256x32xf32>
    %126 = tpu.matmul %123, %125, %cst_66 {dimension_numbers = #tpu.dot_dimension_numbers<[1], [0], [0], [1], [0, 0, 1, 1], [], []>} : vector<256x32xbf16>, vector<32x32xbf16>, vector<256x32xf32> -> vector<256x32xf32>
    %127 = arith.addf %120, %126 : vector<256x32xf32>
    %128 = vector.extract_strided_slice %2 {offsets = [4, 4, 0], sizes = [16, 16, 32], strides = [1, 1, 1]} : vector<20x20x32xf32> to vector<16x16x32xf32>
    %129 = vector.shape_cast %128 : vector<16x16x32xf32> to vector<256x32xf32>
    %130 = arith.truncf %129 : vector<256x32xf32> to vector<256x32xbf16>
    %c8_67 = arith.constant 8 : index
    %c0_68 = arith.constant 0 : index
    %c0_69 = arith.constant 0 : index
    %131 = vector.load %arg5[%c8_67, %c0_68, %c0_69] : memref<9x32x32xbf16, #tpu.memory_space<vmem>>, vector<1x32x32xbf16>
    %132 = vector.shape_cast %131 : vector<1x32x32xbf16> to vector<32x32xbf16>
    %cst_70 = arith.constant dense<0.000000e+00> : vector<256x32xf32>
    %133 = tpu.matmul %130, %132, %cst_70 {dimension_numbers = #tpu.dot_dimension_numbers<[1], [0], [0], [1], [0, 0, 1, 1], [], []>} : vector<256x32xbf16>, vector<32x32xbf16>, vector<256x32xf32> -> vector<256x32xf32>
    %134 = arith.addf %127, %133 : vector<256x32xf32>
    %c0_71 = arith.constant 0 : index
    %c0_72 = arith.constant 0 : index
    %135 = vector.load %arg6[%c0_71, %c0_72] : memref<1x32xf32, #tpu.memory_space<vmem>>, vector<1x32xf32>
    %136 = vector.broadcast %135 : vector<1x32xf32> to vector<256x32xf32>
    %137 = arith.mulf %134, %136 : vector<256x32xf32>
    %c0_73 = arith.constant 0 : index
    %c0_74 = arith.constant 0 : index
    %138 = vector.load %arg7[%c0_73, %c0_74] : memref<1x32xf32, #tpu.memory_space<vmem>>, vector<1x32xf32>
    %139 = vector.broadcast %138 : vector<1x32xf32> to vector<256x32xf32>
    %140 = arith.addf %137, %139 : vector<256x32xf32>
    %cst_75 = arith.constant 0.000000e+00 : f32
    %141 = vector.broadcast %cst_75 : f32 to vector<256x32xf32>
    %142 = arith.maximumf %140, %141 : vector<256x32xf32>
    %143 = arith.addf %72, %142 : vector<256x32xf32>
    %cst_76 = arith.constant dense<0.000000e+00> : vector<32xf32>
    %144 = vector.multi_reduction <add>, %143, %cst_76 [0] : vector<256x32xf32> to vector<32xf32>
    %145 = vector.shape_cast %144 : vector<32xf32> to vector<1x32xf32>
    %c0_77 = arith.constant 0 : index
    %c0_78 = arith.constant 0 : index
    %146 = vector.load %arg8[%c0_77, %c0_78] : memref<32x2xf32, #tpu.memory_space<vmem>>, vector<32x2xf32>
    %cst_79 = arith.constant dense<0.000000e+00> : vector<1x2xf32>
    %147 = tpu.matmul %145, %146, %cst_79 {dimension_numbers = #tpu.dot_dimension_numbers<[1], [0], [0], [1], [0, 0, 1, 1], [], []>} : vector<1x32xf32>, vector<32x2xf32>, vector<1x2xf32> -> vector<1x2xf32>
    %cst_80 = arith.constant 0.000000e+00 : f32
    %148 = vector.broadcast %cst_80 : f32 to vector<1x2xf32>
    %149 = arith.maximumf %147, %148 : vector<1x2xf32>
    %c0_81 = arith.constant 0 : index
    %c0_82 = arith.constant 0 : index
    %150 = vector.load %arg9[%c0_81, %c0_82] : memref<2x32xf32, #tpu.memory_space<vmem>>, vector<2x32xf32>
    %cst_83 = arith.constant dense<0.000000e+00> : vector<1x32xf32>
    %151 = tpu.matmul %149, %150, %cst_83 {dimension_numbers = #tpu.dot_dimension_numbers<[1], [0], [0], [1], [0, 0, 1, 1], [], []>} : vector<1x2xf32>, vector<2x32xf32>, vector<1x32xf32> -> vector<1x32xf32>
    %c0_84 = arith.constant 0 : index
    %c0_85 = arith.constant 0 : index
    %152 = vector.load %arg10[%c0_84, %c0_85] : memref<2x32xf32, #tpu.memory_space<vmem>>, vector<2x32xf32>
    %cst_86 = arith.constant dense<0.000000e+00> : vector<1x32xf32>
    %153 = tpu.matmul %149, %152, %cst_86 {dimension_numbers = #tpu.dot_dimension_numbers<[1], [0], [0], [1], [0, 0, 1, 1], [], []>} : vector<1x2xf32>, vector<2x32xf32>, vector<1x32xf32> -> vector<1x32xf32>
    %154 = arith.maximumf %151, %153 : vector<1x32xf32>
    %155 = arith.subf %151, %154 : vector<1x32xf32>
    %156 = math.exp %155 : vector<1x32xf32>
    %157 = arith.subf %153, %154 : vector<1x32xf32>
    %158 = math.exp %157 : vector<1x32xf32>
    %159 = arith.addf %156, %158 : vector<1x32xf32>
    %cst_87 = arith.constant 1.000000e+00 : f32
    %160 = vector.broadcast %cst_87 : f32 to vector<1x32xf32>
    %161 = arith.divf %160, %159 : vector<1x32xf32>
    %162 = arith.mulf %156, %161 : vector<1x32xf32>
    %163 = vector.broadcast %162 : vector<1x32xf32> to vector<256x32xf32>
    %164 = arith.mulf %163, %72 : vector<256x32xf32>
    %165 = arith.mulf %158, %161 : vector<1x32xf32>
    %166 = vector.broadcast %165 : vector<1x32xf32> to vector<256x32xf32>
    %167 = arith.mulf %166, %142 : vector<256x32xf32>
    %168 = arith.addf %164, %167 : vector<256x32xf32>
    %c0_88 = arith.constant 0 : index
    %c0_89 = arith.constant 0 : index
    %c0_90 = arith.constant 0 : index
    %169 = vector.load %arg11[%c0_88, %c0_89, %c0_90] : memref<1x256x32xf32, #tpu.memory_space<vmem>>, vector<1x256x32xf32>
    %170 = vector.shape_cast %169 : vector<1x256x32xf32> to vector<256x32xf32>
    %171 = vector.shape_cast %168 : vector<256x32xf32> to vector<1x256x32xf32>
    tpu.vector_store %arg11[%c0_88, %c0_89, %c0_90], %171 {strides = array<i32>} : memref<1x256x32xf32, #tpu.memory_space<vmem>>, vector<1x256x32xf32>,
    return
  }
  func.func @transform_0(%arg0: i32) -> (i32, i32, i32, i32) {
    %c0_i32 = arith.constant 0 : i32
    %c0_i32_0 = arith.constant 0 : i32
    %c0_i32_1 = arith.constant 0 : i32
    %c0_i32_2 = arith.constant 0 : i32
    return %arg0, %c0_i32, %c0_i32_0, %c0_i32_1 : i32, i32, i32, i32
  }
  func.func @transform_1(%arg0: i32) -> (i32, i32, i32) {
    %c0_i32 = arith.constant 0 : i32
    %c0_i32_0 = arith.constant 0 : i32
    %c0_i32_1 = arith.constant 0 : i32
    %c0_i32_2 = arith.constant 0 : i32
    return %c0_i32, %c0_i32_0, %c0_i32_1 : i32, i32, i32
  }
  func.func @transform_2(%arg0: i32) -> (i32, i32) {
    %c0_i32 = arith.constant 0 : i32
    %c0_i32_0 = arith.constant 0 : i32
    %c0_i32_1 = arith.constant 0 : i32
    return %c0_i32, %c0_i32_0 : i32, i32
  }
  func.func @transform_3(%arg0: i32) -> (i32, i32) {
    %c0_i32 = arith.constant 0 : i32
    %c0_i32_0 = arith.constant 0 : i32
    %c0_i32_1 = arith.constant 0 : i32
    return %c0_i32, %c0_i32_0 : i32, i32
  }
  func.func @transform_4(%arg0: i32) -> (i32, i32, i32) {
    %c0_i32 = arith.constant 0 : i32
    %c0_i32_0 = arith.constant 0 : i32
    %c0_i32_1 = arith.constant 0 : i32
    %c0_i32_2 = arith.constant 0 : i32
    return %c0_i32, %c0_i32_0, %c0_i32_1 : i32, i32, i32
  }
  func.func @transform_5(%arg0: i32) -> (i32, i32) {
    %c0_i32 = arith.constant 0 : i32
    %c0_i32_0 = arith.constant 0 : i32
    %c0_i32_1 = arith.constant 0 : i32
    return %c0_i32, %c0_i32_0 : i32, i32
  }
  func.func @transform_6(%arg0: i32) -> (i32, i32) {
    %c0_i32 = arith.constant 0 : i32
    %c0_i32_0 = arith.constant 0 : i32
    %c0_i32_1 = arith.constant 0 : i32
    return %c0_i32, %c0_i32_0 : i32, i32
  }
  func.func @transform_7(%arg0: i32) -> (i32, i32) {
    %c0_i32 = arith.constant 0 : i32
    %c0_i32_0 = arith.constant 0 : i32
    %c0_i32_1 = arith.constant 0 : i32
    return %c0_i32, %c0_i32_0 : i32, i32
  }
  func.func @transform_8(%arg0: i32) -> (i32, i32) {
    %c0_i32 = arith.constant 0 : i32
    %c0_i32_0 = arith.constant 0 : i32
    %c0_i32_1 = arith.constant 0 : i32
    return %c0_i32, %c0_i32_0 : i32, i32
  }
  func.func @transform_9(%arg0: i32) -> (i32, i32) {
    %c0_i32 = arith.constant 0 : i32
    %c0_i32_0 = arith.constant 0 : i32
    %c0_i32_1 = arith.constant 0 : i32
    return %c0_i32, %c0_i32_0 : i32, i32
  }
  func.func @transform_10(%arg0: i32) -> (i32, i32, i32) {
    %c0_i32 = arith.constant 0 : i32
    %c0_i32_0 = arith.constant 0 : i32
    %c0_i32_1 = arith.constant 0 : i32
    return %arg0, %c0_i32, %c0_i32_0 : i32, i32, i32
  }
}

</mosaic_0001>

<llo_original>
// kernel: tpu_custom_call.1
$region0: #{tpu_custom_call.1}
  #allocation0 [shape = 'u32[]', space=smem, size = 0x4, offset = 0x4, fixed_abs, tag = 'smem constant byte address 0x4 - core index']
  #allocation1 [shape = 'u32[144,128]{1,0:T(1,128)}', space=vmem, size = 0x12000, scoped, tag = 'internal scratch']
  %s0 = inlined_call_operand.vmem [shape: bf16[2,20,20,32], index: 0, kind: input, shape index: {}]
  %s1 = inlined_call_operand.vmem [shape: bf16[9,32,32], index: 1, kind: input, shape index: {}]
  %s2 = inlined_call_operand.vmem [shape: f32[1,32], index: 2, kind: input, shape index: {}]
  %s3 = inlined_call_operand.vmem [shape: f32[1,32], index: 3, kind: input, shape index: {}]
  %s4 = inlined_call_operand.vmem [shape: bf16[9,32,32], index: 4, kind: input, shape index: {}]
  %s5 = inlined_call_operand.vmem [shape: f32[1,32], index: 5, kind: input, shape index: {}]
  %s6 = inlined_call_operand.vmem [shape: f32[1,32], index: 6, kind: input, shape index: {}]
  %s7 = inlined_call_operand.vmem [shape: f32[32,2], index: 7, kind: input, shape index: {}]
  %s8 = inlined_call_operand.vmem [shape: f32[2,32], index: 8, kind: input, shape index: {}]
  %s9 = inlined_call_operand.vmem [shape: f32[2,32], index: 9, kind: input, shape index: {}]
  %s10 = inlined_call_operand.vmem [shape: f32[2,256,32], index: 10, kind: output, shape index: {}]
  %s11 = sld [smem:[#allocation0]]
  $region73: #{tpu_custom_call.1} parent=0
    _
  %s13 = ssub.s32 1, %s11
  %s14 = scalar_select 0, %s13, %s11
  loop: start=0, step=1, limit=4
  $region2: #{tpu_custom_call.1} parent=0 // loop_pre_header
    _
  $region3: #{tpu_custom_call.1} parent=0 // loop_header
    %s16 = sphi 0, %s20
    %p17 = scmp.ge.s32.totalorder %s16, 4
    %s26 = sphi 0, %s28
    %s29 = sphi 0, %s26
    %s30 = sphi 0, %s29
    %s46 = sphi 0, %s30
    %s50 = sphi 0, %s50
    %s52 = sphi 0, %s50
    %s53 = sphi 0, %s52
    %s67 = sphi 0, %s53
    %s71 = sphi 0, %s71
    %s73 = sphi 0, %s71
    %s74 = sphi 0, %s73
    %s88 = sphi 0, %s74
    %s92 = sphi 0, %s92
    %s94 = sphi 0, %s92
    %s95 = sphi 0, %s94
    %s109 = sphi 0, %s95
    %s113 = sphi 0, %s113
    %s115 = sphi 0, %s113
    %s116 = sphi 0, %s115
    %s130 = sphi 0, %s116
    %s134 = sphi 0, %s134
    %s136 = sphi 0, %s134
    %s137 = sphi 0, %s136
    %s151 = sphi 0, %s137
    %s155 = sphi 0, %s155
    %s157 = sphi 0, %s155
    %s158 = sphi 0, %s157
    %s172 = sphi 0, %s158
    %s176 = sphi 0, %s176
    %s178 = sphi 0, %s176
    %s179 = sphi 0, %s178
    %s193 = sphi 0, %s179
    %s197 = sphi 0, %s197
    %s199 = sphi 0, %s197
    %s200 = sphi 0, %s199
    %s214 = sphi 0, %s200
    %s218 = sphi 0, %s218
    %s220 = sphi 0, %s218
    %s221 = sphi 0, %s220
    %s235 = sphi 0, %s221
    %s241 = sphi 0, %s243
    %s244 = sphi 0, %s241
    %s245 = sphi 0, %s244
    %s261 = sphi 0, %s245
  $region4: #{tpu_custom_call.1} parent=0 // loop_header_branch
    %19 = sbr.rel (%p17) target = $region8
  $region5: #{tpu_custom_call.1} parent=0 // loop_body
    %s21 = ssub.s32 %s16, 1
    %s22 = ssub.s32 %s16, 2
    %s23 = sadd.s32 %s16, 1
    %s24 = ssub.s32 %s16, %s23
    %p25 = scmp.eq.s32.totalorder %s24, 0
    %s27 = sadd.s32 %s26, 1
    %s28 = scalar_select %p25, %s26, %s27
    %p31 = pneg %p25
    %p32 = scmp.eq.s32.totalorder %s16, 1
    %p33 = por %p31, %p32
    %p34 = scmp.ne.s32.totalorder %s26, %s29
    %p35 = scmp.eq.s32.totalorder %s16, 0
    %p36 = por %p34, %p35
    %p37 = scmp.ne.s32.totalorder %s26, %s29
    %p38 = scmp.eq.s32.totalorder %s21, 1
    %p39 = por %p37, %p38
    %p40 = scmp.ne.s32.totalorder %s29, %s30
    %p41 = scmp.eq.s32.totalorder %s21, 0
    %p42 = por %p40, %p41
    %p43 = scmp.ne.s32.totalorder %s29, %s30
    %p44 = scmp.eq.s32.totalorder %s22, 1
    %p45 = por %p43, %p44
    %p47 = scmp.ne.s32.totalorder %s30, %s46
    %p48 = scmp.eq.s32.totalorder %s22, 0
    %p49 = por %p47, %p48
    %s51 = sadd.s32 %s50, 1
    %p54 = scmp.eq.s32.totalorder %s16, 1
    %p55 = scmp.ne.s32.totalorder %s50, %s52
    %p56 = scmp.eq.s32.totalorder %s16, 0
    %p57 = por %p55, %p56
    %p58 = scmp.ne.s32.totalorder %s50, %s52
    %p59 = scmp.eq.s32.totalorder %s21, 1
    %p60 = por %p58, %p59
    %p61 = scmp.ne.s32.totalorder %s52, %s53
    %p62 = scmp.eq.s32.totalorder %s21, 0
    %p63 = por %p61, %p62
    %p64 = scmp.ne.s32.totalorder %s52, %s53
    %p65 = scmp.eq.s32.totalorder %s22, 1
    %p66 = por %p64, %p65
    %p68 = scmp.ne.s32.totalorder %s53, %s67
    %p69 = scmp.eq.s32.totalorder %s22, 0
    %p70 = por %p68, %p69
    %s72 = sadd.s32 %s71, 1
    %p75 = scmp.eq.s32.totalorder %s16, 1
    %p76 = scmp.ne.s32.totalorder %s71, %s73
    %p77 = scmp.eq.s32.totalorder %s16, 0
    %p78 = por %p76, %p77
    %p79 = scmp.ne.s32.totalorder %s71, %s73
    %p80 = scmp.eq.s32.totalorder %s21, 1
    %p81 = por %p79, %p80
    %p82 = scmp.ne.s32.totalorder %s73, %s74
    %p83 = scmp.eq.s32.totalorder %s21, 0
    %p84 = por %p82, %p83
    %p85 = scmp.ne.s32.totalorder %s73, %s74
    %p86 = scmp.eq.s32.totalorder %s22, 1
    %p87 = por %p85, %p86
    %p89 = scmp.ne.s32.totalorder %s74, %s88
    %p90 = scmp.eq.s32.totalorder %s22, 0
    %p91 = por %p89, %p90
    %s93 = sadd.s32 %s92, 1
    %p96 = scmp.eq.s32.totalorder %s16, 1
    %p97 = scmp.ne.s32.totalorder %s92, %s94
    %p98 = scmp.eq.s32.totalorder %s16, 0
    %p99 = por %p97, %p98
    %p100 = scmp.ne.s32.totalorder %s92, %s94
    %p101 = scmp.eq.s32.totalorder %s21, 1
    %p102 = por %p100, %p101
    %p103 = scmp.ne.s32.totalorder %s94, %s95
    %p104 = scmp.eq.s32.totalorder %s21, 0
    %p105 = por %p103, %p104
    %p106 = scmp.ne.s32.totalorder %s94, %s95
    %p107 = scmp.eq.s32.totalorder %s22, 1
    %p108 = por %p106, %p107
    %p110 = scmp.ne.s32.totalorder %s95, %s109
    %p111 = scmp.eq.s32.totalorder %s22, 0
    %p112 = por %p110, %p111
    %s114 = sadd.s32 %s113, 1
    %p117 = scmp.eq.s32.totalorder %s16, 1
    %p118 = scmp.ne.s32.totalorder %s113, %s115
    %p119 = scmp.eq.s32.totalorder %s16, 0
    %p120 = por %p118, %p119
    %p121 = scmp.ne.s32.totalorder %s113, %s115
    %p122 = scmp.eq.s32.totalorder %s21, 1
    %p123 = por %p121, %p122
    %p124 = scmp.ne.s32.totalorder %s115, %s116
    %p125 = scmp.eq.s32.totalorder %s21, 0
    %p126 = por %p124, %p125
    %p127 = scmp.ne.s32.totalorder %s115, %s116
    %p128 = scmp.eq.s32.totalorder %s22, 1
    %p129 = por %p127, %p128
    %p131 = scmp.ne.s32.totalorder %s116, %s130
    %p132 = scmp.eq.s32.totalorder %s22, 0
    %p133 = por %p131, %p132
    %s135 = sadd.s32 %s134, 1
    %p138 = scmp.eq.s32.totalorder %s16, 1
    %p139 = scmp.ne.s32.totalorder %s134, %s136
    %p140 = scmp.eq.s32.totalorder %s16, 0
    %p141 = por %p139, %p140
    %p142 = scmp.ne.s32.totalorder %s134, %s136
    %p143 = scmp.eq.s32.totalorder %s21, 1
    %p144 = por %p142, %p143
    %p145 = scmp.ne.s32.totalorder %s136, %s137
    %p146 = scmp.eq.s32.totalorder %s21, 0
    %p147 = por %p145, %p146
    %p148 = scmp.ne.s32.totalorder %s136, %s137
    %p149 = scmp.eq.s32.totalorder %s22, 1
    %p150 = por %p148, %p149
    %p152 = scmp.ne.s32.totalorder %s137, %s151
    %p153 = scmp.eq.s32.totalorder %s22, 0
    %p154 = por %p152, %p153
    %s156 = sadd.s32 %s155, 1
    %p159 = scmp.eq.s32.totalorder %s16, 1
    %p160 = scmp.ne.s32.totalorder %s155, %s157
    %p161 = scmp.eq.s32.totalorder %s16, 0
    %p162 = por %p160, %p161
    %p163 = scmp.ne.s32.totalorder %s155, %s157
    %p164 = scmp.eq.s32.totalorder %s21, 1
    %p165 = por %p163, %p164
    %p166 = scmp.ne.s32.totalorder %s157, %s158
    %p167 = scmp.eq.s32.totalorder %s21, 0
    %p168 = por %p166, %p167
    %p169 = scmp.ne.s32.totalorder %s157, %s158
    %p170 = scmp.eq.s32.totalorder %s22, 1
    %p171 = por %p169, %p170
    %p173 = scmp.ne.s32.totalorder %s158, %s172
    %p174 = scmp.eq.s32.totalorder %s22, 0
    %p175 = por %p173, %p174
    %s177 = sadd.s32 %s176, 1
    %p180 = scmp.eq.s32.totalorder %s16, 1
    %p181 = scmp.ne.s32.totalorder %s176, %s178
    %p182 = scmp.eq.s32.totalorder %s16, 0
    %p183 = por %p181, %p182
    %p184 = scmp.ne.s32.totalorder %s176, %s178
    %p185 = scmp.eq.s32.totalorder %s21, 1
    %p186 = por %p184, %p185
    %p187 = scmp.ne.s32.totalorder %s178, %s179
    %p188 = scmp.eq.s32.totalorder %s21, 0
    %p189 = por %p187, %p188
    %p190 = scmp.ne.s32.totalorder %s178, %s179
    %p191 = scmp.eq.s32.totalorder %s22, 1
    %p192 = por %p190, %p191
    %p194 = scmp.ne.s32.totalorder %s179, %s193
    %p195 = scmp.eq.s32.totalorder %s22, 0
    %p196 = por %p194, %p195
    %s198 = sadd.s32 %s197, 1
    %p201 = scmp.eq.s32.totalorder %s16, 1
    %p202 = scmp.ne.s32.totalorder %s197, %s199
    %p203 = scmp.eq.s32.totalorder %s16, 0
    %p204 = por %p202, %p203
    %p205 = scmp.ne.s32.totalorder %s197, %s199
    %p206 = scmp.eq.s32.totalorder %s21, 1
    %p207 = por %p205, %p206
    %p208 = scmp.ne.s32.totalorder %s199, %s200
    %p209 = scmp.eq.s32.totalorder %s21, 0
    %p210 = por %p208, %p209
    %p211 = scmp.ne.s32.totalorder %s199, %s200
    %p212 = scmp.eq.s32.totalorder %s22, 1
    %p213 = por %p211, %p212
    %p215 = scmp.ne.s32.totalorder %s200, %s214
    %p216 = scmp.eq.s32.totalorder %s22, 0
    %p217 = por %p215, %p216
    %s219 = sadd.s32 %s218, 1
    %p222 = scmp.eq.s32.totalorder %s16, 1
    %p223 = scmp.ne.s32.totalorder %s218, %s220
    %p224 = scmp.eq.s32.totalorder %s16, 0
    %p225 = por %p223, %p224
    %p226 = scmp.ne.s32.totalorder %s218, %s220
    %p227 = scmp.eq.s32.totalorder %s21, 1
    %p228 = por %p226, %p227
    %p229 = scmp.ne.s32.totalorder %s220, %s221
    %p230 = scmp.eq.s32.totalorder %s21, 0
    %p231 = por %p229, %p230
    %p232 = scmp.ne.s32.totalorder %s220, %s221
    %p233 = scmp.eq.s32.totalorder %s22, 1
    %p234 = por %p232, %p233
    %p236 = scmp.ne.s32.totalorder %s221, %s235
    %p237 = scmp.eq.s32.totalorder %s22, 0
    %p238 = por %p236, %p237
    %s239 = ssub.s32 %s16, %s23
    %p240 = scmp.eq.s32.totalorder %s239, 0
    %s242 = sadd.s32 %s241, 1
    %s243 = scalar_select %p240, %s241, %s242
    %p246 = pneg %p240
    %p247 = scmp.eq.s32.totalorder %s16, 1
    %p248 = por %p246, %p247
    %p249 = scmp.ne.s32.totalorder %s241, %s244
    %p250 = scmp.eq.s32.totalorder %s16, 0
    %p251 = por %p249, %p250
    %p252 = scmp.ne.s32.totalorder %s241, %s244
    %p253 = scmp.eq.s32.totalorder %s21, 1
    %p254 = por %p252, %p253
    %p255 = scmp.ne.s32.totalorder %s244, %s245
    %p256 = scmp.eq.s32.totalorder %s21, 0
    %p257 = por %p255, %p256
    %p258 = scmp.ne.s32.totalorder %s244, %s245
    %p259 = scmp.eq.s32.totalorder %s22, 1
    %p260 = por %p258, %p259
    %p262 = scmp.ne.s32.totalorder %s245, %s261
    %p263 = scmp.eq.s32.totalorder %s22, 0
    %p264 = por %p262, %p263
    %p265 = scmp.le.s32.totalorder 1, %s16
    %p266 = scmp.lt.s32.totalorder %s16, 3
    %p267 = pnand %p265, %p266
    %p268 = pneg %p267
    // Predicated region
    $region9: #{tpu_custom_call.1} parent=5 // pred_check
      _
    $region10: #{tpu_custom_call.1} parent=5 // pred_check_branch
      %270 = sbr.rel (%p267) target = $region12
    $region11: #{tpu_custom_call.1} parent=5 // pred_region
      %s271 = ssub.s32 %s16, 1
      // Predicated region
      $region13: #{tpu_custom_call.1} parent=11 // pred_check
        %p272 = pneg %p63
      $region14: #{tpu_custom_call.1} parent=11 // pred_check_branch
        %274 = sbr.rel (%p272) target = $region16
      $region15: #{tpu_custom_call.1} parent=11 // pred_region
        _
      $region16: #{tpu_custom_call.1} parent=11 // pred_fallthru
        _
      // Predicated region
      $region17: #{tpu_custom_call.1} parent=11 // pred_check
        %p275 = pneg %p84
      $region18: #{tpu_custom_call.1} parent=11 // pred_check_branch
        %277 = sbr.rel (%p275) target = $region20
      $region19: #{tpu_custom_call.1} parent=11 // pred_region
        _
      $region20: #{tpu_custom_call.1} parent=11 // pred_fallthru
        _
      // Predicated region
      $region21: #{tpu_custom_call.1} parent=11 // pred_check
        %p278 = pneg %p105
      $region22: #{tpu_custom_call.1} parent=11 // pred_check_branch
        %280 = sbr.rel (%p278) target = $region24
      $region23: #{tpu_custom_call.1} parent=11 // pred_region
        _
      $region24: #{tpu_custom_call.1} parent=11 // pred_fallthru
        _
      // Predicated region
      $region25: #{tpu_custom_call.1} parent=11 // pred_check
        %p281 = pneg %p126
      $region26: #{tpu_custom_call.1} parent=11 // pred_check_branch
        %283 = sbr.rel (%p281) target = $region28
      $region27: #{tpu_custom_call.1} parent=11 // pred_region
        _
      $region28: #{tpu_custom_call.1} parent=11 // pred_fallthru
        _
      // Predicated region
      $region29: #{tpu_custom_call.1} parent=11 // pred_check
        %p284 = pneg %p147
      $region30: #{tpu_custom_call.1} parent=11 // pred_check_branch
        %286 = sbr.rel (%p284) target = $region32
      $region31: #{tpu_custom_call.1} parent=11 // pred_region
        _
      $region32: #{tpu_custom_call.1} parent=11 // pred_fallthru
        _
      // Predicated region
      $region33: #{tpu_custom_call.1} parent=11 // pred_check
        %p287 = pneg %p168
      $region34: #{tpu_custom_call.1} parent=11 // pred_check_branch
        %289 = sbr.rel (%p287) target = $region36
      $region35: #{tpu_custom_call.1} parent=11 // pred_region
        _
      $region36: #{tpu_custom_call.1} parent=11 // pred_fallthru
        _
      // Predicated region
      $region37: #{tpu_custom_call.1} parent=11 // pred_check
        %p290 = pneg %p189
      $region38: #{tpu_custom_call.1} parent=11 // pred_check_branch
        %292 = sbr.rel (%p290) target = $region40
      $region39: #{tpu_custom_call.1} parent=11 // pred_region
        _
      $region40: #{tpu_custom_call.1} parent=11 // pred_fallthru
        _
      // Predicated region
      $region41: #{tpu_custom_call.1} parent=11 // pred_check
        %p293 = pneg %p210
      $region42: #{tpu_custom_call.1} parent=11 // pred_check_branch
        %295 = sbr.rel (%p293) target = $region44
      $region43: #{tpu_custom_call.1} parent=11 // pred_region
        _
      $region44: #{tpu_custom_call.1} parent=11 // pred_fallthru
        _
      // Predicated region
      $region45: #{tpu_custom_call.1} parent=11 // pred_check
        %p296 = pneg %p231
      $region46: #{tpu_custom_call.1} parent=11 // pred_check_branch
        %298 = sbr.rel (%p296) target = $region48
      $region47: #{tpu_custom_call.1} parent=11 // pred_region
        _
      $region48: #{tpu_custom_call.1} parent=11 // pred_fallthru
        _
    $region12: #{tpu_custom_call.1} parent=5 // pred_fallthru
      _
    %p299 = scmp.lt.s32.totalorder %s16, 2
    // Predicated region
    $region49: #{tpu_custom_call.1} parent=5 // pred_check
      %p300 = pneg %p299
    $region50: #{tpu_custom_call.1} parent=5 // pred_check_branch
      %302 = sbr.rel (%p300) target = $region52
    $region51: #{tpu_custom_call.1} parent=5 // pred_region
      // Predicated region
      $region53: #{tpu_custom_call.1} parent=51 // pred_check
        %p303 = pneg %p36
      $region54: #{tpu_custom_call.1} parent=51 // pred_check_branch
        %305 = sbr.rel (%p303) target = $region56
      $region55: #{tpu_custom_call.1} parent=51 // pred_region
        %p306 = scmp.lt.s32.totalorder %s16, 1
        %s307 = scalar_select %p306, %s16, 1
        %s308 = smul.addr %s307, 60
        %s309 = smul.addr %s308, 4
        %s310 = scalar_lea.vmem %s0, %s309
      $region56: #{tpu_custom_call.1} parent=51 // pred_fallthru
        _
    $region52: #{tpu_custom_call.1} parent=5 // pred_fallthru
      _
    %p311 = scmp.le.s32.totalorder 1, %s16
    %p312 = scmp.lt.s32.totalorder %s16, 3
    %p313 = pnand %p311, %p312
    %p314 = pneg %p313
    // Predicated region
    $region57: #{tpu_custom_call.1} parent=5 // pred_check
      _
    $region58: #{tpu_custom_call.1} parent=5 // pred_check_branch
      %316 = sbr.rel (%p313) target = $region60
    $region59: #{tpu_custom_call.1} parent=5 // pred_region
      %s317 = ssub.s32 %s16, 1
      %p318 = scmp.lt.s32.totalorder %s21, 1
      %s319 = scalar_select %p318, %s21, 1
      %s320 = smul.addr %s319, 60
      %s321 = smul.addr %s320, 4
      %s322 = scalar_lea.vmem %s0, %s321
      %p323 = pneg %p42
      %p324 = pneg %p39
      %p325 = pneg %p63
      %p326 = pneg %p60
      %p327 = pneg %p84
      %p328 = pneg %p81
      %p329 = pneg %p105
      %p330 = pneg %p102
      %p331 = pneg %p126
      %p332 = pneg %p123
      %p333 = pneg %p147
      %p334 = pneg %p144
      %p335 = pneg %p168
      %p336 = pneg %p165
      %p337 = pneg %p189
      %p338 = pneg %p186
      %p339 = pneg %p210
      %p340 = pneg %p207
      %p341 = pneg %p231
      %p342 = pneg %p228
      %p343 = pneg %p257
      %p344 = pneg %p254
      %p345 = scmp.lt.s32.totalorder %s21, 1
      %s346 = scalar_select %p345, %s21, 1
      %s347 = smul.addr %s346, 32
      %s348 = smul.addr %s347, 8
      %s349 = scalar_lea.vmem %s10, %s348
      %p350 = scmp.lt.s32.totalorder %s21, 1
      %s351 = scalar_select %p350, %s21, 1
      %s352 = smul.addr %s351, 60
      %s353 = smul.addr %s352, 4
      %s354 = scalar_lea.vmem %s0, %s353
      %p355 = scmp.lt.s32.totalorder %s21, 1
      %s356 = scalar_select %p355, %s21, 1
      %s357 = smul.addr %s356, 32
      %s358 = smul.addr %s357, 8
      %s359 = scalar_lea.vmem %s10, %s358
      %v361 = vld [vmem:[%s354] sm:$0xf]
      %v362 = vld [vmem:[%s354 + $0x4] sm:$0xf]
      %v363 = vld [vmem:[%s354 + $0x8] sm:$0x3]
      %v364 = vld [vmem:[%s354 + $0xc] sm:$0xf]
      %v365 = vld [vmem:[%s354 + $0x10] sm:$0xf]
      %v366 = vld [vmem:[%s354 + $0x14] sm:$0x3]
      %v367 = vld [vmem:[%s354 + $0x18] sm:$0xf]
      %v368 = vld [vmem:[%s354 + $0x1c] sm:$0xf]
      %v369 = vld [vmem:[%s354 + $0x20] sm:$0x3]
      %v370 = vld [vmem:[%s354 + $0x24] sm:$0xf]
      %v371 = vld [vmem:[%s354 + $0x28] sm:$0xf]
      %v372 = vld [vmem:[%s354 + $0x2c] sm:$0x3]
      %v373 = vld [vmem:[%s354 + $0x30] sm:$0xf]
      %v374 = vld [vmem:[%s354 + $0x34] sm:$0xf]
      %v375 = vld [vmem:[%s354 + $0x38] sm:$0x3]
      %v376 = vld [vmem:[%s354 + $0x3c] sm:$0xf]
      %v377 = vld [vmem:[%s354 + $0x40] sm:$0xf]
      %v378 = vld [vmem:[%s354 + $0x44] sm:$0x3]
      %v379 = vld [vmem:[%s354 + $0x48] sm:$0xf]
      %v380 = vld [vmem:[%s354 + $0x4c] sm:$0xf]
      %v381 = vld [vmem:[%s354 + $0x50] sm:$0x3]
      %v382 = vld [vmem:[%s354 + $0x54] sm:$0xf]
      %v383 = vld [vmem:[%s354 + $0x58] sm:$0xf]
      %v384 = vld [vmem:[%s354 + $0x5c] sm:$0x3]
      %v385 = vld [vmem:[%s354 + $0x60] sm:$0xf]
      %v386 = vld [vmem:[%s354 + $0x64] sm:$0xf]
      %v387 = vld [vmem:[%s354 + $0x68] sm:$0x3]
      %v388 = vld [vmem:[%s354 + $0x6c] sm:$0xf]
      %v389 = vld [vmem:[%s354 + $0x70] sm:$0xf]
      %v390 = vld [vmem:[%s354 + $0x74] sm:$0x3]
      %v391 = vld [vmem:[%s354 + $0x78] sm:$0xf]
      %v392 = vld [vmem:[%s354 + $0x7c] sm:$0xf]
      %v393 = vld [vmem:[%s354 + $0x80] sm:$0x3]
      %v394 = vld [vmem:[%s354 + $0x84] sm:$0xf]
      %v395 = vld [vmem:[%s354 + $0x88] sm:$0xf]
      %v396 = vld [vmem:[%s354 + $0x8c] sm:$0x3]
      %v397 = vld [vmem:[%s354 + $0x90] sm:$0xf]
      %v398 = vld [vmem:[%s354 + $0x94] sm:$0xf]
      %v399 = vld [vmem:[%s354 + $0x98] sm:$0x3]
      %v400 = vld [vmem:[%s354 + $0x9c] sm:$0xf]
      %v401 = vld [vmem:[%s354 + $0xa0] sm:$0xf]
      %v402 = vld [vmem:[%s354 + $0xa4] sm:$0x3]
      %v403 = vld [vmem:[%s354 + $0xa8] sm:$0xf]
      %v404 = vld [vmem:[%s354 + $0xac] sm:$0xf]
      %v405 = vld [vmem:[%s354 + $0xb0] sm:$0x3]
      %v406 = vld [vmem:[%s354 + $0xb4] sm:$0xf]
      %v407 = vld [vmem:[%s354 + $0xb8] sm:$0xf]
      %v408 = vld [vmem:[%s354 + $0xbc] sm:$0x3]
      %v409 = vld [vmem:[%s354 + $0xc0] sm:$0xf]
      %v410 = vld [vmem:[%s354 + $0xc4] sm:$0xf]
      %v411 = vld [vmem:[%s354 + $0xc8] sm:$0x3]
      %v412 = vld [vmem:[%s354 + $0xcc] sm:$0xf]
      %v413 = vld [vmem:[%s354 + $0xd0] sm:$0xf]
      %v414 = vld [vmem:[%s354 + $0xd4] sm:$0x3]
      %v415 = vld [vmem:[%s354 + $0xd8] sm:$0xf]
      %v416 = vld [vmem:[%s354 + $0xdc] sm:$0xf]
      %v417 = vld [vmem:[%s354 + $0xe0] sm:$0x3]
      %v418 = vld [vmem:[%s354 + $0xe4] sm:$0xf]
      %v419 = vld [vmem:[%s354 + $0xe8] sm:$0xf]
      %v420 = vld [vmem:[%s354 + $0xec] sm:$0x3]
      %v421 = vunpack.c.l.bf16 %v361
      %v422 = vunpack.c.l.bf16 %v362
      %v423 = vunpack.c.l.bf16 %v363
      %v424 = vunpack.c.l.bf16 %v364
      %v425 = vunpack.c.l.bf16 %v365
      %v426 = vunpack.c.l.bf16 %v366
      %v427 = vunpack.c.l.bf16 %v367
      %v428 = vunpack.c.l.bf16 %v368
      %v429 = vunpack.c.l.bf16 %v369
      %v430 = vunpack.c.l.bf16 %v370
      %v431 = vunpack.c.l.bf16 %v371
      %v432 = vunpack.c.l.bf16 %v372
      %v433 = vunpack.c.l.bf16 %v373
      %v434 = vunpack.c.l.bf16 %v374
      %v435 = vunpack.c.l.bf16 %v375
      %v436 = vunpack.c.l.bf16 %v376
      %v437 = vunpack.c.l.bf16 %v377
      %v438 = vunpack.c.l.bf16 %v378
      %v439 = vunpack.c.l.bf16 %v379
      %v440 = vunpack.c.l.bf16 %v380
      %v441 = vunpack.c.l.bf16 %v381
      %v442 = vunpack.c.l.bf16 %v382
      %v443 = vunpack.c.l.bf16 %v383
      %v444 = vunpack.c.l.bf16 %v384
      %v445 = vunpack.c.l.bf16 %v385
      %v446 = vunpack.c.l.bf16 %v386
      %v447 = vunpack.c.l.bf16 %v387
      %v448 = vunpack.c.l.bf16 %v388
      %v449 = vunpack.c.l.bf16 %v389
      %v450 = vunpack.c.l.bf16 %v390
      %v451 = vunpack.c.l.bf16 %v391
      %v452 = vunpack.c.l.bf16 %v392
      %v453 = vunpack.c.l.bf16 %v393
      %v454 = vunpack.c.l.bf16 %v394
      %v455 = vunpack.c.l.bf16 %v395
      %v456 = vunpack.c.l.bf16 %v396
      %v457 = vunpack.c.l.bf16 %v397
      %v458 = vunpack.c.l.bf16 %v398
      %v459 = vunpack.c.l.bf16 %v399
      %v460 = vunpack.c.l.bf16 %v400
      %v461 = vunpack.c.l.bf16 %v401
      %v462 = vunpack.c.l.bf16 %v402
      %v463 = vunpack.c.l.bf16 %v403
      %v464 = vunpack.c.l.bf16 %v404
      %v465 = vunpack.c.l.bf16 %v405
      %v466 = vunpack.c.l.bf16 %v406
      %v467 = vunpack.c.l.bf16 %v407
      %v468 = vunpack.c.l.bf16 %v408
      %v469 = vunpack.c.l.bf16 %v409
      %v470 = vunpack.c.l.bf16 %v410
      %v471 = vunpack.c.l.bf16 %v411
      %v472 = vunpack.c.l.bf16 %v412
      %v473 = vunpack.c.l.bf16 %v413
      %v474 = vunpack.c.l.bf16 %v414
      %v475 = vunpack.c.l.bf16 %v415
      %v476 = vunpack.c.l.bf16 %v416
      %v477 = vunpack.c.l.bf16 %v417
      %v478 = vunpack.c.l.bf16 %v418
      %v479 = vunpack.c.l.bf16 %v419
      %v480 = vunpack.c.l.bf16 %v420
      %vm529 = vcmask 1046528
      %v530 = vrot.slane %v424, 1
      %v531 = vrot.slane %v425, 1
      %v532 = vsel %vm529, %v530, %v531
      %v533 = vrot.slane %v426, 1
      %v534 = vsel %vm529, %v531, %v533
      %v535 = vrot.slane %v427, 1
      %v536 = vrot.slane %v428, 1
      %v537 = vsel %vm529, %v535, %v536
      %v538 = vrot.slane %v429, 1
      %v539 = vsel %vm529, %v536, %v538
      %v540 = vrot.slane %v430, 1
      %v541 = vrot.slane %v431, 1
      %v542 = vsel %vm529, %v540, %v541
      %v543 = vrot.slane %v432, 1
      %v544 = vsel %vm529, %v541, %v543
      %v545 = vrot.slane %v433, 1
      %v546 = vrot.slane %v434, 1
      %v547 = vsel %vm529, %v545, %v546
      %v548 = vrot.slane %v435, 1
      %v549 = vsel %vm529, %v546, %v548
      %v550 = vrot.slane %v436, 1
      %v551 = vrot.slane %v437, 1
      %v552 = vsel %vm529, %v550, %v551
      %v553 = vrot.slane %v438, 1
      %v554 = vsel %vm529, %v551, %v553
      %v555 = vrot.slane %v439, 1
      %v556 = vrot.slane %v440, 1
      %v557 = vsel %vm529, %v555, %v556
      %v558 = vrot.slane %v441, 1
      %v559 = vsel %vm529, %v556, %v558
      %v560 = vrot.slane %v442, 1
      %v561 = vrot.slane %v443, 1
      %v562 = vsel %vm529, %v560, %v561
      %v563 = vrot.slane %v444, 1
      %v564 = vsel %vm529, %v561, %v563
      %v565 = vrot.slane %v445, 1
      %v566 = vrot.slane %v446, 1
      %v567 = vsel %vm529, %v565, %v566
      %v568 = vrot.slane %v447, 1
      %v569 = vsel %vm529, %v566, %v568
      %v570 = vrot.slane %v448, 1
      %v571 = vrot.slane %v449, 1
      %v572 = vsel %vm529, %v570, %v571
      %v573 = vrot.slane %v450, 1
      %v574 = vsel %vm529, %v571, %v573
      %v575 = vrot.slane %v451, 1
      %v576 = vrot.slane %v452, 1
      %v577 = vsel %vm529, %v575, %v576
      %v578 = vrot.slane %v453, 1
      %v579 = vsel %vm529, %v576, %v578
      %v580 = vrot.slane %v454, 1
      %v581 = vrot.slane %v455, 1
      %v582 = vsel %vm529, %v580, %v581
      %v583 = vrot.slane %v456, 1
      %v584 = vsel %vm529, %v581, %v583
      %v585 = vrot.slane %v457, 1
      %v586 = vrot.slane %v458, 1
      %v587 = vsel %vm529, %v585, %v586
      %v588 = vrot.slane %v459, 1
      %v589 = vsel %vm529, %v586, %v588
      %v590 = vrot.slane %v460, 1
      %v591 = vrot.slane %v461, 1
      %v592 = vsel %vm529, %v590, %v591
      %v593 = vrot.slane %v462, 1
      %v594 = vsel %vm529, %v591, %v593
      %v595 = vrot.slane %v463, 1
      %v596 = vrot.slane %v464, 1
      %v597 = vsel %vm529, %v595, %v596
      %v598 = vrot.slane %v465, 1
      %v599 = vsel %vm529, %v596, %v598
      %v600 = vrot.slane %v466, 1
      %v601 = vrot.slane %v467, 1
      %v602 = vsel %vm529, %v600, %v601
      %v603 = vrot.slane %v468, 1
      %v604 = vsel %vm529, %v601, %v603
      %v605 = vrot.slane %v469, 1
      %v606 = vrot.slane %v470, 1
      %v607 = vsel %vm529, %v605, %v606
      %v608 = vrot.slane %v471, 1
      %v609 = vsel %vm529, %v606, %v608
      %v642 = vpack.c.bf16 %v534, %v532
      %v643 = vpack.c.bf16 %v539, %v537
      %v644 = vpack.c.bf16 %v544, %v542
      %v645 = vpack.c.bf16 %v549, %v547
      %v646 = vpack.c.bf16 %v554, %v552
      %v647 = vpack.c.bf16 %v559, %v557
      %v648 = vpack.c.bf16 %v564, %v562
      %v649 = vpack.c.bf16 %v569, %v567
      %v650 = vpack.c.bf16 %v574, %v572
      %v651 = vpack.c.bf16 %v579, %v577
      %v652 = vpack.c.bf16 %v584, %v582
      %v653 = vpack.c.bf16 %v589, %v587
      %v654 = vpack.c.bf16 %v594, %v592
      %v655 = vpack.c.bf16 %v599, %v597
      %v656 = vpack.c.bf16 %v604, %v602
      %v657 = vpack.c.bf16 %v609, %v607
      %v658 = vld [vmem:[%s1] sm:$0xf]
      %v659 = vld [vmem:[%s1 + $0x4] sm:$0xf]
      %v660 = vld [vmem:[%s1 + $0x8] sm:$0xf]
      %v661 = vld [vmem:[%s1 + $0xc] sm:$0xf]
      %vm662 = vcmask 1045504
      %v663 = vrot.slane %v424, 2
      %v664 = vrot.slane %v425, 2
      %v665 = vsel %vm662, %v663, %v664
      %v666 = vrot.slane %v426, 2
      %v667 = vsel %vm662, %v664, %v666
      %v668 = vrot.slane %v427, 2
      %v669 = vrot.slane %v428, 2
      %v670 = vsel %vm662, %v668, %v669
      %v671 = vrot.slane %v429, 2
      %v672 = vsel %vm662, %v669, %v671
      %v673 = vrot.slane %v430, 2
      %v674 = vrot.slane %v431, 2
      %v675 = vsel %vm662, %v673, %v674
      %v676 = vrot.slane %v432, 2
      %v677 = vsel %vm662, %v674, %v676
      %v678 = vrot.slane %v433, 2
      %v679 = vrot.slane %v434, 2
      %v680 = vsel %vm662, %v678, %v679
      %v681 = vrot.slane %v435, 2
      %v682 = vsel %vm662, %v679, %v681
      %v683 = vrot.slane %v436, 2
      %v684 = vrot.slane %v437, 2
      %v685 = vsel %vm662, %v683, %v684
      %v686 = vrot.slane %v438, 2
      %v687 = vsel %vm662, %v684, %v686
      %v688 = vrot.slane %v439, 2
      %v689 = vrot.slane %v440, 2
      %v690 = vsel %vm662, %v688, %v689
      %v691 = vrot.slane %v441, 2
      %v692 = vsel %vm662, %v689, %v691
      %v693 = vrot.slane %v442, 2
      %v694 = vrot.slane %v443, 2
      %v695 = vsel %vm662, %v693, %v694
      %v696 = vrot.slane %v444, 2
      %v697 = vsel %vm662, %v694, %v696
      %v698 = vrot.slane %v445, 2
      %v699 = vrot.slane %v446, 2
      %v700 = vsel %vm662, %v698, %v699
      %v701 = vrot.slane %v447, 2
      %v702 = vsel %vm662, %v699, %v701
      %v703 = vrot.slane %v448, 2
      %v704 = vrot.slane %v449, 2
      %v705 = vsel %vm662, %v703, %v704
      %v706 = vrot.slane %v450, 2
      %v707 = vsel %vm662, %v704, %v706
      %v708 = vrot.slane %v451, 2
      %v709 = vrot.slane %v452, 2
      %v710 = vsel %vm662, %v708, %v709
      %v711 = vrot.slane %v453, 2
      %v712 = vsel %vm662, %v709, %v711
      %v713 = vrot.slane %v454, 2
      %v714 = vrot.slane %v455, 2
      %v715 = vsel %vm662, %v713, %v714
      %v716 = vrot.slane %v456, 2
      %v717 = vsel %vm662, %v714, %v716
      %v718 = vrot.slane %v457, 2
      %v719 = vrot.slane %v458, 2
      %v720 = vsel %vm662, %v718, %v719
      %v721 = vrot.slane %v459, 2
      %v722 = vsel %vm662, %v719, %v721
      %v723 = vrot.slane %v460, 2
      %v724 = vrot.slane %v461, 2
      %v725 = vsel %vm662, %v723, %v724
      %v726 = vrot.slane %v462, 2
      %v727 = vsel %vm662, %v724, %v726
      %v728 = vrot.slane %v463, 2
      %v729 = vrot.slane %v464, 2
      %v730 = vsel %vm662, %v728, %v729
      %v731 = vrot.slane %v465, 2
      %v732 = vsel %vm662, %v729, %v731
      %v733 = vrot.slane %v466, 2
      %v734 = vrot.slane %v467, 2
      %v735 = vsel %vm662, %v733, %v734
      %v736 = vrot.slane %v468, 2
      %v737 = vsel %vm662, %v734, %v736
      %v738 = vrot.slane %v469, 2
      %v739 = vrot.slane %v470, 2
      %v740 = vsel %vm662, %v738, %v739
      %v741 = vrot.slane %v471, 2
      %v742 = vsel %vm662, %v739, %v741
      %v775 = vpack.c.bf16 %v667, %v665
      %v776 = vpack.c.bf16 %v672, %v670
      %v777 = vpack.c.bf16 %v677, %v675
      %v778 = vpack.c.bf16 %v682, %v680
      %v779 = vpack.c.bf16 %v687, %v685
      %v780 = vpack.c.bf16 %v692, %v690
      %v781 = vpack.c.bf16 %v697, %v695
      %v782 = vpack.c.bf16 %v702, %v700
      %v783 = vpack.c.bf16 %v707, %v705
      %v784 = vpack.c.bf16 %v712, %v710
      %v785 = vpack.c.bf16 %v717, %v715
      %v786 = vpack.c.bf16 %v722, %v720
      %v787 = vpack.c.bf16 %v727, %v725
      %v788 = vpack.c.bf16 %v732, %v730
      %v789 = vpack.c.bf16 %v737, %v735
      %v790 = vpack.c.bf16 %v742, %v740
      %s791 = scalar_lea.vmem %s1, 16
      %v792 = vld [vmem:[%s791] sm:$0xf]
      %v793 = vld [vmem:[%s791 + $0x4] sm:$0xf]
      %v794 = vld [vmem:[%s791 + $0x8] sm:$0xf]
      %v795 = vld [vmem:[%s791 + $0xc] sm:$0xf]
      %v800 = vunpack.c.l.b16 %v792
      %v801 = vunpack.c.l.b16 %v793
      %v802 = vunpack.c.l.b16 %v794
      %v803 = vunpack.c.l.b16 %v795
      %v804 = vpack.c.b16 %v801, %v800
      %v805 = vpack.c.b16 %v803, %v802
      %vm808 = vcmask 261120
      %v810 = vsel %vm808, %v775, 0
      %v813 = vsel %vm808, %v776, 0
      %v816 = vsel %vm808, %v777, 0
      %v819 = vsel %vm808, %v778, 0
      %v822 = vsel %vm808, %v779, 0
      %v825 = vsel %vm808, %v780, 0
      %v828 = vsel %vm808, %v781, 0
      %v831 = vsel %vm808, %v782, 0
      %v834 = vsel %vm808, %v783, 0
      %v837 = vsel %vm808, %v784, 0
      %v840 = vsel %vm808, %v785, 0
      %v843 = vsel %vm808, %v786, 0
      %v846 = vsel %vm808, %v787, 0
      %v849 = vsel %vm808, %v788, 0
      %v852 = vsel %vm808, %v789, 0
      %v855 = vsel %vm808, %v790, 0
      %857 = vmatprep.subr.bf16.mxu0 0
      %858 = vmatpush1.bf16.msra.mxu0 0
      %859 = vmatprep.subr.bf16.mxu0 0
      %860 = vmatpush1.bf16.msra.mxu0 0
      %861 = vmatprep.subr.bf16.mxu0 0
      %862 = vmatpush1.bf16.msra.mxu0 0
      %863 = vmatprep.subr.bf16.mxu0 0
      %864 = vmatpush1.bf16.msra.mxu0 0
      %865 = vmatprep.subr.bf16.mxu0 0
      %866 = vmatpush1.bf16.msra.mxu0 0
      %867 = vmatprep.subr.bf16.mxu0 0
      %868 = vmatpush1.bf16.msra.mxu0 0
      %869 = vmatprep.subr.bf16.mxu0 0
      %870 = vmatpush1.bf16.msra.mxu0 %v805
      %871 = vmatprep.subr.bf16.mxu0 0
      %872 = vmatpush1.bf16.msra.mxu0 %v804
      %873 = vmatprep.subr.bf16.mxu0 0
      %874 = vmatpush2.bf16.msra.mxu0 0
      %875 = vmatprep.subr.bf16.mxu0 0
      %876 = vmatpush2.bf16.msra.mxu0 0
      %877 = vmatprep.subr.bf16.mxu0 0
      %878 = vmatpush2.bf16.msra.mxu0 0
      %879 = vmatprep.subr.bf16.mxu0 0
      %880 = vmatpush2.bf16.msra.mxu0 0
      %881 = vmatprep.subr.bf16.mxu0 0
      %882 = vmatpush2.bf16.msra.mxu0 0
      %883 = vmatprep.subr.bf16.mxu0 0
      %884 = vmatpush2.bf16.msra.mxu0 0
      %885 = vmatprep.subr.bf16.mxu0 0
      %886 = vmatpush2.bf16.msra.mxu0 0
      %887 = vmatprep.subr.bf16.mxu0 0
      %888 = vmatpush2.bf16.msra.mxu0 0
      %889 = vmatprep.mubr.bf16.mxu0 0
      %890 = vmatmul.mubr.bf16.gmra.mxu0 %v810
      %v891 = vpop.f32.mrf.mxu0
      %v892 = vadd.f32 0.0, %v891
      %v893 = vpop.f32.mrf.mxu0
      %v894 = vpop.f32.mrf.mxu0
      %v895 = vadd.f32 0.0, %v894
      %v896 = vpop.f32.mrf.mxu0
      %897 = vmatprep.mubr.bf16.mxu0 0
      %898 = vmatmul.mubr.bf16.gmra.mxu0 %v813
      %v899 = vpop.f32.mrf.mxu0
      %v900 = vadd.f32 0.0, %v899
      %v901 = vpop.f32.mrf.mxu0
      %v902 = vpop.f32.mrf.mxu0
      %v903 = vadd.f32 0.0, %v902
      %v904 = vpop.f32.mrf.mxu0
      %905 = vmatprep.mubr.bf16.mxu0 0
      %906 = vmatmul.mubr.bf16.gmra.mxu0 %v816
      %v907 = vpop.f32.mrf.mxu0
      %v908 = vadd.f32 0.0, %v907
      %v909 = vpop.f32.mrf.mxu0
      %v910 = vpop.f32.mrf.mxu0
      %v911 = vadd.f32 0.0, %v910
      %v912 = vpop.f32.mrf.mxu0
      %913 = vmatprep.mubr.bf16.mxu0 0
      %914 = vmatmul.mubr.bf16.gmra.mxu0 %v819
      %v915 = vpop.f32.mrf.mxu0
      %v916 = vadd.f32 0.0, %v915
      %v917 = vpop.f32.mrf.mxu0
      %v918 = vpop.f32.mrf.mxu0
      %v919 = vadd.f32 0.0, %v918
      %v920 = vpop.f32.mrf.mxu0
      %921 = vmatprep.mubr.bf16.mxu0 0
      %922 = vmatmul.mubr.bf16.gmra.mxu0 %v822
      %v923 = vpop.f32.mrf.mxu0
      %v924 = vadd.f32 0.0, %v923
      %v925 = vpop.f32.mrf.mxu0
      %v926 = vpop.f32.mrf.mxu0
      %v927 = vadd.f32 0.0, %v926
      %v928 = vpop.f32.mrf.mxu0
      %929 = vmatprep.mubr.bf16.mxu0 0
      %930 = vmatmul.mubr.bf16.gmra.mxu0 %v825
      %v931 = vpop.f32.mrf.mxu0
      %v932 = vadd.f32 0.0, %v931
      %v933 = vpop.f32.mrf.mxu0
      %v934 = vpop.f32.mrf.mxu0
      %v935 = vadd.f32 0.0, %v934
      %v936 = vpop.f32.mrf.mxu0
      %937 = vmatprep.mubr.bf16.mxu0 0
      %938 = vmatmul.mubr.bf16.gmra.mxu0 %v828
      %v939 = vpop.f32.mrf.mxu0
      %v940 = vadd.f32 0.0, %v939
      %v941 = vpop.f32.mrf.mxu0
      %v942 = vpop.f32.mrf.mxu0
      %v943 = vadd.f32 0.0, %v942
      %v944 = vpop.f32.mrf.mxu0
      %945 = vmatprep.mubr.bf16.mxu0 0
      %946 = vmatmul.mubr.bf16.gmra.mxu0 %v831
      %v947 = vpop.f32.mrf.mxu0
      %v948 = vadd.f32 0.0, %v947
      %v949 = vpop.f32.mrf.mxu0
      %v950 = vpop.f32.mrf.mxu0
      %v951 = vadd.f32 0.0, %v950
      %v952 = vpop.f32.mrf.mxu0
      %953 = vmatprep.mubr.bf16.mxu0 0
      %954 = vmatmul.mubr.bf16.gmra.mxu0 %v834
      %v955 = vpop.f32.mrf.mxu0
      %v956 = vadd.f32 0.0, %v955
      %v957 = vpop.f32.mrf.mxu0
      %v958 = vpop.f32.mrf.mxu0
      %v959 = vadd.f32 0.0, %v958
      %v960 = vpop.f32.mrf.mxu0
      %961 = vmatprep.mubr.bf16.mxu0 0
      %962 = vmatmul.mubr.bf16.gmra.mxu0 %v837
      %v963 = vpop.f32.mrf.mxu0
      %v964 = vadd.f32 0.0, %v963
      %v965 = vpop.f32.mrf.mxu0
      %v966 = vpop.f32.mrf.mxu0
      %v967 = vadd.f32 0.0, %v966
      %v968 = vpop.f32.mrf.mxu0
      %969 = vmatprep.mubr.bf16.mxu0 0
      %970 = vmatmul.mubr.bf16.gmra.mxu0 %v840
      %v971 = vpop.f32.mrf.mxu0
      %v972 = vadd.f32 0.0, %v971
      %v973 = vpop.f32.mrf.mxu0
      %v974 = vpop.f32.mrf.mxu0
      %v975 = vadd.f32 0.0, %v974
      %v976 = vpop.f32.mrf.mxu0
      %977 = vmatprep.mubr.bf16.mxu0 0
      %978 = vmatmul.mubr.bf16.gmra.mxu0 %v843
      %v979 = vpop.f32.mrf.mxu0
      %v980 = vadd.f32 0.0, %v979
      %v981 = vpop.f32.mrf.mxu0
      %v982 = vpop.f32.mrf.mxu0
      %v983 = vadd.f32 0.0, %v982
      %v984 = vpop.f32.mrf.mxu0
      %985 = vmatprep.mubr.bf16.mxu0 0
      %986 = vmatmul.mubr.bf16.gmra.mxu0 %v846
      %v987 = vpop.f32.mrf.mxu0
      %v988 = vadd.f32 0.0, %v987
      %v989 = vpop.f32.mrf.mxu0
      %v990 = vpop.f32.mrf.mxu0
      %v991 = vadd.f32 0.0, %v990
      %v992 = vpop.f32.mrf.mxu0
      %993 = vmatprep.mubr.bf16.mxu0 0
      %994 = vmatmul.mubr.bf16.gmra.mxu0 %v849
      %v995 = vpop.f32.mrf.mxu0
      %v996 = vadd.f32 0.0, %v995
      %v997 = vpop.f32.mrf.mxu0
      %v998 = vpop.f32.mrf.mxu0
      %v999 = vadd.f32 0.0, %v998
      %v1000 = vpop.f32.mrf.mxu0
      %1001 = vmatprep.mubr.bf16.mxu0 0
      %1002 = vmatmul.mubr.bf16.gmra.mxu0 %v852
      %v1003 = vpop.f32.mrf.mxu0
      %v1004 = vadd.f32 0.0, %v1003
      %v1005 = vpop.f32.mrf.mxu0
      %v1006 = vpop.f32.mrf.mxu0
      %v1007 = vadd.f32 0.0, %v1006
      %v1008 = vpop.f32.mrf.mxu0
      %1009 = vmatprep.mubr.bf16.mxu0 0
      %1010 = vmatmul.mubr.bf16.gmra.mxu0 %v855
      %v1011 = vpop.f32.mrf.mxu0
      %v1012 = vadd.f32 0.0, %v1011
      %v1013 = vpop.f32.mrf.mxu0
      %v1014 = vpop.f32.mrf.mxu0
      %v1015 = vadd.f32 0.0, %v1014
      %v1016 = vpop.f32.mrf.mxu0
      %1017 = vdwg.mxu0
      %v1022 = vunpack.c.l.b16 %v658
      %v1023 = vunpack.c.l.b16 %v659
      %v1024 = vunpack.c.l.b16 %v660
      %v1025 = vunpack.c.l.b16 %v661
      %v1026 = vpack.c.b16 %v1023, %v1022
      %v1027 = vpack.c.b16 %v1025, %v1024
      %v1031 = vsel %vm808, %v642, 0
      %v1034 = vsel %vm808, %v643, 0
      %v1037 = vsel %vm808, %v644, 0
      %v1040 = vsel %vm808, %v645, 0
      %v1043 = vsel %vm808, %v646, 0
      %v1046 = vsel %vm808, %v647, 0
      %v1049 = vsel %vm808, %v648, 0
      %v1052 = vsel %vm808, %v649, 0
      %v1055 = vsel %vm808, %v650, 0
      %v1058 = vsel %vm808, %v651, 0
      %v1061 = vsel %vm808, %v652, 0
      %v1064 = vsel %vm808, %v653, 0
      %v1067 = vsel %vm808, %v654, 0
      %v1070 = vsel %vm808, %v655, 0
      %v1073 = vsel %vm808, %v656, 0
      %v1076 = vsel %vm808, %v657, 0
      %1078 = vmatprep.subr.bf16.mxu0 0
      %1079 = vmatpush1.bf16.msra.mxu0 0
      %1080 = vmatprep.subr.bf16.mxu0 0
      %1081 = vmatpush1.bf16.msra.mxu0 0
      %1082 = vmatprep.subr.bf16.mxu0 0
      %1083 = vmatpush1.bf16.msra.mxu0 0
      %1084 = vmatprep.subr.bf16.mxu0 0
      %1085 = vmatpush1.bf16.msra.mxu0 0
      %1086 = vmatprep.subr.bf16.mxu0 0
      %1087 = vmatpush1.bf16.msra.mxu0 0
      %1088 = vmatprep.subr.bf16.mxu0 0
      %1089 = vmatpush1.bf16.msra.mxu0 0
      %1090 = vmatprep.subr.bf16.mxu0 0
      %1091 = vmatpush1.bf16.msra.mxu0 %v1027
      %1092 = vmatprep.subr.bf16.mxu0 0
      %1093 = vmatpush1.bf16.msra.mxu0 %v1026
      %1094 = vmatprep.subr.bf16.mxu0 0
      %1095 = vmatpush2.bf16.msra.mxu0 0
      %1096 = vmatprep.subr.bf16.mxu0 0
      %1097 = vmatpush2.bf16.msra.mxu0 0
      %1098 = vmatprep.subr.bf16.mxu0 0
      %1099 = vmatpush2.bf16.msra.mxu0 0
      %1100 = vmatprep.subr.bf16.mxu0 0
      %1101 = vmatpush2.bf16.msra.mxu0 0
      %1102 = vmatprep.subr.bf16.mxu0 0
      %1103 = vmatpush2.bf16.msra.mxu0 0
      %1104 = vmatprep.subr.bf16.mxu0 0
      %1105 = vmatpush2.bf16.msra.mxu0 0
      %1106 = vmatprep.subr.bf16.mxu0 0
      %1107 = vmatpush2.bf16.msra.mxu0 0
      %1108 = vmatprep.subr.bf16.mxu0 0
      %1109 = vmatpush2.bf16.msra.mxu0 0
      %1110 = vmatprep.mubr.bf16.mxu0 0
      %1111 = vmatmul.mubr.bf16.gmra.mxu0 %v1031
      %v1112 = vpop.f32.mrf.mxu0
      %v1113 = vadd.f32 %v892, %v1112
      %v1114 = vpop.f32.mrf.mxu0
      %v1115 = vpop.f32.mrf.mxu0
      %v1116 = vadd.f32 %v895, %v1115
      %v1117 = vpop.f32.mrf.mxu0
      %1118 = vmatprep.mubr.bf16.mxu0 0
      %1119 = vmatmul.mubr.bf16.gmra.mxu0 %v1034
      %v1120 = vpop.f32.mrf.mxu0
      %v1121 = vadd.f32 %v900, %v1120
      %v1122 = vpop.f32.mrf.mxu0
      %v1123 = vpop.f32.mrf.mxu0
      %v1124 = vadd.f32 %v903, %v1123
      %v1125 = vpop.f32.mrf.mxu0
      %1126 = vmatprep.mubr.bf16.mxu0 0
      %1127 = vmatmul.mubr.bf16.gmra.mxu0 %v1037
      %v1128 = vpop.f32.mrf.mxu0
      %v1129 = vadd.f32 %v908, %v1128
      %v1130 = vpop.f32.mrf.mxu0
      %v1131 = vpop.f32.mrf.mxu0
      %v1132 = vadd.f32 %v911, %v1131
      %v1133 = vpop.f32.mrf.mxu0
      %1134 = vmatprep.mubr.bf16.mxu0 0
      %1135 = vmatmul.mubr.bf16.gmra.mxu0 %v1040
      %v1136 = vpop.f32.mrf.mxu0
      %v1137 = vadd.f32 %v916, %v1136
      %v1138 = vpop.f32.mrf.mxu0
      %v1139 = vpop.f32.mrf.mxu0
      %v1140 = vadd.f32 %v919, %v1139
      %v1141 = vpop.f32.mrf.mxu0
      %1142 = vmatprep.mubr.bf16.mxu0 0
      %1143 = vmatmul.mubr.bf16.gmra.mxu0 %v1043
      %v1144 = vpop.f32.mrf.mxu0
      %v1145 = vadd.f32 %v924, %v1144
      %v1146 = vpop.f32.mrf.mxu0
      %v1147 = vpop.f32.mrf.mxu0
      %v1148 = vadd.f32 %v927, %v1147
      %v1149 = vpop.f32.mrf.mxu0
      %1150 = vmatprep.mubr.bf16.mxu0 0
      %1151 = vmatmul.mubr.bf16.gmra.mxu0 %v1046
      %v1152 = vpop.f32.mrf.mxu0
      %v1153 = vadd.f32 %v932, %v1152
      %v1154 = vpop.f32.mrf.mxu0
      %v1155 = vpop.f32.mrf.mxu0
      %v1156 = vadd.f32 %v935, %v1155
      %v1157 = vpop.f32.mrf.mxu0
      %1158 = vmatprep.mubr.bf16.mxu0 0
      %1159 = vmatmul.mubr.bf16.gmra.mxu0 %v1049
      %v1160 = vpop.f32.mrf.mxu0
      %v1161 = vadd.f32 %v940, %v1160
      %v1162 = vpop.f32.mrf.mxu0
      %v1163 = vpop.f32.mrf.mxu0
      %v1164 = vadd.f32 %v943, %v1163
      %v1165 = vpop.f32.mrf.mxu0
      %1166 = vmatprep.mubr.bf16.mxu0 0
      %1167 = vmatmul.mubr.bf16.gmra.mxu0 %v1052
      %v1168 = vpop.f32.mrf.mxu0
      %v1169 = vadd.f32 %v948, %v1168
      %v1170 = vpop.f32.mrf.mxu0
      %v1171 = vpop.f32.mrf.mxu0
      %v1172 = vadd.f32 %v951, %v1171
      %v1173 = vpop.f32.mrf.mxu0
      %1174 = vmatprep.mubr.bf16.mxu0 0
      %1175 = vmatmul.mubr.bf16.gmra.mxu0 %v1055
      %v1176 = vpop.f32.mrf.mxu0
      %v1177 = vadd.f32 %v956, %v1176
      %v1178 = vpop.f32.mrf.mxu0
      %v1179 = vpop.f32.mrf.mxu0
      %v1180 = vadd.f32 %v959, %v1179
      %v1181 = vpop.f32.mrf.mxu0
      %1182 = vmatprep.mubr.bf16.mxu0 0
      %1183 = vmatmul.mubr.bf16.gmra.mxu0 %v1058
      %v1184 = vpop.f32.mrf.mxu0
      %v1185 = vadd.f32 %v964, %v1184
      %v1186 = vpop.f32.mrf.mxu0
      %v1187 = vpop.f32.mrf.mxu0
      %v1188 = vadd.f32 %v967, %v1187
      %v1189 = vpop.f32.mrf.mxu0
      %1190 = vmatprep.mubr.bf16.mxu0 0
      %1191 = vmatmul.mubr.bf16.gmra.mxu0 %v1061
      %v1192 = vpop.f32.mrf.mxu0
      %v1193 = vadd.f32 %v972, %v1192
      %v1194 = vpop.f32.mrf.mxu0
      %v1195 = vpop.f32.mrf.mxu0
      %v1196 = vadd.f32 %v975, %v1195
      %v1197 = vpop.f32.mrf.mxu0
      %1198 = vmatprep.mubr.bf16.mxu0 0
      %1199 = vmatmul.mubr.bf16.gmra.mxu0 %v1064
      %v1200 = vpop.f32.mrf.mxu0
      %v1201 = vadd.f32 %v980, %v1200
      %v1202 = vpop.f32.mrf.mxu0
      %v1203 = vpop.f32.mrf.mxu0
      %v1204 = vadd.f32 %v983, %v1203
      %v1205 = vpop.f32.mrf.mxu0
      %1206 = vmatprep.mubr.bf16.mxu0 0
      %1207 = vmatmul.mubr.bf16.gmra.mxu0 %v1067
      %v1208 = vpop.f32.mrf.mxu0
      %v1209 = vadd.f32 %v988, %v1208
      %v1210 = vpop.f32.mrf.mxu0
      %v1211 = vpop.f32.mrf.mxu0
      %v1212 = vadd.f32 %v991, %v1211
      %v1213 = vpop.f32.mrf.mxu0
      %1214 = vmatprep.mubr.bf16.mxu0 0
      %1215 = vmatmul.mubr.bf16.gmra.mxu0 %v1070
      %v1216 = vpop.f32.mrf.mxu0
      %v1217 = vadd.f32 %v996, %v1216
      %v1218 = vpop.f32.mrf.mxu0
      %v1219 = vpop.f32.mrf.mxu0
      %v1220 = vadd.f32 %v999, %v1219
      %v1221 = vpop.f32.mrf.mxu0
      %1222 = vmatprep.mubr.bf16.mxu0 0
      %1223 = vmatmul.mubr.bf16.gmra.mxu0 %v1073
      %v1224 = vpop.f32.mrf.mxu0
      %v1225 = vadd.f32 %v1004, %v1224
      %v1226 = vpop.f32.mrf.mxu0
      %v1227 = vpop.f32.mrf.mxu0
      %v1228 = vadd.f32 %v1007, %v1227
      %v1229 = vpop.f32.mrf.mxu0
      %1230 = vmatprep.mubr.bf16.mxu0 0
      %1231 = vmatmul.mubr.bf16.gmra.mxu0 %v1076
      %v1232 = vpop.f32.mrf.mxu0
      %v1233 = vadd.f32 %v1012, %v1232
      %v1234 = vpop.f32.mrf.mxu0
      %v1235 = vpop.f32.mrf.mxu0
      %v1236 = vadd.f32 %v1015, %v1235
      %v1237 = vpop.f32.mrf.mxu0
      %1238 = vdwg.mxu0
      %vm1239 = vcmask 1044480
      %v1240 = vrot.slane %v424, 3
      %v1241 = vrot.slane %v425, 3
      %v1242 = vsel %vm1239, %v1240, %v1241
      %v1243 = vrot.slane %v426, 3
      %v1244 = vsel %vm1239, %v1241, %v1243
      %v1245 = vrot.slane %v427, 3
      %v1246 = vrot.slane %v428, 3
      %v1247 = vsel %vm1239, %v1245, %v1246
      %v1248 = vrot.slane %v429, 3
      %v1249 = vsel %vm1239, %v1246, %v1248
      %v1250 = vrot.slane %v430, 3
      %v1251 = vrot.slane %v431, 3
      %v1252 = vsel %vm1239, %v1250, %v1251
      %v1253 = vrot.slane %v432, 3
      %v1254 = vsel %vm1239, %v1251, %v1253
      %v1255 = vrot.slane %v433, 3
      %v1256 = vrot.slane %v434, 3
      %v1257 = vsel %vm1239, %v1255, %v1256
      %v1258 = vrot.slane %v435, 3
      %v1259 = vsel %vm1239, %v1256, %v1258
      %v1260 = vrot.slane %v436, 3
      %v1261 = vrot.slane %v437, 3
      %v1262 = vsel %vm1239, %v1260, %v1261
      %v1263 = vrot.slane %v438, 3
      %v1264 = vsel %vm1239, %v1261, %v1263
      %v1265 = vrot.slane %v439, 3
      %v1266 = vrot.slane %v440, 3
      %v1267 = vsel %vm1239, %v1265, %v1266
      %v1268 = vrot.slane %v441, 3
      %v1269 = vsel %vm1239, %v1266, %v1268
      %v1270 = vrot.slane %v442, 3
      %v1271 = vrot.slane %v443, 3
      %v1272 = vsel %vm1239, %v1270, %v1271
      %v1273 = vrot.slane %v444, 3
      %v1274 = vsel %vm1239, %v1271, %v1273
      %v1275 = vrot.slane %v445, 3
      %v1276 = vrot.slane %v446, 3
      %v1277 = vsel %vm1239, %v1275, %v1276
      %v1278 = vrot.slane %v447, 3
      %v1279 = vsel %vm1239, %v1276, %v1278
      %v1280 = vrot.slane %v448, 3
      %v1281 = vrot.slane %v449, 3
      %v1282 = vsel %vm1239, %v1280, %v1281
      %v1283 = vrot.slane %v450, 3
      %v1284 = vsel %vm1239, %v1281, %v1283
      %v1285 = vrot.slane %v451, 3
      %v1286 = vrot.slane %v452, 3
      %v1287 = vsel %vm1239, %v1285, %v1286
      %v1288 = vrot.slane %v453, 3
      %v1289 = vsel %vm1239, %v1286, %v1288
      %v1290 = vrot.slane %v454, 3
      %v1291 = vrot.slane %v455, 3
      %v1292 = vsel %vm1239, %v1290, %v1291
      %v1293 = vrot.slane %v456, 3
      %v1294 = vsel %vm1239, %v1291, %v1293
      %v1295 = vrot.slane %v457, 3
      %v1296 = vrot.slane %v458, 3
      %v1297 = vsel %vm1239, %v1295, %v1296
      %v1298 = vrot.slane %v459, 3
      %v1299 = vsel %vm1239, %v1296, %v1298
      %v1300 = vrot.slane %v460, 3
      %v1301 = vrot.slane %v461, 3
      %v1302 = vsel %vm1239, %v1300, %v1301
      %v1303 = vrot.slane %v462, 3
      %v1304 = vsel %vm1239, %v1301, %v1303
      %v1305 = vrot.slane %v463, 3
      %v1306 = vrot.slane %v464, 3
      %v1307 = vsel %vm1239, %v1305, %v1306
      %v1308 = vrot.slane %v465, 3
      %v1309 = vsel %vm1239, %v1306, %v1308
      %v1310 = vrot.slane %v466, 3
      %v1311 = vrot.slane %v467, 3
      %v1312 = vsel %vm1239, %v1310, %v1311
      %v1313 = vrot.slane %v468, 3
      %v1314 = vsel %vm1239, %v1311, %v1313
      %v1315 = vrot.slane %v469, 3
      %v1316 = vrot.slane %v470, 3
      %v1317 = vsel %vm1239, %v1315, %v1316
      %v1318 = vrot.slane %v471, 3
      %v1319 = vsel %vm1239, %v1316, %v1318
      %v1352 = vpack.c.bf16 %v1244, %v1242
      %v1353 = vpack.c.bf16 %v1249, %v1247
      %v1354 = vpack.c.bf16 %v1254, %v1252
      %v1355 = vpack.c.bf16 %v1259, %v1257
      %v1356 = vpack.c.bf16 %v1264, %v1262
      %v1357 = vpack.c.bf16 %v1269, %v1267
      %v1358 = vpack.c.bf16 %v1274, %v1272
      %v1359 = vpack.c.bf16 %v1279, %v1277
      %v1360 = vpack.c.bf16 %v1284, %v1282
      %v1361 = vpack.c.bf16 %v1289, %v1287
      %v1362 = vpack.c.bf16 %v1294, %v1292
      %v1363 = vpack.c.bf16 %v1299, %v1297
      %v1364 = vpack.c.bf16 %v1304, %v1302
      %v1365 = vpack.c.bf16 %v1309, %v1307
      %v1366 = vpack.c.bf16 %v1314, %v1312
      %v1367 = vpack.c.bf16 %v1319, %v1317
      %s1368 = scalar_lea.vmem %s1, 32
      %v1369 = vld [vmem:[%s1368] sm:$0xf]
      %v1370 = vld [vmem:[%s1368 + $0x4] sm:$0xf]
      %v1371 = vld [vmem:[%s1368 + $0x8] sm:$0xf]
      %v1372 = vld [vmem:[%s1368 + $0xc] sm:$0xf]
      %v1377 = vunpack.c.l.b16 %v1369
      %v1378 = vunpack.c.l.b16 %v1370
      %v1379 = vunpack.c.l.b16 %v1371
      %v1380 = vunpack.c.l.b16 %v1372
      %v1381 = vpack.c.b16 %v1378, %v1377
      %v1382 = vpack.c.b16 %v1380, %v1379
      %v1386 = vsel %vm808, %v1352, 0
      %v1389 = vsel %vm808, %v1353, 0
      %v1392 = vsel %vm808, %v1354, 0
      %v1395 = vsel %vm808, %v1355, 0
      %v1398 = vsel %vm808, %v1356, 0
      %v1401 = vsel %vm808, %v1357, 0
      %v1404 = vsel %vm808, %v1358, 0
      %v1407 = vsel %vm808, %v1359, 0
      %v1410 = vsel %vm808, %v1360, 0
      %v1413 = vsel %vm808, %v1361, 0
      %v1416 = vsel %vm808, %v1362, 0
      %v1419 = vsel %vm808, %v1363, 0
      %v1422 = vsel %vm808, %v1364, 0
      %v1425 = vsel %vm808, %v1365, 0
      %v1428 = vsel %vm808, %v1366, 0
      %v1431 = vsel %vm808, %v1367, 0
      %1433 = vmatprep.subr.bf16.mxu0 0
      %1434 = vmatpush1.bf16.msra.mxu0 0
      %1435 = vmatprep.subr.bf16.mxu0 0
      %1436 = vmatpush1.bf16.msra.mxu0 0
      %1437 = vmatprep.subr.bf16.mxu0 0
      %1438 = vmatpush1.bf16.msra.mxu0 0
      %1439 = vmatprep.subr.bf16.mxu0 0
      %1440 = vmatpush1.bf16.msra.mxu0 0
      %1441 = vmatprep.subr.bf16.mxu0 0
      %1442 = vmatpush1.bf16.msra.mxu0 0
      %1443 = vmatprep.subr.bf16.mxu0 0
      %1444 = vmatpush1.bf16.msra.mxu0 0
      %1445 = vmatprep.subr.bf16.mxu0 0
      %1446 = vmatpush1.bf16.msra.mxu0 %v1382
      %1447 = vmatprep.subr.bf16.mxu0 0
      %1448 = vmatpush1.bf16.msra.mxu0 %v1381
      %1449 = vmatprep.subr.bf16.mxu0 0
      %1450 = vmatpush2.bf16.msra.mxu0 0
      %1451 = vmatprep.subr.bf16.mxu0 0
      %1452 = vmatpush2.bf16.msra.mxu0 0
      %1453 = vmatprep.subr.bf16.mxu0 0
      %1454 = vmatpush2.bf16.msra.mxu0 0
      %1455 = vmatprep.subr.bf16.mxu0 0
      %1456 = vmatpush2.bf16.msra.mxu0 0
      %1457 = vmatprep.subr.bf16.mxu0 0
      %1458 = vmatpush2.bf16.msra.mxu0 0
      %1459 = vmatprep.subr.bf16.mxu0 0
      %1460 = vmatpush2.bf16.msra.mxu0 0
      %1461 = vmatprep.subr.bf16.mxu0 0
      %1462 = vmatpush2.bf16.msra.mxu0 0
      %1463 = vmatprep.subr.bf16.mxu0 0
      %1464 = vmatpush2.bf16.msra.mxu0 0
      %1465 = vmatprep.mubr.bf16.mxu0 0
      %1466 = vmatmul.mubr.bf16.gmra.mxu0 %v1386
      %v1467 = vpop.f32.mrf.mxu0
      %v1468 = vadd.f32 0.0, %v1467
      %v1469 = vpop.f32.mrf.mxu0
      %v1470 = vpop.f32.mrf.mxu0
      %v1471 = vadd.f32 0.0, %v1470
      %v1472 = vpop.f32.mrf.mxu0
      %1473 = vmatprep.mubr.bf16.mxu0 0
      %1474 = vmatmul.mubr.bf16.gmra.mxu0 %v1389
      %v1475 = vpop.f32.mrf.mxu0
      %v1476 = vadd.f32 0.0, %v1475
      %v1477 = vpop.f32.mrf.mxu0
      %v1478 = vpop.f32.mrf.mxu0
      %v1479 = vadd.f32 0.0, %v1478
      %v1480 = vpop.f32.mrf.mxu0
      %1481 = vmatprep.mubr.bf16.mxu0 0
      %1482 = vmatmul.mubr.bf16.gmra.mxu0 %v1392
      %v1483 = vpop.f32.mrf.mxu0
      %v1484 = vadd.f32 0.0, %v1483
      %v1485 = vpop.f32.mrf.mxu0
      %v1486 = vpop.f32.mrf.mxu0
      %v1487 = vadd.f32 0.0, %v1486
      %v1488 = vpop.f32.mrf.mxu0
      %1489 = vmatprep.mubr.bf16.mxu0 0
      %1490 = vmatmul.mubr.bf16.gmra.mxu0 %v1395
      %v1491 = vpop.f32.mrf.mxu0
      %v1492 = vadd.f32 0.0, %v1491
      %v1493 = vpop.f32.mrf.mxu0
      %v1494 = vpop.f32.mrf.mxu0
      %v1495 = vadd.f32 0.0, %v1494
      %v1496 = vpop.f32.mrf.mxu0
      %1497 = vmatprep.mubr.bf16.mxu0 0
      %1498 = vmatmul.mubr.bf16.gmra.mxu0 %v1398
      %v1499 = vpop.f32.mrf.mxu0
      %v1500 = vadd.f32 0.0, %v1499
      %v1501 = vpop.f32.mrf.mxu0
      %v1502 = vpop.f32.mrf.mxu0
      %v1503 = vadd.f32 0.0, %v1502
      %v1504 = vpop.f32.mrf.mxu0
      %1505 = vmatprep.mubr.bf16.mxu0 0
      %1506 = vmatmul.mubr.bf16.gmra.mxu0 %v1401
      %v1507 = vpop.f32.mrf.mxu0
      %v1508 = vadd.f32 0.0, %v1507
      %v1509 = vpop.f32.mrf.mxu0
      %v1510 = vpop.f32.mrf.mxu0
      %v1511 = vadd.f32 0.0, %v1510
      %v1512 = vpop.f32.mrf.mxu0
      %1513 = vmatprep.mubr.bf16.mxu0 0
      %1514 = vmatmul.mubr.bf16.gmra.mxu0 %v1404
      %v1515 = vpop.f32.mrf.mxu0
      %v1516 = vadd.f32 0.0, %v1515
      %v1517 = vpop.f32.mrf.mxu0
      %v1518 = vpop.f32.mrf.mxu0
      %v1519 = vadd.f32 0.0, %v1518
      %v1520 = vpop.f32.mrf.mxu0
      %1521 = vmatprep.mubr.bf16.mxu0 0
      %1522 = vmatmul.mubr.bf16.gmra.mxu0 %v1407
      %v1523 = vpop.f32.mrf.mxu0
      %v1524 = vadd.f32 0.0, %v1523
      %v1525 = vpop.f32.mrf.mxu0
      %v1526 = vpop.f32.mrf.mxu0
      %v1527 = vadd.f32 0.0, %v1526
      %v1528 = vpop.f32.mrf.mxu0
      %1529 = vmatprep.mubr.bf16.mxu0 0
      %1530 = vmatmul.mubr.bf16.gmra.mxu0 %v1410
      %v1531 = vpop.f32.mrf.mxu0
      %v1532 = vadd.f32 0.0, %v1531
      %v1533 = vpop.f32.mrf.mxu0
      %v1534 = vpop.f32.mrf.mxu0
      %v1535 = vadd.f32 0.0, %v1534
      %v1536 = vpop.f32.mrf.mxu0
      %1537 = vmatprep.mubr.bf16.mxu0 0
      %1538 = vmatmul.mubr.bf16.gmra.mxu0 %v1413
      %v1539 = vpop.f32.mrf.mxu0
      %v1540 = vadd.f32 0.0, %v1539
      %v1541 = vpop.f32.mrf.mxu0
      %v1542 = vpop.f32.mrf.mxu0
      %v1543 = vadd.f32 0.0, %v1542
      %v1544 = vpop.f32.mrf.mxu0
      %1545 = vmatprep.mubr.bf16.mxu0 0
      %1546 = vmatmul.mubr.bf16.gmra.mxu0 %v1416
      %v1547 = vpop.f32.mrf.mxu0
      %v1548 = vadd.f32 0.0, %v1547
      %v1549 = vpop.f32.mrf.mxu0
      %v1550 = vpop.f32.mrf.mxu0
      %v1551 = vadd.f32 0.0, %v1550
      %v1552 = vpop.f32.mrf.mxu0
      %1553 = vmatprep.mubr.bf16.mxu0 0
      %1554 = vmatmul.mubr.bf16.gmra.mxu0 %v1419
      %v1555 = vpop.f32.mrf.mxu0
      %v1556 = vadd.f32 0.0, %v1555
      %v1557 = vpop.f32.mrf.mxu0
      %v1558 = vpop.f32.mrf.mxu0
      %v1559 = vadd.f32 0.0, %v1558
      %v1560 = vpop.f32.mrf.mxu0
      %1561 = vmatprep.mubr.bf16.mxu0 0
      %1562 = vmatmul.mubr.bf16.gmra.mxu0 %v1422
      %v1563 = vpop.f32.mrf.mxu0
      %v1564 = vadd.f32 0.0, %v1563
      %v1565 = vpop.f32.mrf.mxu0
      %v1566 = vpop.f32.mrf.mxu0
      %v1567 = vadd.f32 0.0, %v1566
      %v1568 = vpop.f32.mrf.mxu0
      %1569 = vmatprep.mubr.bf16.mxu0 0
      %1570 = vmatmul.mubr.bf16.gmra.mxu0 %v1425
      %v1571 = vpop.f32.mrf.mxu0
      %v1572 = vadd.f32 0.0, %v1571
      %v1573 = vpop.f32.mrf.mxu0
      %v1574 = vpop.f32.mrf.mxu0
      %v1575 = vadd.f32 0.0, %v1574
      %v1576 = vpop.f32.mrf.mxu0
      %1577 = vmatprep.mubr.bf16.mxu0 0
      %1578 = vmatmul.mubr.bf16.gmra.mxu0 %v1428
      %v1579 = vpop.f32.mrf.mxu0
      %v1580 = vadd.f32 0.0, %v1579
      %v1581 = vpop.f32.mrf.mxu0
      %v1582 = vpop.f32.mrf.mxu0
      %v1583 = vadd.f32 0.0, %v1582
      %v1584 = vpop.f32.mrf.mxu0
      %1585 = vmatprep.mubr.bf16.mxu0 0
      %1586 = vmatmul.mubr.bf16.gmra.mxu0 %v1431
      %v1587 = vpop.f32.mrf.mxu0
      %v1588 = vadd.f32 0.0, %v1587
      %v1589 = vpop.f32.mrf.mxu0
      %v1590 = vpop.f32.mrf.mxu0
      %v1591 = vadd.f32 0.0, %v1590
      %v1592 = vpop.f32.mrf.mxu0
      %1593 = vdwg.mxu0
      %v1594 = vadd.f32 %v1113, %v1468
      %v1595 = vadd.f32 %v1116, %v1471
      %v1596 = vadd.f32 %v1121, %v1476
      %v1597 = vadd.f32 %v1124, %v1479
      %v1598 = vadd.f32 %v1129, %v1484
      %v1599 = vadd.f32 %v1132, %v1487
      %v1600 = vadd.f32 %v1137, %v1492
      %v1601 = vadd.f32 %v1140, %v1495
      %v1602 = vadd.f32 %v1145, %v1500
      %v1603 = vadd.f32 %v1148, %v1503
      %v1604 = vadd.f32 %v1153, %v1508
      %v1605 = vadd.f32 %v1156, %v1511
      %v1606 = vadd.f32 %v1161, %v1516
      %v1607 = vadd.f32 %v1164, %v1519
      %v1608 = vadd.f32 %v1169, %v1524
      %v1609 = vadd.f32 %v1172, %v1527
      %v1610 = vadd.f32 %v1177, %v1532
      %v1611 = vadd.f32 %v1180, %v1535
      %v1612 = vadd.f32 %v1185, %v1540
      %v1613 = vadd.f32 %v1188, %v1543
      %v1614 = vadd.f32 %v1193, %v1548
      %v1615 = vadd.f32 %v1196, %v1551
      %v1616 = vadd.f32 %v1201, %v1556
      %v1617 = vadd.f32 %v1204, %v1559
      %v1618 = vadd.f32 %v1209, %v1564
      %v1619 = vadd.f32 %v1212, %v1567
      %v1620 = vadd.f32 %v1217, %v1572
      %v1621 = vadd.f32 %v1220, %v1575
      %v1622 = vadd.f32 %v1225, %v1580
      %v1623 = vadd.f32 %v1228, %v1583
      %v1624 = vadd.f32 %v1233, %v1588
      %v1625 = vadd.f32 %v1236, %v1591
      %v1629 = vrot.slane %v472, 1
      %v1630 = vrot.slane %v473, 1
      %v1631 = vsel %vm529, %v1629, %v1630
      %v1632 = vrot.slane %v474, 1
      %v1633 = vsel %vm529, %v1630, %v1632
      %v1636 = vpack.c.bf16 %v1633, %v1631
      %s1637 = scalar_lea.vmem %s1, 48
      %v1638 = vld [vmem:[%s1637] sm:$0xf]
      %v1639 = vld [vmem:[%s1637 + $0x4] sm:$0xf]
      %v1640 = vld [vmem:[%s1637 + $0x8] sm:$0xf]
      %v1641 = vld [vmem:[%s1637 + $0xc] sm:$0xf]
      %v1646 = vunpack.c.l.b16 %v1638
      %v1647 = vunpack.c.l.b16 %v1639
      %v1648 = vunpack.c.l.b16 %v1640
      %v1649 = vunpack.c.l.b16 %v1641
      %v1650 = vpack.c.b16 %v1647, %v1646
      %v1651 = vpack.c.b16 %v1649, %v1648
      %v1655 = vsel %vm808, %v1636, 0
      %1657 = vmatprep.subr.bf16.mxu0 0
      %1658 = vmatpush1.bf16.msra.mxu0 0
      %1659 = vmatprep.subr.bf16.mxu0 0
      %1660 = vmatpush1.bf16.msra.mxu0 0
      %1661 = vmatprep.subr.bf16.mxu0 0
      %1662 = vmatpush1.bf16.msra.mxu0 0
      %1663 = vmatprep.subr.bf16.mxu0 0
      %1664 = vmatpush1.bf16.msra.mxu0 0
      %1665 = vmatprep.subr.bf16.mxu0 0
      %1666 = vmatpush1.bf16.msra.mxu0 0
      %1667 = vmatprep.subr.bf16.mxu0 0
      %1668 = vmatpush1.bf16.msra.mxu0 0
      %1669 = vmatprep.subr.bf16.mxu0 0
      %1670 = vmatpush1.bf16.msra.mxu0 %v1651
      %1671 = vmatprep.subr.bf16.mxu0 0
      %1672 = vmatpush1.bf16.msra.mxu0 %v1650
      %1673 = vmatprep.subr.bf16.mxu0 0
      %1674 = vmatpush2.bf16.msra.mxu0 0
      %1675 = vmatprep.subr.bf16.mxu0 0
      %1676 = vmatpush2.bf16.msra.mxu0 0
      %1677 = vmatprep.subr.bf16.mxu0 0
      %1678 = vmatpush2.bf16.msra.mxu0 0
      %1679 = vmatprep.subr.bf16.mxu0 0
      %1680 = vmatpush2.bf16.msra.mxu0 0
      %1681 = vmatprep.subr.bf16.mxu0 0
      %1682 = vmatpush2.bf16.msra.mxu0 0
      %1683 = vmatprep.subr.bf16.mxu0 0
      %1684 = vmatpush2.bf16.msra.mxu0 0
      %1685 = vmatprep.subr.bf16.mxu0 0
      %1686 = vmatpush2.bf16.msra.mxu0 0
      %1687 = vmatprep.subr.bf16.mxu0 0
      %1688 = vmatpush2.bf16.msra.mxu0 0
      %1689 = vmatprep.mubr.bf16.mxu0 0
      %1690 = vmatmul.mubr.bf16.gmra.mxu0 %v1034
      %v1691 = vpop.f32.mrf.mxu0
      %v1692 = vadd.f32 0.0, %v1691
      %v1693 = vpop.f32.mrf.mxu0
      %v1694 = vpop.f32.mrf.mxu0
      %v1695 = vadd.f32 0.0, %v1694
      %v1696 = vpop.f32.mrf.mxu0
      %1697 = vmatprep.mubr.bf16.mxu0 0
      %1698 = vmatmul.mubr.bf16.gmra.mxu0 %v1037
      %v1699 = vpop.f32.mrf.mxu0
      %v1700 = vadd.f32 0.0, %v1699
      %v1701 = vpop.f32.mrf.mxu0
      %v1702 = vpop.f32.mrf.mxu0
      %v1703 = vadd.f32 0.0, %v1702
      %v1704 = vpop.f32.mrf.mxu0
      %1705 = vmatprep.mubr.bf16.mxu0 0
      %1706 = vmatmul.mubr.bf16.gmra.mxu0 %v1040
      %v1707 = vpop.f32.mrf.mxu0
      %v1708 = vadd.f32 0.0, %v1707
      %v1709 = vpop.f32.mrf.mxu0
      %v1710 = vpop.f32.mrf.mxu0
      %v1711 = vadd.f32 0.0, %v1710
      %v1712 = vpop.f32.mrf.mxu0
      %1713 = vmatprep.mubr.bf16.mxu0 0
      %1714 = vmatmul.mubr.bf16.gmra.mxu0 %v1043
      %v1715 = vpop.f32.mrf.mxu0
      %v1716 = vadd.f32 0.0, %v1715
      %v1717 = vpop.f32.mrf.mxu0
      %v1718 = vpop.f32.mrf.mxu0
      %v1719 = vadd.f32 0.0, %v1718
      %v1720 = vpop.f32.mrf.mxu0
      %1721 = vmatprep.mubr.bf16.mxu0 0
      %1722 = vmatmul.mubr.bf16.gmra.mxu0 %v1046
      %v1723 = vpop.f32.mrf.mxu0
      %v1724 = vadd.f32 0.0, %v1723
      %v1725 = vpop.f32.mrf.mxu0
      %v1726 = vpop.f32.mrf.mxu0
      %v1727 = vadd.f32 0.0, %v1726
      %v1728 = vpop.f32.mrf.mxu0
      %1729 = vmatprep.mubr.bf16.mxu0 0
      %1730 = vmatmul.mubr.bf16.gmra.mxu0 %v1049
      %v1731 = vpop.f32.mrf.mxu0
      %v1732 = vadd.f32 0.0, %v1731
      %v1733 = vpop.f32.mrf.mxu0
      %v1734 = vpop.f32.mrf.mxu0
      %v1735 = vadd.f32 0.0, %v1734
      %v1736 = vpop.f32.mrf.mxu0
      %1737 = vmatprep.mubr.bf16.mxu0 0
      %1738 = vmatmul.mubr.bf16.gmra.mxu0 %v1052
      %v1739 = vpop.f32.mrf.mxu0
      %v1740 = vadd.f32 0.0, %v1739
      %v1741 = vpop.f32.mrf.mxu0
      %v1742 = vpop.f32.mrf.mxu0
      %v1743 = vadd.f32 0.0, %v1742
      %v1744 = vpop.f32.mrf.mxu0
      %1745 = vmatprep.mubr.bf16.mxu0 0
      %1746 = vmatmul.mubr.bf16.gmra.mxu0 %v1055
      %v1747 = vpop.f32.mrf.mxu0
      %v1748 = vadd.f32 0.0, %v1747
      %v1749 = vpop.f32.mrf.mxu0
      %v1750 = vpop.f32.mrf.mxu0
      %v1751 = vadd.f32 0.0, %v1750
      %v1752 = vpop.f32.mrf.mxu0
      %1753 = vmatprep.mubr.bf16.mxu0 0
      %1754 = vmatmul.mubr.bf16.gmra.mxu0 %v1058
      %v1755 = vpop.f32.mrf.mxu0
      %v1756 = vadd.f32 0.0, %v1755
      %v1757 = vpop.f32.mrf.mxu0
      %v1758 = vpop.f32.mrf.mxu0
      %v1759 = vadd.f32 0.0, %v1758
      %v1760 = vpop.f32.mrf.mxu0
      %1761 = vmatprep.mubr.bf16.mxu0 0
      %1762 = vmatmul.mubr.bf16.gmra.mxu0 %v1061
      %v1763 = vpop.f32.mrf.mxu0
      %v1764 = vadd.f32 0.0, %v1763
      %v1765 = vpop.f32.mrf.mxu0
      %v1766 = vpop.f32.mrf.mxu0
      %v1767 = vadd.f32 0.0, %v1766
      %v1768 = vpop.f32.mrf.mxu0
      %1769 = vmatprep.mubr.bf16.mxu0 0
      %1770 = vmatmul.mubr.bf16.gmra.mxu0 %v1064
      %v1771 = vpop.f32.mrf.mxu0
      %v1772 = vadd.f32 0.0, %v1771
      %v1773 = vpop.f32.mrf.mxu0
      %v1774 = vpop.f32.mrf.mxu0
      %v1775 = vadd.f32 0.0, %v1774
      %v1776 = vpop.f32.mrf.mxu0
      %1777 = vmatprep.mubr.bf16.mxu0 0
      %1778 = vmatmul.mubr.bf16.gmra.mxu0 %v1067
      %v1779 = vpop.f32.mrf.mxu0
      %v1780 = vadd.f32 0.0, %v1779
      %v1781 = vpop.f32.mrf.mxu0
      %v1782 = vpop.f32.mrf.mxu0
      %v1783 = vadd.f32 0.0, %v1782
      %v1784 = vpop.f32.mrf.mxu0
      %1785 = vmatprep.mubr.bf16.mxu0 0
      %1786 = vmatmul.mubr.bf16.gmra.mxu0 %v1070
      %v1787 = vpop.f32.mrf.mxu0
      %v1788 = vadd.f32 0.0, %v1787
      %v1789 = vpop.f32.mrf.mxu0
      %v1790 = vpop.f32.mrf.mxu0
      %v1791 = vadd.f32 0.0, %v1790
      %v1792 = vpop.f32.mrf.mxu0
      %1793 = vmatprep.mubr.bf16.mxu0 0
      %1794 = vmatmul.mubr.bf16.gmra.mxu0 %v1073
      %v1795 = vpop.f32.mrf.mxu0
      %v1796 = vadd.f32 0.0, %v1795
      %v1797 = vpop.f32.mrf.mxu0
      %v1798 = vpop.f32.mrf.mxu0
      %v1799 = vadd.f32 0.0, %v1798
      %v1800 = vpop.f32.mrf.mxu0
      %1801 = vmatprep.mubr.bf16.mxu0 0
      %1802 = vmatmul.mubr.bf16.gmra.mxu0 %v1076
      %v1803 = vpop.f32.mrf.mxu0
      %v1804 = vadd.f32 0.0, %v1803
      %v1805 = vpop.f32.mrf.mxu0
      %v1806 = vpop.f32.mrf.mxu0
      %v1807 = vadd.f32 0.0, %v1806
      %v1808 = vpop.f32.mrf.mxu0
      %1809 = vmatprep.mubr.bf16.mxu0 0
      %1810 = vmatmul.mubr.bf16.gmra.mxu0 %v1655
      %v1811 = vpop.f32.mrf.mxu0
      %v1812 = vadd.f32 0.0, %v1811
      %v1813 = vpop.f32.mrf.mxu0
      %v1814 = vpop.f32.mrf.mxu0
      %v1815 = vadd.f32 0.0, %v1814
      %v1816 = vpop.f32.mrf.mxu0
      %1817 = vdwg.mxu0
      %v1818 = vadd.f32 %v1594, %v1692
      %v1819 = vadd.f32 %v1595, %v1695
      %v1820 = vadd.f32 %v1596, %v1700
      %v1821 = vadd.f32 %v1597, %v1703
      %v1822 = vadd.f32 %v1598, %v1708
      %v1823 = vadd.f32 %v1599, %v1711
      %v1824 = vadd.f32 %v1600, %v1716
      %v1825 = vadd.f32 %v1601, %v1719
      %v1826 = vadd.f32 %v1602, %v1724
      %v1827 = vadd.f32 %v1603, %v1727
      %v1828 = vadd.f32 %v1604, %v1732
      %v1829 = vadd.f32 %v1605, %v1735
      %v1830 = vadd.f32 %v1606, %v1740
      %v1831 = vadd.f32 %v1607, %v1743
      %v1832 = vadd.f32 %v1608, %v1748
      %v1833 = vadd.f32 %v1609, %v1751
      %v1834 = vadd.f32 %v1610, %v1756
      %v1835 = vadd.f32 %v1611, %v1759
      %v1836 = vadd.f32 %v1612, %v1764
      %v1837 = vadd.f32 %v1613, %v1767
      %v1838 = vadd.f32 %v1614, %v1772
      %v1839 = vadd.f32 %v1615, %v1775
      %v1840 = vadd.f32 %v1616, %v1780
      %v1841 = vadd.f32 %v1617, %v1783
      %v1842 = vadd.f32 %v1618, %v1788
      %v1843 = vadd.f32 %v1619, %v1791
      %v1844 = vadd.f32 %v1620, %v1796
      %v1845 = vadd.f32 %v1621, %v1799
      %v1846 = vadd.f32 %v1622, %v1804
      %v1847 = vadd.f32 %v1623, %v1807
      %v1848 = vadd.f32 %v1624, %v1812
      %v1849 = vadd.f32 %v1625, %v1815
      %v1850 = vrot.slane %v472, 2
      %v1851 = vrot.slane %v473, 2
      %v1852 = vsel %vm662, %v1850, %v1851
      %v1853 = vrot.slane %v474, 2
      %v1854 = vsel %vm662, %v1851, %v1853
      %v1857 = vpack.c.bf16 %v1854, %v1852
      %s1858 = scalar_lea.vmem %s1, 64
      %v1859 = vld [vmem:[%s1858] sm:$0xf]
      %v1860 = vld [vmem:[%s1858 + $0x4] sm:$0xf]
      %v1861 = vld [vmem:[%s1858 + $0x8] sm:$0xf]
      %v1862 = vld [vmem:[%s1858 + $0xc] sm:$0xf]
      %v1867 = vunpack.c.l.b16 %v1859
      %v1868 = vunpack.c.l.b16 %v1860
      %v1869 = vunpack.c.l.b16 %v1861
      %v1870 = vunpack.c.l.b16 %v1862
      %v1871 = vpack.c.b16 %v1868, %v1867
      %v1872 = vpack.c.b16 %v1870, %v1869
      %v1876 = vsel %vm808, %v1857, 0
      %1878 = vmatprep.subr.bf16.mxu0 0
      %1879 = vmatpush1.bf16.msra.mxu0 0
      %1880 = vmatprep.subr.bf16.mxu0 0
      %1881 = vmatpush1.bf16.msra.mxu0 0
      %1882 = vmatprep.subr.bf16.mxu0 0
      %1883 = vmatpush1.bf16.msra.mxu0 0
      %1884 = vmatprep.subr.bf16.mxu0 0
      %1885 = vmatpush1.bf16.msra.mxu0 0
      %1886 = vmatprep.subr.bf16.mxu0 0
      %1887 = vmatpush1.bf16.msra.mxu0 0
      %1888 = vmatprep.subr.bf16.mxu0 0
      %1889 = vmatpush1.bf16.msra.mxu0 0
      %1890 = vmatprep.subr.bf16.mxu0 0
      %1891 = vmatpush1.bf16.msra.mxu0 %v1872
      %1892 = vmatprep.subr.bf16.mxu0 0
      %1893 = vmatpush1.bf16.msra.mxu0 %v1871
      %1894 = vmatprep.subr.bf16.mxu0 0
      %1895 = vmatpush2.bf16.msra.mxu0 0
      %1896 = vmatprep.subr.bf16.mxu0 0
      %1897 = vmatpush2.bf16.msra.mxu0 0
      %1898 = vmatprep.subr.bf16.mxu0 0
      %1899 = vmatpush2.bf16.msra.mxu0 0
      %1900 = vmatprep.subr.bf16.mxu0 0
      %1901 = vmatpush2.bf16.msra.mxu0 0
      %1902 = vmatprep.subr.bf16.mxu0 0
      %1903 = vmatpush2.bf16.msra.mxu0 0
      %1904 = vmatprep.subr.bf16.mxu0 0
      %1905 = vmatpush2.bf16.msra.mxu0 0
      %1906 = vmatprep.subr.bf16.mxu0 0
      %1907 = vmatpush2.bf16.msra.mxu0 0
      %1908 = vmatprep.subr.bf16.mxu0 0
      %1909 = vmatpush2.bf16.msra.mxu0 0
      %1910 = vmatprep.mubr.bf16.mxu0 0
      %1911 = vmatmul.mubr.bf16.gmra.mxu0 %v813
      %v1912 = vpop.f32.mrf.mxu0
      %v1913 = vadd.f32 0.0, %v1912
      %v1914 = vpop.f32.mrf.mxu0
      %v1915 = vpop.f32.mrf.mxu0
      %v1916 = vadd.f32 0.0, %v1915
      %v1917 = vpop.f32.mrf.mxu0
      %1918 = vmatprep.mubr.bf16.mxu0 0
      %1919 = vmatmul.mubr.bf16.gmra.mxu0 %v816
      %v1920 = vpop.f32.mrf.mxu0
      %v1921 = vadd.f32 0.0, %v1920
      %v1922 = vpop.f32.mrf.mxu0
      %v1923 = vpop.f32.mrf.mxu0
      %v1924 = vadd.f32 0.0, %v1923
      %v1925 = vpop.f32.mrf.mxu0
      %1926 = vmatprep.mubr.bf16.mxu0 0
      %1927 = vmatmul.mubr.bf16.gmra.mxu0 %v819
      %v1928 = vpop.f32.mrf.mxu0
      %v1929 = vadd.f32 0.0, %v1928
      %v1930 = vpop.f32.mrf.mxu0
      %v1931 = vpop.f32.mrf.mxu0
      %v1932 = vadd.f32 0.0, %v1931
      %v1933 = vpop.f32.mrf.mxu0
      %1934 = vmatprep.mubr.bf16.mxu0 0
      %1935 = vmatmul.mubr.bf16.gmra.mxu0 %v822
      %v1936 = vpop.f32.mrf.mxu0
      %v1937 = vadd.f32 0.0, %v1936
      %v1938 = vpop.f32.mrf.mxu0
      %v1939 = vpop.f32.mrf.mxu0
      %v1940 = vadd.f32 0.0, %v1939
      %v1941 = vpop.f32.mrf.mxu0
      %1942 = vmatprep.mubr.bf16.mxu0 0
      %1943 = vmatmul.mubr.bf16.gmra.mxu0 %v825
      %v1944 = vpop.f32.mrf.mxu0
      %v1945 = vadd.f32 0.0, %v1944
      %v1946 = vpop.f32.mrf.mxu0
      %v1947 = vpop.f32.mrf.mxu0
      %v1948 = vadd.f32 0.0, %v1947
      %v1949 = vpop.f32.mrf.mxu0
      %1950 = vmatprep.mubr.bf16.mxu0 0
      %1951 = vmatmul.mubr.bf16.gmra.mxu0 %v828
      %v1952 = vpop.f32.mrf.mxu0
      %v1953 = vadd.f32 0.0, %v1952
      %v1954 = vpop.f32.mrf.mxu0
      %v1955 = vpop.f32.mrf.mxu0
      %v1956 = vadd.f32 0.0, %v1955
      %v1957 = vpop.f32.mrf.mxu0
      %1958 = vmatprep.mubr.bf16.mxu0 0
      %1959 = vmatmul.mubr.bf16.gmra.mxu0 %v831
      %v1960 = vpop.f32.mrf.mxu0
      %v1961 = vadd.f32 0.0, %v1960
      %v1962 = vpop.f32.mrf.mxu0
      %v1963 = vpop.f32.mrf.mxu0
      %v1964 = vadd.f32 0.0, %v1963
      %v1965 = vpop.f32.mrf.mxu0
      %1966 = vmatprep.mubr.bf16.mxu0 0
      %1967 = vmatmul.mubr.bf16.gmra.mxu0 %v834
      %v1968 = vpop.f32.mrf.mxu0
      %v1969 = vadd.f32 0.0, %v1968
      %v1970 = vpop.f32.mrf.mxu0
      %v1971 = vpop.f32.mrf.mxu0
      %v1972 = vadd.f32 0.0, %v1971
      %v1973 = vpop.f32.mrf.mxu0
      %1974 = vmatprep.mubr.bf16.mxu0 0
      %1975 = vmatmul.mubr.bf16.gmra.mxu0 %v837
      %v1976 = vpop.f32.mrf.mxu0
      %v1977 = vadd.f32 0.0, %v1976
      %v1978 = vpop.f32.mrf.mxu0
      %v1979 = vpop.f32.mrf.mxu0
      %v1980 = vadd.f32 0.0, %v1979
      %v1981 = vpop.f32.mrf.mxu0
      %1982 = vmatprep.mubr.bf16.mxu0 0
      %1983 = vmatmul.mubr.bf16.gmra.mxu0 %v840
      %v1984 = vpop.f32.mrf.mxu0
      %v1985 = vadd.f32 0.0, %v1984
      %v1986 = vpop.f32.mrf.mxu0
      %v1987 = vpop.f32.mrf.mxu0
      %v1988 = vadd.f32 0.0, %v1987
      %v1989 = vpop.f32.mrf.mxu0
      %1990 = vmatprep.mubr.bf16.mxu0 0
      %1991 = vmatmul.mubr.bf16.gmra.mxu0 %v843
      %v1992 = vpop.f32.mrf.mxu0
      %v1993 = vadd.f32 0.0, %v1992
      %v1994 = vpop.f32.mrf.mxu0
      %v1995 = vpop.f32.mrf.mxu0
      %v1996 = vadd.f32 0.0, %v1995
      %v1997 = vpop.f32.mrf.mxu0
      %1998 = vmatprep.mubr.bf16.mxu0 0
      %1999 = vmatmul.mubr.bf16.gmra.mxu0 %v846
      %v2000 = vpop.f32.mrf.mxu0
      %v2001 = vadd.f32 0.0, %v2000
      %v2002 = vpop.f32.mrf.mxu0
      %v2003 = vpop.f32.mrf.mxu0
      %v2004 = vadd.f32 0.0, %v2003
      %v2005 = vpop.f32.mrf.mxu0
      %2006 = vmatprep.mubr.bf16.mxu0 0
      %2007 = vmatmul.mubr.bf16.gmra.mxu0 %v849
      %v2008 = vpop.f32.mrf.mxu0
      %v2009 = vadd.f32 0.0, %v2008
      %v2010 = vpop.f32.mrf.mxu0
      %v2011 = vpop.f32.mrf.mxu0
      %v2012 = vadd.f32 0.0, %v2011
      %v2013 = vpop.f32.mrf.mxu0
      %2014 = vmatprep.mubr.bf16.mxu0 0
      %2015 = vmatmul.mubr.bf16.gmra.mxu0 %v852
      %v2016 = vpop.f32.mrf.mxu0
      %v2017 = vadd.f32 0.0, %v2016
      %v2018 = vpop.f32.mrf.mxu0
      %v2019 = vpop.f32.mrf.mxu0
      %v2020 = vadd.f32 0.0, %v2019
      %v2021 = vpop.f32.mrf.mxu0
      %2022 = vmatprep.mubr.bf16.mxu0 0
      %2023 = vmatmul.mubr.bf16.gmra.mxu0 %v855
      %v2024 = vpop.f32.mrf.mxu0
      %v2025 = vadd.f32 0.0, %v2024
      %v2026 = vpop.f32.mrf.mxu0
      %v2027 = vpop.f32.mrf.mxu0
      %v2028 = vadd.f32 0.0, %v2027
      %v2029 = vpop.f32.mrf.mxu0
      %2030 = vmatprep.mubr.bf16.mxu0 0
      %2031 = vmatmul.mubr.bf16.gmra.mxu0 %v1876
      %v2032 = vpop.f32.mrf.mxu0
      %v2033 = vadd.f32 0.0, %v2032
      %v2034 = vpop.f32.mrf.mxu0
      %v2035 = vpop.f32.mrf.mxu0
      %v2036 = vadd.f32 0.0, %v2035
      %v2037 = vpop.f32.mrf.mxu0
      %2038 = vdwg.mxu0
      %v2039 = vadd.f32 %v1818, %v1913
      %v2040 = vadd.f32 %v1819, %v1916
      %v2041 = vadd.f32 %v1820, %v1921
      %v2042 = vadd.f32 %v1821, %v1924
      %v2043 = vadd.f32 %v1822, %v1929
      %v2044 = vadd.f32 %v1823, %v1932
      %v2045 = vadd.f32 %v1824, %v1937
      %v2046 = vadd.f32 %v1825, %v1940
      %v2047 = vadd.f32 %v1826, %v1945
      %v2048 = vadd.f32 %v1827, %v1948
      %v2049 = vadd.f32 %v1828, %v1953
      %v2050 = vadd.f32 %v1829, %v1956
      %v2051 = vadd.f32 %v1830, %v1961
      %v2052 = vadd.f32 %v1831, %v1964
      %v2053 = vadd.f32 %v1832, %v1969
      %v2054 = vadd.f32 %v1833, %v1972
      %v2055 = vadd.f32 %v1834, %v1977
      %v2056 = vadd.f32 %v1835, %v1980
      %v2057 = vadd.f32 %v1836, %v1985
      %v2058 = vadd.f32 %v1837, %v1988
      %v2059 = vadd.f32 %v1838, %v1993
      %v2060 = vadd.f32 %v1839, %v1996
      %v2061 = vadd.f32 %v1840, %v2001
      %v2062 = vadd.f32 %v1841, %v2004
      %v2063 = vadd.f32 %v1842, %v2009
      %v2064 = vadd.f32 %v1843, %v2012
      %v2065 = vadd.f32 %v1844, %v2017
      %v2066 = vadd.f32 %v1845, %v2020
      %v2067 = vadd.f32 %v1846, %v2025
      %v2068 = vadd.f32 %v1847, %v2028
      %v2069 = vadd.f32 %v1848, %v2033
      %v2070 = vadd.f32 %v1849, %v2036
      %v2071 = vrot.slane %v472, 3
      %v2072 = vrot.slane %v473, 3
      %v2073 = vsel %vm1239, %v2071, %v2072
      %v2074 = vrot.slane %v474, 3
      %v2075 = vsel %vm1239, %v2072, %v2074
      %v2078 = vpack.c.bf16 %v2075, %v2073
      %s2079 = scalar_lea.vmem %s1, 80
      %v2080 = vld [vmem:[%s2079] sm:$0xf]
      %v2081 = vld [vmem:[%s2079 + $0x4] sm:$0xf]
      %v2082 = vld [vmem:[%s2079 + $0x8] sm:$0xf]
      %v2083 = vld [vmem:[%s2079 + $0xc] sm:$0xf]
      %v2088 = vunpack.c.l.b16 %v2080
      %v2089 = vunpack.c.l.b16 %v2081
      %v2090 = vunpack.c.l.b16 %v2082
      %v2091 = vunpack.c.l.b16 %v2083
      %v2092 = vpack.c.b16 %v2089, %v2088
      %v2093 = vpack.c.b16 %v2091, %v2090
      %v2097 = vsel %vm808, %v2078, 0
      %2099 = vmatprep.subr.bf16.mxu0 0
      %2100 = vmatpush1.bf16.msra.mxu0 0
      %2101 = vmatprep.subr.bf16.mxu0 0
      %2102 = vmatpush1.bf16.msra.mxu0 0
      %2103 = vmatprep.subr.bf16.mxu0 0
      %2104 = vmatpush1.bf16.msra.mxu0 0
      %2105 = vmatprep.subr.bf16.mxu0 0
      %2106 = vmatpush1.bf16.msra.mxu0 0
      %2107 = vmatprep.subr.bf16.mxu0 0
      %2108 = vmatpush1.bf16.msra.mxu0 0
      %2109 = vmatprep.subr.bf16.mxu0 0
      %2110 = vmatpush1.bf16.msra.mxu0 0
      %2111 = vmatprep.subr.bf16.mxu0 0
      %2112 = vmatpush1.bf16.msra.mxu0 %v2093
      %2113 = vmatprep.subr.bf16.mxu0 0
      %2114 = vmatpush1.bf16.msra.mxu0 %v2092
      %2115 = vmatprep.subr.bf16.mxu0 0
      %2116 = vmatpush2.bf16.msra.mxu0 0
      %2117 = vmatprep.subr.bf16.mxu0 0
      %2118 = vmatpush2.bf16.msra.mxu0 0
      %2119 = vmatprep.subr.bf16.mxu0 0
      %2120 = vmatpush2.bf16.msra.mxu0 0
      %2121 = vmatprep.subr.bf16.mxu0 0
      %2122 = vmatpush2.bf16.msra.mxu0 0
      %2123 = vmatprep.subr.bf16.mxu0 0
      %2124 = vmatpush2.bf16.msra.mxu0 0
      %2125 = vmatprep.subr.bf16.mxu0 0
      %2126 = vmatpush2.bf16.msra.mxu0 0
      %2127 = vmatprep.subr.bf16.mxu0 0
      %2128 = vmatpush2.bf16.msra.mxu0 0
      %2129 = vmatprep.subr.bf16.mxu0 0
      %2130 = vmatpush2.bf16.msra.mxu0 0
      %2131 = vmatprep.mubr.bf16.mxu0 0
      %2132 = vmatmul.mubr.bf16.gmra.mxu0 %v1389
      %v2133 = vpop.f32.mrf.mxu0
      %v2134 = vadd.f32 0.0, %v2133
      %v2135 = vpop.f32.mrf.mxu0
      %v2136 = vpop.f32.mrf.mxu0
      %v2137 = vadd.f32 0.0, %v2136
      %v2138 = vpop.f32.mrf.mxu0
      %2139 = vmatprep.mubr.bf16.mxu0 0
      %2140 = vmatmul.mubr.bf16.gmra.mxu0 %v1392
      %v2141 = vpop.f32.mrf.mxu0
      %v2142 = vadd.f32 0.0, %v2141
      %v2143 = vpop.f32.mrf.mxu0
      %v2144 = vpop.f32.mrf.mxu0
      %v2145 = vadd.f32 0.0, %v2144
      %v2146 = vpop.f32.mrf.mxu0
      %2147 = vmatprep.mubr.bf16.mxu0 0
      %2148 = vmatmul.mubr.bf16.gmra.mxu0 %v1395
      %v2149 = vpop.f32.mrf.mxu0
      %v2150 = vadd.f32 0.0, %v2149
      %v2151 = vpop.f32.mrf.mxu0
      %v2152 = vpop.f32.mrf.mxu0
      %v2153 = vadd.f32 0.0, %v2152
      %v2154 = vpop.f32.mrf.mxu0
      %2155 = vmatprep.mubr.bf16.mxu0 0
      %2156 = vmatmul.mubr.bf16.gmra.mxu0 %v1398
      %v2157 = vpop.f32.mrf.mxu0
      %v2158 = vadd.f32 0.0, %v2157
      %v2159 = vpop.f32.mrf.mxu0
      %v2160 = vpop.f32.mrf.mxu0
      %v2161 = vadd.f32 0.0, %v2160
      %v2162 = vpop.f32.mrf.mxu0
      %2163 = vmatprep.mubr.bf16.mxu0 0
      %2164 = vmatmul.mubr.bf16.gmra.mxu0 %v1401
      %v2165 = vpop.f32.mrf.mxu0
      %v2166 = vadd.f32 0.0, %v2165
      %v2167 = vpop.f32.mrf.mxu0
      %v2168 = vpop.f32.mrf.mxu0
      %v2169 = vadd.f32 0.0, %v2168
      %v2170 = vpop.f32.mrf.mxu0
      %2171 = vmatprep.mubr.bf16.mxu0 0
      %2172 = vmatmul.mubr.bf16.gmra.mxu0 %v1404
      %v2173 = vpop.f32.mrf.mxu0
      %v2174 = vadd.f32 0.0, %v2173
      %v2175 = vpop.f32.mrf.mxu0
      %v2176 = vpop.f32.mrf.mxu0
      %v2177 = vadd.f32 0.0, %v2176
      %v2178 = vpop.f32.mrf.mxu0
      %2179 = vmatprep.mubr.bf16.mxu0 0
      %2180 = vmatmul.mubr.bf16.gmra.mxu0 %v1407
      %v2181 = vpop.f32.mrf.mxu0
      %v2182 = vadd.f32 0.0, %v2181
      %v2183 = vpop.f32.mrf.mxu0
      %v2184 = vpop.f32.mrf.mxu0
      %v2185 = vadd.f32 0.0, %v2184
      %v2186 = vpop.f32.mrf.mxu0
      %2187 = vmatprep.mubr.bf16.mxu0 0
      %2188 = vmatmul.mubr.bf16.gmra.mxu0 %v1410
      %v2189 = vpop.f32.mrf.mxu0
      %v2190 = vadd.f32 0.0, %v2189
      %v2191 = vpop.f32.mrf.mxu0
      %v2192 = vpop.f32.mrf.mxu0
      %v2193 = vadd.f32 0.0, %v2192
      %v2194 = vpop.f32.mrf.mxu0
      %2195 = vmatprep.mubr.bf16.mxu0 0
      %2196 = vmatmul.mubr.bf16.gmra.mxu0 %v1413
      %v2197 = vpop.f32.mrf.mxu0
      %v2198 = vadd.f32 0.0, %v2197
      %v2199 = vpop.f32.mrf.mxu0
      %v2200 = vpop.f32.mrf.mxu0
      %v2201 = vadd.f32 0.0, %v2200
      %v2202 = vpop.f32.mrf.mxu0
      %2203 = vmatprep.mubr.bf16.mxu0 0
      %2204 = vmatmul.mubr.bf16.gmra.mxu0 %v1416
      %v2205 = vpop.f32.mrf.mxu0
      %v2206 = vadd.f32 0.0, %v2205
      %v2207 = vpop.f32.mrf.mxu0
      %v2208 = vpop.f32.mrf.mxu0
      %v2209 = vadd.f32 0.0, %v2208
      %v2210 = vpop.f32.mrf.mxu0
      %2211 = vmatprep.mubr.bf16.mxu0 0
      %2212 = vmatmul.mubr.bf16.gmra.mxu0 %v1419
      %v2213 = vpop.f32.mrf.mxu0
      %v2214 = vadd.f32 0.0, %v2213
      %v2215 = vpop.f32.mrf.mxu0
      %v2216 = vpop.f32.mrf.mxu0
      %v2217 = vadd.f32 0.0, %v2216
      %v2218 = vpop.f32.mrf.mxu0
      %2219 = vmatprep.mubr.bf16.mxu0 0
      %2220 = vmatmul.mubr.bf16.gmra.mxu0 %v1422
      %v2221 = vpop.f32.mrf.mxu0
      %v2222 = vadd.f32 0.0, %v2221
      %v2223 = vpop.f32.mrf.mxu0
      %v2224 = vpop.f32.mrf.mxu0
      %v2225 = vadd.f32 0.0, %v2224
      %v2226 = vpop.f32.mrf.mxu0
      %2227 = vmatprep.mubr.bf16.mxu0 0
      %2228 = vmatmul.mubr.bf16.gmra.mxu0 %v1425
      %v2229 = vpop.f32.mrf.mxu0
      %v2230 = vadd.f32 0.0, %v2229
      %v2231 = vpop.f32.mrf.mxu0
      %v2232 = vpop.f32.mrf.mxu0
      %v2233 = vadd.f32 0.0, %v2232
      %v2234 = vpop.f32.mrf.mxu0
      %2235 = vmatprep.mubr.bf16.mxu0 0
      %2236 = vmatmul.mubr.bf16.gmra.mxu0 %v1428
      %v2237 = vpop.f32.mrf.mxu0
      %v2238 = vadd.f32 0.0, %v2237
      %v2239 = vpop.f32.mrf.mxu0
      %v2240 = vpop.f32.mrf.mxu0
      %v2241 = vadd.f32 0.0, %v2240
      %v2242 = vpop.f32.mrf.mxu0
      %2243 = vmatprep.mubr.bf16.mxu0 0
      %2244 = vmatmul.mubr.bf16.gmra.mxu0 %v1431
      %v2245 = vpop.f32.mrf.mxu0
      %v2246 = vadd.f32 0.0, %v2245
      %v2247 = vpop.f32.mrf.mxu0
      %v2248 = vpop.f32.mrf.mxu0
      %v2249 = vadd.f32 0.0, %v2248
      %v2250 = vpop.f32.mrf.mxu0
      %2251 = vmatprep.mubr.bf16.mxu0 0
      %2252 = vmatmul.mubr.bf16.gmra.mxu0 %v2097
      %v2253 = vpop.f32.mrf.mxu0
      %v2254 = vadd.f32 0.0, %v2253
      %v2255 = vpop.f32.mrf.mxu0
      %v2256 = vpop.f32.mrf.mxu0
      %v2257 = vadd.f32 0.0, %v2256
      %v2258 = vpop.f32.mrf.mxu0
      %2259 = vdwg.mxu0
      %v2260 = vadd.f32 %v2039, %v2134
      %v2261 = vadd.f32 %v2040, %v2137
      %v2262 = vadd.f32 %v2041, %v2142
      %v2263 = vadd.f32 %v2042, %v2145
      %v2264 = vadd.f32 %v2043, %v2150
      %v2265 = vadd.f32 %v2044, %v2153
      %v2266 = vadd.f32 %v2045, %v2158
      %v2267 = vadd.f32 %v2046, %v2161
      %v2268 = vadd.f32 %v2047, %v2166
      %v2269 = vadd.f32 %v2048, %v2169
      %v2270 = vadd.f32 %v2049, %v2174
      %v2271 = vadd.f32 %v2050, %v2177
      %v2272 = vadd.f32 %v2051, %v2182
      %v2273 = vadd.f32 %v2052, %v2185
      %v2274 = vadd.f32 %v2053, %v2190
      %v2275 = vadd.f32 %v2054, %v2193
      %v2276 = vadd.f32 %v2055, %v2198
      %v2277 = vadd.f32 %v2056, %v2201
      %v2278 = vadd.f32 %v2057, %v2206
      %v2279 = vadd.f32 %v2058, %v2209
      %v2280 = vadd.f32 %v2059, %v2214
      %v2281 = vadd.f32 %v2060, %v2217
      %v2282 = vadd.f32 %v2061, %v2222
      %v2283 = vadd.f32 %v2062, %v2225
      %v2284 = vadd.f32 %v2063, %v2230
      %v2285 = vadd.f32 %v2064, %v2233
      %v2286 = vadd.f32 %v2065, %v2238
      %v2287 = vadd.f32 %v2066, %v2241
      %v2288 = vadd.f32 %v2067, %v2246
      %v2289 = vadd.f32 %v2068, %v2249
      %v2290 = vadd.f32 %v2069, %v2254
      %v2291 = vadd.f32 %v2070, %v2257
      %v2295 = vrot.slane %v475, 1
      %v2296 = vrot.slane %v476, 1
      %v2297 = vsel %vm529, %v2295, %v2296
      %v2298 = vrot.slane %v477, 1
      %v2299 = vsel %vm529, %v2296, %v2298
      %v2302 = vpack.c.bf16 %v2299, %v2297
      %s2303 = scalar_lea.vmem %s1, 96
      %v2304 = vld [vmem:[%s2303] sm:$0xf]
      %v2305 = vld [vmem:[%s2303 + $0x4] sm:$0xf]
      %v2306 = vld [vmem:[%s2303 + $0x8] sm:$0xf]
      %v2307 = vld [vmem:[%s2303 + $0xc] sm:$0xf]
      %v2312 = vunpack.c.l.b16 %v2304
      %v2313 = vunpack.c.l.b16 %v2305
      %v2314 = vunpack.c.l.b16 %v2306
      %v2315 = vunpack.c.l.b16 %v2307
      %v2316 = vpack.c.b16 %v2313, %v2312
      %v2317 = vpack.c.b16 %v2315, %v2314
      %v2321 = vsel %vm808, %v2302, 0
      %2323 = vmatprep.subr.bf16.mxu0 0
      %2324 = vmatpush1.bf16.msra.mxu0 0
      %2325 = vmatprep.subr.bf16.mxu0 0
      %2326 = vmatpush1.bf16.msra.mxu0 0
      %2327 = vmatprep.subr.bf16.mxu0 0
      %2328 = vmatpush1.bf16.msra.mxu0 0
      %2329 = vmatprep.subr.bf16.mxu0 0
      %2330 = vmatpush1.bf16.msra.mxu0 0
      %2331 = vmatprep.subr.bf16.mxu0 0
      %2332 = vmatpush1.bf16.msra.mxu0 0
      %2333 = vmatprep.subr.bf16.mxu0 0
      %2334 = vmatpush1.bf16.msra.mxu0 0
      %2335 = vmatprep.subr.bf16.mxu0 0
      %2336 = vmatpush1.bf16.msra.mxu0 %v2317
      %2337 = vmatprep.subr.bf16.mxu0 0
      %2338 = vmatpush1.bf16.msra.mxu0 %v2316
      %2339 = vmatprep.subr.bf16.mxu0 0
      %2340 = vmatpush2.bf16.msra.mxu0 0
      %2341 = vmatprep.subr.bf16.mxu0 0
      %2342 = vmatpush2.bf16.msra.mxu0 0
      %2343 = vmatprep.subr.bf16.mxu0 0
      %2344 = vmatpush2.bf16.msra.mxu0 0
      %2345 = vmatprep.subr.bf16.mxu0 0
      %2346 = vmatpush2.bf16.msra.mxu0 0
      %2347 = vmatprep.subr.bf16.mxu0 0
      %2348 = vmatpush2.bf16.msra.mxu0 0
      %2349 = vmatprep.subr.bf16.mxu0 0
      %2350 = vmatpush2.bf16.msra.mxu0 0
      %2351 = vmatprep.subr.bf16.mxu0 0
      %2352 = vmatpush2.bf16.msra.mxu0 0
      %2353 = vmatprep.subr.bf16.mxu0 0
      %2354 = vmatpush2.bf16.msra.mxu0 0
      %2355 = vmatprep.mubr.bf16.mxu0 0
      %2356 = vmatmul.mubr.bf16.gmra.mxu0 %v1037
      %v2357 = vpop.f32.mrf.mxu0
      %v2358 = vadd.f32 0.0, %v2357
      %v2359 = vpop.f32.mrf.mxu0
      %v2360 = vpop.f32.mrf.mxu0
      %v2361 = vadd.f32 0.0, %v2360
      %v2362 = vpop.f32.mrf.mxu0
      %2363 = vmatprep.mubr.bf16.mxu0 0
      %2364 = vmatmul.mubr.bf16.gmra.mxu0 %v1040
      %v2365 = vpop.f32.mrf.mxu0
      %v2366 = vadd.f32 0.0, %v2365
      %v2367 = vpop.f32.mrf.mxu0
      %v2368 = vpop.f32.mrf.mxu0
      %v2369 = vadd.f32 0.0, %v2368
      %v2370 = vpop.f32.mrf.mxu0
      %2371 = vmatprep.mubr.bf16.mxu0 0
      %2372 = vmatmul.mubr.bf16.gmra.mxu0 %v1043
      %v2373 = vpop.f32.mrf.mxu0
      %v2374 = vadd.f32 0.0, %v2373
      %v2375 = vpop.f32.mrf.mxu0
      %v2376 = vpop.f32.mrf.mxu0
      %v2377 = vadd.f32 0.0, %v2376
      %v2378 = vpop.f32.mrf.mxu0
      %2379 = vmatprep.mubr.bf16.mxu0 0
      %2380 = vmatmul.mubr.bf16.gmra.mxu0 %v1046
      %v2381 = vpop.f32.mrf.mxu0
      %v2382 = vadd.f32 0.0, %v2381
      %v2383 = vpop.f32.mrf.mxu0
      %v2384 = vpop.f32.mrf.mxu0
      %v2385 = vadd.f32 0.0, %v2384
      %v2386 = vpop.f32.mrf.mxu0
      %2387 = vmatprep.mubr.bf16.mxu0 0
      %2388 = vmatmul.mubr.bf16.gmra.mxu0 %v1049
      %v2389 = vpop.f32.mrf.mxu0
      %v2390 = vadd.f32 0.0, %v2389
      %v2391 = vpop.f32.mrf.mxu0
      %v2392 = vpop.f32.mrf.mxu0
      %v2393 = vadd.f32 0.0, %v2392
      %v2394 = vpop.f32.mrf.mxu0
      %2395 = vmatprep.mubr.bf16.mxu0 0
      %2396 = vmatmul.mubr.bf16.gmra.mxu0 %v1052
      %v2397 = vpop.f32.mrf.mxu0
      %v2398 = vadd.f32 0.0, %v2397
      %v2399 = vpop.f32.mrf.mxu0
      %v2400 = vpop.f32.mrf.mxu0
      %v2401 = vadd.f32 0.0, %v2400
      %v2402 = vpop.f32.mrf.mxu0
      %2403 = vmatprep.mubr.bf16.mxu0 0
      %2404 = vmatmul.mubr.bf16.gmra.mxu0 %v1055
      %v2405 = vpop.f32.mrf.mxu0
      %v2406 = vadd.f32 0.0, %v2405
      %v2407 = vpop.f32.mrf.mxu0
      %v2408 = vpop.f32.mrf.mxu0
      %v2409 = vadd.f32 0.0, %v2408
      %v2410 = vpop.f32.mrf.mxu0
      %2411 = vmatprep.mubr.bf16.mxu0 0
      %2412 = vmatmul.mubr.bf16.gmra.mxu0 %v1058
      %v2413 = vpop.f32.mrf.mxu0
      %v2414 = vadd.f32 0.0, %v2413
      %v2415 = vpop.f32.mrf.mxu0
      %v2416 = vpop.f32.mrf.mxu0
      %v2417 = vadd.f32 0.0, %v2416
      %v2418 = vpop.f32.mrf.mxu0
      %2419 = vmatprep.mubr.bf16.mxu0 0
      %2420 = vmatmul.mubr.bf16.gmra.mxu0 %v1061
      %v2421 = vpop.f32.mrf.mxu0
      %v2422 = vadd.f32 0.0, %v2421
      %v2423 = vpop.f32.mrf.mxu0
      %v2424 = vpop.f32.mrf.mxu0
      %v2425 = vadd.f32 0.0, %v2424
      %v2426 = vpop.f32.mrf.mxu0
      %2427 = vmatprep.mubr.bf16.mxu0 0
      %2428 = vmatmul.mubr.bf16.gmra.mxu0 %v1064
      %v2429 = vpop.f32.mrf.mxu0
      %v2430 = vadd.f32 0.0, %v2429
      %v2431 = vpop.f32.mrf.mxu0
      %v2432 = vpop.f32.mrf.mxu0
      %v2433 = vadd.f32 0.0, %v2432
      %v2434 = vpop.f32.mrf.mxu0
      %2435 = vmatprep.mubr.bf16.mxu0 0
      %2436 = vmatmul.mubr.bf16.gmra.mxu0 %v1067
      %v2437 = vpop.f32.mrf.mxu0
      %v2438 = vadd.f32 0.0, %v2437
      %v2439 = vpop.f32.mrf.mxu0
      %v2440 = vpop.f32.mrf.mxu0
      %v2441 = vadd.f32 0.0, %v2440
      %v2442 = vpop.f32.mrf.mxu0
      %2443 = vmatprep.mubr.bf16.mxu0 0
      %2444 = vmatmul.mubr.bf16.gmra.mxu0 %v1070
      %v2445 = vpop.f32.mrf.mxu0
      %v2446 = vadd.f32 0.0, %v2445
      %v2447 = vpop.f32.mrf.mxu0
      %v2448 = vpop.f32.mrf.mxu0
      %v2449 = vadd.f32 0.0, %v2448
      %v2450 = vpop.f32.mrf.mxu0
      %2451 = vmatprep.mubr.bf16.mxu0 0
      %2452 = vmatmul.mubr.bf16.gmra.mxu0 %v1073
      %v2453 = vpop.f32.mrf.mxu0
      %v2454 = vadd.f32 0.0, %v2453
      %v2455 = vpop.f32.mrf.mxu0
      %v2456 = vpop.f32.mrf.mxu0
      %v2457 = vadd.f32 0.0, %v2456
      %v2458 = vpop.f32.mrf.mxu0
      %2459 = vmatprep.mubr.bf16.mxu0 0
      %2460 = vmatmul.mubr.bf16.gmra.mxu0 %v1076
      %v2461 = vpop.f32.mrf.mxu0
      %v2462 = vadd.f32 0.0, %v2461
      %v2463 = vpop.f32.mrf.mxu0
      %v2464 = vpop.f32.mrf.mxu0
      %v2465 = vadd.f32 0.0, %v2464
      %v2466 = vpop.f32.mrf.mxu0
      %2467 = vmatprep.mubr.bf16.mxu0 0
      %2468 = vmatmul.mubr.bf16.gmra.mxu0 %v1655
      %v2469 = vpop.f32.mrf.mxu0
      %v2470 = vadd.f32 0.0, %v2469
      %v2471 = vpop.f32.mrf.mxu0
      %v2472 = vpop.f32.mrf.mxu0
      %v2473 = vadd.f32 0.0, %v2472
      %v2474 = vpop.f32.mrf.mxu0
      %2475 = vmatprep.mubr.bf16.mxu0 0
      %2476 = vmatmul.mubr.bf16.gmra.mxu0 %v2321
      %v2477 = vpop.f32.mrf.mxu0
      %v2478 = vadd.f32 0.0, %v2477
      %v2479 = vpop.f32.mrf.mxu0
      %v2480 = vpop.f32.mrf.mxu0
      %v2481 = vadd.f32 0.0, %v2480
      %v2482 = vpop.f32.mrf.mxu0
      %2483 = vdwg.mxu0
      %v2484 = vadd.f32 %v2260, %v2358
      %v2485 = vadd.f32 %v2261, %v2361
      %v2486 = vadd.f32 %v2262, %v2366
      %v2487 = vadd.f32 %v2263, %v2369
      %v2488 = vadd.f32 %v2264, %v2374
      %v2489 = vadd.f32 %v2265, %v2377
      %v2490 = vadd.f32 %v2266, %v2382
      %v2491 = vadd.f32 %v2267, %v2385
      %v2492 = vadd.f32 %v2268, %v2390
      %v2493 = vadd.f32 %v2269, %v2393
      %v2494 = vadd.f32 %v2270, %v2398
      %v2495 = vadd.f32 %v2271, %v2401
      %v2496 = vadd.f32 %v2272, %v2406
      %v2497 = vadd.f32 %v2273, %v2409
      %v2498 = vadd.f32 %v2274, %v2414
      %v2499 = vadd.f32 %v2275, %v2417
      %v2500 = vadd.f32 %v2276, %v2422
      %v2501 = vadd.f32 %v2277, %v2425
      %v2502 = vadd.f32 %v2278, %v2430
      %v2503 = vadd.f32 %v2279, %v2433
      %v2504 = vadd.f32 %v2280, %v2438
      %v2505 = vadd.f32 %v2281, %v2441
      %v2506 = vadd.f32 %v2282, %v2446
      %v2507 = vadd.f32 %v2283, %v2449
      %v2508 = vadd.f32 %v2284, %v2454
      %v2509 = vadd.f32 %v2285, %v2457
      %v2510 = vadd.f32 %v2286, %v2462
      %v2511 = vadd.f32 %v2287, %v2465
      %v2512 = vadd.f32 %v2288, %v2470
      %v2513 = vadd.f32 %v2289, %v2473
      %v2514 = vadd.f32 %v2290, %v2478
      %v2515 = vadd.f32 %v2291, %v2481
      %v2516 = vrot.slane %v475, 2
      %v2517 = vrot.slane %v476, 2
      %v2518 = vsel %vm662, %v2516, %v2517
      %v2519 = vrot.slane %v477, 2
      %v2520 = vsel %vm662, %v2517, %v2519
      %v2523 = vpack.c.bf16 %v2520, %v2518
      %s2524 = scalar_lea.vmem %s1, 112
      %v2525 = vld [vmem:[%s2524] sm:$0xf]
      %v2526 = vld [vmem:[%s2524 + $0x4] sm:$0xf]
      %v2527 = vld [vmem:[%s2524 + $0x8] sm:$0xf]
      %v2528 = vld [vmem:[%s2524 + $0xc] sm:$0xf]
      %v2533 = vunpack.c.l.b16 %v2525
      %v2534 = vunpack.c.l.b16 %v2526
      %v2535 = vunpack.c.l.b16 %v2527
      %v2536 = vunpack.c.l.b16 %v2528
      %v2537 = vpack.c.b16 %v2534, %v2533
      %v2538 = vpack.c.b16 %v2536, %v2535
      %v2542 = vsel %vm808, %v2523, 0
      %2544 = vmatprep.subr.bf16.mxu0 0
      %2545 = vmatpush1.bf16.msra.mxu0 0
      %2546 = vmatprep.subr.bf16.mxu0 0
      %2547 = vmatpush1.bf16.msra.mxu0 0
      %2548 = vmatprep.subr.bf16.mxu0 0
      %2549 = vmatpush1.bf16.msra.mxu0 0
      %2550 = vmatprep.subr.bf16.mxu0 0
      %2551 = vmatpush1.bf16.msra.mxu0 0
      %2552 = vmatprep.subr.bf16.mxu0 0
      %2553 = vmatpush1.bf16.msra.mxu0 0
      %2554 = vmatprep.subr.bf16.mxu0 0
      %2555 = vmatpush1.bf16.msra.mxu0 0
      %2556 = vmatprep.subr.bf16.mxu0 0
      %2557 = vmatpush1.bf16.msra.mxu0 %v2538
      %2558 = vmatprep.subr.bf16.mxu0 0
      %2559 = vmatpush1.bf16.msra.mxu0 %v2537
      %2560 = vmatprep.subr.bf16.mxu0 0
      %2561 = vmatpush2.bf16.msra.mxu0 0
      %2562 = vmatprep.subr.bf16.mxu0 0
      %2563 = vmatpush2.bf16.msra.mxu0 0
      %2564 = vmatprep.subr.bf16.mxu0 0
      %2565 = vmatpush2.bf16.msra.mxu0 0
      %2566 = vmatprep.subr.bf16.mxu0 0
      %2567 = vmatpush2.bf16.msra.mxu0 0
      %2568 = vmatprep.subr.bf16.mxu0 0
      %2569 = vmatpush2.bf16.msra.mxu0 0
      %2570 = vmatprep.subr.bf16.mxu0 0
      %2571 = vmatpush2.bf16.msra.mxu0 0
      %2572 = vmatprep.subr.bf16.mxu0 0
      %2573 = vmatpush2.bf16.msra.mxu0 0
      %2574 = vmatprep.subr.bf16.mxu0 0
      %2575 = vmatpush2.bf16.msra.mxu0 0
      %2576 = vmatprep.mubr.bf16.mxu0 0
      %2577 = vmatmul.mubr.bf16.gmra.mxu0 %v816
      %v2578 = vpop.f32.mrf.mxu0
      %v2579 = vadd.f32 0.0, %v2578
      %v2580 = vpop.f32.mrf.mxu0
      %v2581 = vpop.f32.mrf.mxu0
      %v2582 = vadd.f32 0.0, %v2581
      %v2583 = vpop.f32.mrf.mxu0
      %2584 = vmatprep.mubr.bf16.mxu0 0
      %2585 = vmatmul.mubr.bf16.gmra.mxu0 %v819
      %v2586 = vpop.f32.mrf.mxu0
      %v2587 = vadd.f32 0.0, %v2586
      %v2588 = vpop.f32.mrf.mxu0
      %v2589 = vpop.f32.mrf.mxu0
      %v2590 = vadd.f32 0.0, %v2589
      %v2591 = vpop.f32.mrf.mxu0
      %2592 = vmatprep.mubr.bf16.mxu0 0
      %2593 = vmatmul.mubr.bf16.gmra.mxu0 %v822
      %v2594 = vpop.f32.mrf.mxu0
      %v2595 = vadd.f32 0.0, %v2594
      %v2596 = vpop.f32.mrf.mxu0
      %v2597 = vpop.f32.mrf.mxu0
      %v2598 = vadd.f32 0.0, %v2597
      %v2599 = vpop.f32.mrf.mxu0
      %2600 = vmatprep.mubr.bf16.mxu0 0
      %2601 = vmatmul.mubr.bf16.gmra.mxu0 %v825
      %v2602 = vpop.f32.mrf.mxu0
      %v2603 = vadd.f32 0.0, %v2602
      %v2604 = vpop.f32.mrf.mxu0
      %v2605 = vpop.f32.mrf.mxu0
      %v2606 = vadd.f32 0.0, %v2605
      %v2607 = vpop.f32.mrf.mxu0
      %2608 = vmatprep.mubr.bf16.mxu0 0
      %2609 = vmatmul.mubr.bf16.gmra.mxu0 %v828
      %v2610 = vpop.f32.mrf.mxu0
      %v2611 = vadd.f32 0.0, %v2610
      %v2612 = vpop.f32.mrf.mxu0
      %v2613 = vpop.f32.mrf.mxu0
      %v2614 = vadd.f32 0.0, %v2613
      %v2615 = vpop.f32.mrf.mxu0
      %2616 = vmatprep.mubr.bf16.mxu0 0
      %2617 = vmatmul.mubr.bf16.gmra.mxu0 %v831
      %v2618 = vpop.f32.mrf.mxu0
      %v2619 = vadd.f32 0.0, %v2618
      %v2620 = vpop.f32.mrf.mxu0
      %v2621 = vpop.f32.mrf.mxu0
      %v2622 = vadd.f32 0.0, %v2621
      %v2623 = vpop.f32.mrf.mxu0
      %2624 = vmatprep.mubr.bf16.mxu0 0
      %2625 = vmatmul.mubr.bf16.gmra.mxu0 %v834
      %v2626 = vpop.f32.mrf.mxu0
      %v2627 = vadd.f32 0.0, %v2626
      %v2628 = vpop.f32.mrf.mxu0
      %v2629 = vpop.f32.mrf.mxu0
      %v2630 = vadd.f32 0.0, %v2629
      %v2631 = vpop.f32.mrf.mxu0
      %2632 = vmatprep.mubr.bf16.mxu0 0
      %2633 = vmatmul.mubr.bf16.gmra.mxu0 %v837
      %v2634 = vpop.f32.mrf.mxu0
      %v2635 = vadd.f32 0.0, %v2634
      %v2636 = vpop.f32.mrf.mxu0
      %v2637 = vpop.f32.mrf.mxu0
      %v2638 = vadd.f32 0.0, %v2637
      %v2639 = vpop.f32.mrf.mxu0
      %2640 = vmatprep.mubr.bf16.mxu0 0
      %2641 = vmatmul.mubr.bf16.gmra.mxu0 %v840
      %v2642 = vpop.f32.mrf.mxu0
      %v2643 = vadd.f32 0.0, %v2642
      %v2644 = vpop.f32.mrf.mxu0
      %v2645 = vpop.f32.mrf.mxu0
      %v2646 = vadd.f32 0.0, %v2645
      %v2647 = vpop.f32.mrf.mxu0
      %2648 = vmatprep.mubr.bf16.mxu0 0
      %2649 = vmatmul.mubr.bf16.gmra.mxu0 %v843
      %v2650 = vpop.f32.mrf.mxu0
      %v2651 = vadd.f32 0.0, %v2650
      %v2652 = vpop.f32.mrf.mxu0
      %v2653 = vpop.f32.mrf.mxu0
      %v2654 = vadd.f32 0.0, %v2653
      %v2655 = vpop.f32.mrf.mxu0
      %2656 = vmatprep.mubr.bf16.mxu0 0
      %2657 = vmatmul.mubr.bf16.gmra.mxu0 %v846
      %v2658 = vpop.f32.mrf.mxu0
      %v2659 = vadd.f32 0.0, %v2658
      %v2660 = vpop.f32.mrf.mxu0
      %v2661 = vpop.f32.mrf.mxu0
      %v2662 = vadd.f32 0.0, %v2661
      %v2663 = vpop.f32.mrf.mxu0
      %2664 = vmatprep.mubr.bf16.mxu0 0
      %2665 = vmatmul.mubr.bf16.gmra.mxu0 %v849
      %v2666 = vpop.f32.mrf.mxu0
      %v2667 = vadd.f32 0.0, %v2666
      %v2668 = vpop.f32.mrf.mxu0
      %v2669 = vpop.f32.mrf.mxu0
      %v2670 = vadd.f32 0.0, %v2669
      %v2671 = vpop.f32.mrf.mxu0
      %2672 = vmatprep.mubr.bf16.mxu0 0
      %2673 = vmatmul.mubr.bf16.gmra.mxu0 %v852
      %v2674 = vpop.f32.mrf.mxu0
      %v2675 = vadd.f32 0.0, %v2674
      %v2676 = vpop.f32.mrf.mxu0
      %v2677 = vpop.f32.mrf.mxu0
      %v2678 = vadd.f32 0.0, %v2677
      %v2679 = vpop.f32.mrf.mxu0
      %2680 = vmatprep.mubr.bf16.mxu0 0
      %2681 = vmatmul.mubr.bf16.gmra.mxu0 %v855
      %v2682 = vpop.f32.mrf.mxu0
      %v2683 = vadd.f32 0.0, %v2682
      %v2684 = vpop.f32.mrf.mxu0
      %v2685 = vpop.f32.mrf.mxu0
      %v2686 = vadd.f32 0.0, %v2685
      %v2687 = vpop.f32.mrf.mxu0
      %2688 = vmatprep.mubr.bf16.mxu0 0
      %2689 = vmatmul.mubr.bf16.gmra.mxu0 %v1876
      %v2690 = vpop.f32.mrf.mxu0
      %v2691 = vadd.f32 0.0, %v2690
      %v2692 = vpop.f32.mrf.mxu0
      %v2693 = vpop.f32.mrf.mxu0
      %v2694 = vadd.f32 0.0, %v2693
      %v2695 = vpop.f32.mrf.mxu0
      %2696 = vmatprep.mubr.bf16.mxu0 0
      %2697 = vmatmul.mubr.bf16.gmra.mxu0 %v2542
      %v2698 = vpop.f32.mrf.mxu0
      %v2699 = vadd.f32 0.0, %v2698
      %v2700 = vpop.f32.mrf.mxu0
      %v2701 = vpop.f32.mrf.mxu0
      %v2702 = vadd.f32 0.0, %v2701
      %v2703 = vpop.f32.mrf.mxu0
      %2704 = vdwg.mxu0
      %v2705 = vadd.f32 %v2484, %v2579
      %v2706 = vadd.f32 %v2485, %v2582
      %v2707 = vadd.f32 %v2486, %v2587
      %v2708 = vadd.f32 %v2487, %v2590
      %v2709 = vadd.f32 %v2488, %v2595
      %v2710 = vadd.f32 %v2489, %v2598
      %v2711 = vadd.f32 %v2490, %v2603
      %v2712 = vadd.f32 %v2491, %v2606
      %v2713 = vadd.f32 %v2492, %v2611
      %v2714 = vadd.f32 %v2493, %v2614
      %v2715 = vadd.f32 %v2494, %v2619
      %v2716 = vadd.f32 %v2495, %v2622
      %v2717 = vadd.f32 %v2496, %v2627
      %v2718 = vadd.f32 %v2497, %v2630
      %v2719 = vadd.f32 %v2498, %v2635
      %v2720 = vadd.f32 %v2499, %v2638
      %v2721 = vadd.f32 %v2500, %v2643
      %v2722 = vadd.f32 %v2501, %v2646
      %v2723 = vadd.f32 %v2502, %v2651
      %v2724 = vadd.f32 %v2503, %v2654
      %v2725 = vadd.f32 %v2504, %v2659
      %v2726 = vadd.f32 %v2505, %v2662
      %v2727 = vadd.f32 %v2506, %v2667
      %v2728 = vadd.f32 %v2507, %v2670
      %v2729 = vadd.f32 %v2508, %v2675
      %v2730 = vadd.f32 %v2509, %v2678
      %v2731 = vadd.f32 %v2510, %v2683
      %v2732 = vadd.f32 %v2511, %v2686
      %v2733 = vadd.f32 %v2512, %v2691
      %v2734 = vadd.f32 %v2513, %v2694
      %v2735 = vadd.f32 %v2514, %v2699
      %v2736 = vadd.f32 %v2515, %v2702
      %v2737 = vrot.slane %v475, 3
      %v2738 = vrot.slane %v476, 3
      %v2739 = vsel %vm1239, %v2737, %v2738
      %v2740 = vrot.slane %v477, 3
      %v2741 = vsel %vm1239, %v2738, %v2740
      %v2744 = vpack.c.bf16 %v2741, %v2739
      %s2745 = scalar_lea.vmem %s1, 128
      %v2746 = vld [vmem:[%s2745] sm:$0xf]
      %v2747 = vld [vmem:[%s2745 + $0x4] sm:$0xf]
      %v2748 = vld [vmem:[%s2745 + $0x8] sm:$0xf]
      %v2749 = vld [vmem:[%s2745 + $0xc] sm:$0xf]
      %v2754 = vunpack.c.l.b16 %v2746
      %v2755 = vunpack.c.l.b16 %v2747
      %v2756 = vunpack.c.l.b16 %v2748
      %v2757 = vunpack.c.l.b16 %v2749
      %v2758 = vpack.c.b16 %v2755, %v2754
      %v2759 = vpack.c.b16 %v2757, %v2756
      %v2763 = vsel %vm808, %v2744, 0
      %2765 = vmatprep.subr.bf16.mxu0 0
      %2766 = vmatpush1.bf16.msra.mxu0 0
      %2767 = vmatprep.subr.bf16.mxu0 0
      %2768 = vmatpush1.bf16.msra.mxu0 0
      %2769 = vmatprep.subr.bf16.mxu0 0
      %2770 = vmatpush1.bf16.msra.mxu0 0
      %2771 = vmatprep.subr.bf16.mxu0 0
      %2772 = vmatpush1.bf16.msra.mxu0 0
      %2773 = vmatprep.subr.bf16.mxu0 0
      %2774 = vmatpush1.bf16.msra.mxu0 0
      %2775 = vmatprep.subr.bf16.mxu0 0
      %2776 = vmatpush1.bf16.msra.mxu0 0
      %2777 = vmatprep.subr.bf16.mxu0 0
      %2778 = vmatpush1.bf16.msra.mxu0 %v2759
      %2779 = vmatprep.subr.bf16.mxu0 0
      %2780 = vmatpush1.bf16.msra.mxu0 %v2758
      %2781 = vmatprep.subr.bf16.mxu0 0
      %2782 = vmatpush2.bf16.msra.mxu0 0
      %2783 = vmatprep.subr.bf16.mxu0 0
      %2784 = vmatpush2.bf16.msra.mxu0 0
      %2785 = vmatprep.subr.bf16.mxu0 0
      %2786 = vmatpush2.bf16.msra.mxu0 0
      %2787 = vmatprep.subr.bf16.mxu0 0
      %2788 = vmatpush2.bf16.msra.mxu0 0
      %2789 = vmatprep.subr.bf16.mxu0 0
      %2790 = vmatpush2.bf16.msra.mxu0 0
      %2791 = vmatprep.subr.bf16.mxu0 0
      %2792 = vmatpush2.bf16.msra.mxu0 0
      %2793 = vmatprep.subr.bf16.mxu0 0
      %2794 = vmatpush2.bf16.msra.mxu0 0
      %2795 = vmatprep.subr.bf16.mxu0 0
      %2796 = vmatpush2.bf16.msra.mxu0 0
      %2797 = vmatprep.mubr.bf16.mxu0 0
      %2798 = vmatmul.mubr.bf16.gmra.mxu0 %v1392
      %v2799 = vpop.f32.mrf.mxu0
      %v2800 = vadd.f32 0.0, %v2799
      %v2801 = vpop.f32.mrf.mxu0
      %v2802 = vpop.f32.mrf.mxu0
      %v2803 = vadd.f32 0.0, %v2802
      %v2804 = vpop.f32.mrf.mxu0
      %2805 = vmatprep.mubr.bf16.mxu0 0
      %2806 = vmatmul.mubr.bf16.gmra.mxu0 %v1395
      %v2807 = vpop.f32.mrf.mxu0
      %v2808 = vadd.f32 0.0, %v2807
      %v2809 = vpop.f32.mrf.mxu0
      %v2810 = vpop.f32.mrf.mxu0
      %v2811 = vadd.f32 0.0, %v2810
      %v2812 = vpop.f32.mrf.mxu0
      %2813 = vmatprep.mubr.bf16.mxu0 0
      %2814 = vmatmul.mubr.bf16.gmra.mxu0 %v1398
      %v2815 = vpop.f32.mrf.mxu0
      %v2816 = vadd.f32 0.0, %v2815
      %v2817 = vpop.f32.mrf.mxu0
      %v2818 = vpop.f32.mrf.mxu0
      %v2819 = vadd.f32 0.0, %v2818
      %v2820 = vpop.f32.mrf.mxu0
      %2821 = vmatprep.mubr.bf16.mxu0 0
      %2822 = vmatmul.mubr.bf16.gmra.mxu0 %v1401
      %v2823 = vpop.f32.mrf.mxu0
      %v2824 = vadd.f32 0.0, %v2823
      %v2825 = vpop.f32.mrf.mxu0
      %v2826 = vpop.f32.mrf.mxu0
      %v2827 = vadd.f32 0.0, %v2826
      %v2828 = vpop.f32.mrf.mxu0
      %2829 = vmatprep.mubr.bf16.mxu0 0
      %2830 = vmatmul.mubr.bf16.gmra.mxu0 %v1404
      %v2831 = vpop.f32.mrf.mxu0
      %v2832 = vadd.f32 0.0, %v2831
      %v2833 = vpop.f32.mrf.mxu0
      %v2834 = vpop.f32.mrf.mxu0
      %v2835 = vadd.f32 0.0, %v2834
      %v2836 = vpop.f32.mrf.mxu0
      %2837 = vmatprep.mubr.bf16.mxu0 0
      %2838 = vmatmul.mubr.bf16.gmra.mxu0 %v1407
      %v2839 = vpop.f32.mrf.mxu0
      %v2840 = vadd.f32 0.0, %v2839
      %v2841 = vpop.f32.mrf.mxu0
      %v2842 = vpop.f32.mrf.mxu0
      %v2843 = vadd.f32 0.0, %v2842
      %v2844 = vpop.f32.mrf.mxu0
      %2845 = vmatprep.mubr.bf16.mxu0 0
      %2846 = vmatmul.mubr.bf16.gmra.mxu0 %v1410
      %v2847 = vpop.f32.mrf.mxu0
      %v2848 = vadd.f32 0.0, %v2847
      %v2849 = vpop.f32.mrf.mxu0
      %v2850 = vpop.f32.mrf.mxu0
      %v2851 = vadd.f32 0.0, %v2850
      %v2852 = vpop.f32.mrf.mxu0
      %2853 = vmatprep.mubr.bf16.mxu0 0
      %2854 = vmatmul.mubr.bf16.gmra.mxu0 %v1413
      %v2855 = vpop.f32.mrf.mxu0
      %v2856 = vadd.f32 0.0, %v2855
      %v2857 = vpop.f32.mrf.mxu0
      %v2858 = vpop.f32.mrf.mxu0
      %v2859 = vadd.f32 0.0, %v2858
      %v2860 = vpop.f32.mrf.mxu0
      %2861 = vmatprep.mubr.bf16.mxu0 0
      %2862 = vmatmul.mubr.bf16.gmra.mxu0 %v1416
      %v2863 = vpop.f32.mrf.mxu0
      %v2864 = vadd.f32 0.0, %v2863
      %v2865 = vpop.f32.mrf.mxu0
      %v2866 = vpop.f32.mrf.mxu0
      %v2867 = vadd.f32 0.0, %v2866
      %v2868 = vpop.f32.mrf.mxu0
      %2869 = vmatprep.mubr.bf16.mxu0 0
      %2870 = vmatmul.mubr.bf16.gmra.mxu0 %v1419
      %v2871 = vpop.f32.mrf.mxu0
      %v2872 = vadd.f32 0.0, %v2871
      %v2873 = vpop.f32.mrf.mxu0
      %v2874 = vpop.f32.mrf.mxu0
      %v2875 = vadd.f32 0.0, %v2874
      %v2876 = vpop.f32.mrf.mxu0
      %2877 = vmatprep.mubr.bf16.mxu0 0
      %2878 = vmatmul.mubr.bf16.gmra.mxu0 %v1422
      %v2879 = vpop.f32.mrf.mxu0
      %v2880 = vadd.f32 0.0, %v2879
      %v2881 = vpop.f32.mrf.mxu0
      %v2882 = vpop.f32.mrf.mxu0
      %v2883 = vadd.f32 0.0, %v2882
      %v2884 = vpop.f32.mrf.mxu0
      %2885 = vmatprep.mubr.bf16.mxu0 0
      %2886 = vmatmul.mubr.bf16.gmra.mxu0 %v1425
      %v2887 = vpop.f32.mrf.mxu0
      %v2888 = vadd.f32 0.0, %v2887
      %v2889 = vpop.f32.mrf.mxu0
      %v2890 = vpop.f32.mrf.mxu0
      %v2891 = vadd.f32 0.0, %v2890
      %v2892 = vpop.f32.mrf.mxu0
      %2893 = vmatprep.mubr.bf16.mxu0 0
      %2894 = vmatmul.mubr.bf16.gmra.mxu0 %v1428
      %v2895 = vpop.f32.mrf.mxu0
      %v2896 = vadd.f32 0.0, %v2895
      %v2897 = vpop.f32.mrf.mxu0
      %v2898 = vpop.f32.mrf.mxu0
      %v2899 = vadd.f32 0.0, %v2898
      %v2900 = vpop.f32.mrf.mxu0
      %2901 = vmatprep.mubr.bf16.mxu0 0
      %2902 = vmatmul.mubr.bf16.gmra.mxu0 %v1431
      %v2903 = vpop.f32.mrf.mxu0
      %v2904 = vadd.f32 0.0, %v2903
      %v2905 = vpop.f32.mrf.mxu0
      %v2906 = vpop.f32.mrf.mxu0
      %v2907 = vadd.f32 0.0, %v2906
      %v2908 = vpop.f32.mrf.mxu0
      %2909 = vmatprep.mubr.bf16.mxu0 0
      %2910 = vmatmul.mubr.bf16.gmra.mxu0 %v2097
      %v2911 = vpop.f32.mrf.mxu0
      %v2912 = vadd.f32 0.0, %v2911
      %v2913 = vpop.f32.mrf.mxu0
      %v2914 = vpop.f32.mrf.mxu0
      %v2915 = vadd.f32 0.0, %v2914
      %v2916 = vpop.f32.mrf.mxu0
      %2917 = vmatprep.mubr.bf16.mxu0 0
      %2918 = vmatmul.mubr.bf16.gmra.mxu0 %v2763
      %v2919 = vpop.f32.mrf.mxu0
      %v2920 = vadd.f32 0.0, %v2919
      %v2921 = vpop.f32.mrf.mxu0
      %v2922 = vpop.f32.mrf.mxu0
      %v2923 = vadd.f32 0.0, %v2922
      %v2924 = vpop.f32.mrf.mxu0
      %2925 = vdwg.mxu0
      %v2926 = vadd.f32 %v2705, %v2800
      %v2927 = vadd.f32 %v2706, %v2803
      %v2928 = vadd.f32 %v2707, %v2808
      %v2929 = vadd.f32 %v2708, %v2811
      %v2930 = vadd.f32 %v2709, %v2816
      %v2931 = vadd.f32 %v2710, %v2819
      %v2932 = vadd.f32 %v2711, %v2824
      %v2933 = vadd.f32 %v2712, %v2827
      %v2934 = vadd.f32 %v2713, %v2832
      %v2935 = vadd.f32 %v2714, %v2835
      %v2936 = vadd.f32 %v2715, %v2840
      %v2937 = vadd.f32 %v2716, %v2843
      %v2938 = vadd.f32 %v2717, %v2848
      %v2939 = vadd.f32 %v2718, %v2851
      %v2940 = vadd.f32 %v2719, %v2856
      %v2941 = vadd.f32 %v2720, %v2859
      %v2942 = vadd.f32 %v2721, %v2864
      %v2943 = vadd.f32 %v2722, %v2867
      %v2944 = vadd.f32 %v2723, %v2872
      %v2945 = vadd.f32 %v2724, %v2875
      %v2946 = vadd.f32 %v2725, %v2880
      %v2947 = vadd.f32 %v2726, %v2883
      %v2948 = vadd.f32 %v2727, %v2888
      %v2949 = vadd.f32 %v2728, %v2891
      %v2950 = vadd.f32 %v2729, %v2896
      %v2951 = vadd.f32 %v2730, %v2899
      %v2952 = vadd.f32 %v2731, %v2904
      %v2953 = vadd.f32 %v2732, %v2907
      %v2954 = vadd.f32 %v2733, %v2912
      %v2955 = vadd.f32 %v2734, %v2915
      %v2956 = vadd.f32 %v2735, %v2920
      %v2957 = vadd.f32 %v2736, %v2923
      %v2958 = vld [vmem:[%s2] sm:$0x1]
      %v2960 = vlaneseq
      %v2961 = vshrl.u32 %v2960, 7
      %v2962 = vsub.s32 0, %v2961
      %v2963 = vrot.slane %v2958, %v2962
      %v2965 = vmul.f32 %v2926, %v2963
      %v2966 = vmul.f32 %v2927, %v2963
      %v2967 = vmul.f32 %v2928, %v2963
      %v2968 = vmul.f32 %v2929, %v2963
      %v2969 = vmul.f32 %v2930, %v2963
      %v2970 = vmul.f32 %v2931, %v2963
      %v2971 = vmul.f32 %v2932, %v2963
      %v2972 = vmul.f32 %v2933, %v2963
      %v2973 = vmul.f32 %v2934, %v2963
      %v2974 = vmul.f32 %v2935, %v2963
      %v2975 = vmul.f32 %v2936, %v2963
      %v2976 = vmul.f32 %v2937, %v2963
      %v2977 = vmul.f32 %v2938, %v2963
      %v2978 = vmul.f32 %v2939, %v2963
      %v2979 = vmul.f32 %v2940, %v2963
      %v2980 = vmul.f32 %v2941, %v2963
      %v2981 = vmul.f32 %v2942, %v2963
      %v2982 = vmul.f32 %v2943, %v2963
      %v2983 = vmul.f32 %v2944, %v2963
      %v2984 = vmul.f32 %v2945, %v2963
      %v2985 = vmul.f32 %v2946, %v2963
      %v2986 = vmul.f32 %v2947, %v2963
      %v2987 = vmul.f32 %v2948, %v2963
      %v2988 = vmul.f32 %v2949, %v2963
      %v2989 = vmul.f32 %v2950, %v2963
      %v2990 = vmul.f32 %v2951, %v2963
      %v2991 = vmul.f32 %v2952, %v2963
      %v2992 = vmul.f32 %v2953, %v2963
      %v2993 = vmul.f32 %v2954, %v2963
      %v2994 = vmul.f32 %v2955, %v2963
      %v2995 = vmul.f32 %v2956, %v2963
      %v2996 = vmul.f32 %v2957, %v2963
      %v2997 = vld [vmem:[%s3] sm:$0x1]
      %v2999 = vlaneseq
      %v3000 = vshrl.u32 %v2999, 7
      %v3001 = vsub.s32 0, %v3000
      %v3002 = vrot.slane %v2997, %v3001
      %v3004 = vadd.f32 %v2965, %v3002
      %v3005 = vadd.f32 %v2966, %v3002
      %v3006 = vadd.f32 %v2967, %v3002
      %v3007 = vadd.f32 %v2968, %v3002
      %v3008 = vadd.f32 %v2969, %v3002
      %v3009 = vadd.f32 %v2970, %v3002
      %v3010 = vadd.f32 %v2971, %v3002
      %v3011 = vadd.f32 %v2972, %v3002
      %v3012 = vadd.f32 %v2973, %v3002
      %v3013 = vadd.f32 %v2974, %v3002
      %v3014 = vadd.f32 %v2975, %v3002
      %v3015 = vadd.f32 %v2976, %v3002
      %v3016 = vadd.f32 %v2977, %v3002
      %v3017 = vadd.f32 %v2978, %v3002
      %v3018 = vadd.f32 %v2979, %v3002
      %v3019 = vadd.f32 %v2980, %v3002
      %v3020 = vadd.f32 %v2981, %v3002
      %v3021 = vadd.f32 %v2982, %v3002
      %v3022 = vadd.f32 %v2983, %v3002
      %v3023 = vadd.f32 %v2984, %v3002
      %v3024 = vadd.f32 %v2985, %v3002
      %v3025 = vadd.f32 %v2986, %v3002
      %v3026 = vadd.f32 %v2987, %v3002
      %v3027 = vadd.f32 %v2988, %v3002
      %v3028 = vadd.f32 %v2989, %v3002
      %v3029 = vadd.f32 %v2990, %v3002
      %v3030 = vadd.f32 %v2991, %v3002
      %v3031 = vadd.f32 %v2992, %v3002
      %v3032 = vadd.f32 %v2993, %v3002
      %v3033 = vadd.f32 %v2994, %v3002
      %v3034 = vadd.f32 %v2995, %v3002
      %v3035 = vadd.f32 %v2996, %v3002
      %v3036 = vmax.f32 %v3004, 0.0
      %v3037 = vmax.f32 %v3005, 0.0
      %v3038 = vmax.f32 %v3006, 0.0
      %v3039 = vmax.f32 %v3007, 0.0
      %v3040 = vmax.f32 %v3008, 0.0
      %v3041 = vmax.f32 %v3009, 0.0
      %v3042 = vmax.f32 %v3010, 0.0
      %v3043 = vmax.f32 %v3011, 0.0
      %v3044 = vmax.f32 %v3012, 0.0
      %v3045 = vmax.f32 %v3013, 0.0
      %v3046 = vmax.f32 %v3014, 0.0
      %v3047 = vmax.f32 %v3015, 0.0
      %v3048 = vmax.f32 %v3016, 0.0
      %v3049 = vmax.f32 %v3017, 0.0
      %v3050 = vmax.f32 %v3018, 0.0
      %v3051 = vmax.f32 %v3019, 0.0
      %v3052 = vmax.f32 %v3020, 0.0
      %v3053 = vmax.f32 %v3021, 0.0
      %v3054 = vmax.f32 %v3022, 0.0
      %v3055 = vmax.f32 %v3023, 0.0
      %v3056 = vmax.f32 %v3024, 0.0
      %v3057 = vmax.f32 %v3025, 0.0
      %v3058 = vmax.f32 %v3026, 0.0
      %v3059 = vmax.f32 %v3027, 0.0
      %v3060 = vmax.f32 %v3028, 0.0
      %v3061 = vmax.f32 %v3029, 0.0
      %v3062 = vmax.f32 %v3030, 0.0
      %v3063 = vmax.f32 %v3031, 0.0
      %v3064 = vmax.f32 %v3032, 0.0
      %v3065 = vmax.f32 %v3033, 0.0
      %v3066 = vmax.f32 %v3034, 0.0
      %v3067 = vmax.f32 %v3035, 0.0
      %v3068 = vpack.c.bf16 %v422, %v421
      %v3069 = vpack.c.bf16 %v425, %v424
      %v3070 = vpack.c.bf16 %v428, %v427
      %v3071 = vpack.c.bf16 %v431, %v430
      %v3072 = vpack.c.bf16 %v434, %v433
      %v3073 = vpack.c.bf16 %v437, %v436
      %v3074 = vpack.c.bf16 %v440, %v439
      %v3075 = vpack.c.bf16 %v443, %v442
      %v3076 = vpack.c.bf16 %v446, %v445
      %v3077 = vpack.c.bf16 %v449, %v448
      %v3078 = vpack.c.bf16 %v452, %v451
      %v3079 = vpack.c.bf16 %v455, %v454
      %v3080 = vpack.c.bf16 %v458, %v457
      %v3081 = vpack.c.bf16 %v461, %v460
      %v3082 = vpack.c.bf16 %v464, %v463
      %v3083 = vpack.c.bf16 %v467, %v466
      %v3084 = vld [vmem:[%s4] sm:$0xf]
      %v3085 = vld [vmem:[%s4 + $0x4] sm:$0xf]
      %v3086 = vld [vmem:[%s4 + $0x8] sm:$0xf]
      %v3087 = vld [vmem:[%s4 + $0xc] sm:$0xf]
      %v3091 = vrot.slane %v421, 2
      %v3092 = vrot.slane %v422, 2
      %v3093 = vsel %vm662, %v3091, %v3092
      %v3094 = vrot.slane %v423, 2
      %v3095 = vsel %vm662, %v3092, %v3094
      %v3098 = vpack.c.bf16 %v3095, %v3093
      %s3099 = scalar_lea.vmem %s4, 16
      %v3100 = vld [vmem:[%s3099] sm:$0xf]
      %v3101 = vld [vmem:[%s3099 + $0x4] sm:$0xf]
      %v3102 = vld [vmem:[%s3099 + $0x8] sm:$0xf]
      %v3103 = vld [vmem:[%s3099 + $0xc] sm:$0xf]
      %v3108 = vunpack.c.l.b16 %v3100
      %v3109 = vunpack.c.l.b16 %v3101
      %v3110 = vunpack.c.l.b16 %v3102
      %v3111 = vunpack.c.l.b16 %v3103
      %v3112 = vpack.c.b16 %v3109, %v3108
      %v3113 = vpack.c.b16 %v3111, %v3110
      %v3117 = vsel %vm808, %v3098, 0
      %3119 = vmatprep.subr.bf16.mxu0 0
      %3120 = vmatpush1.bf16.msra.mxu0 0
      %3121 = vmatprep.subr.bf16.mxu0 0
      %3122 = vmatpush1.bf16.msra.mxu0 0
      %3123 = vmatprep.subr.bf16.mxu0 0
      %3124 = vmatpush1.bf16.msra.mxu0 0
      %3125 = vmatprep.subr.bf16.mxu0 0
      %3126 = vmatpush1.bf16.msra.mxu0 0
      %3127 = vmatprep.subr.bf16.mxu0 0
      %3128 = vmatpush1.bf16.msra.mxu0 0
      %3129 = vmatprep.subr.bf16.mxu0 0
      %3130 = vmatpush1.bf16.msra.mxu0 0
      %3131 = vmatprep.subr.bf16.mxu0 0
      %3132 = vmatpush1.bf16.msra.mxu0 %v3113
      %3133 = vmatprep.subr.bf16.mxu0 0
      %3134 = vmatpush1.bf16.msra.mxu0 %v3112
      %3135 = vmatprep.subr.bf16.mxu0 0
      %3136 = vmatpush2.bf16.msra.mxu0 0
      %3137 = vmatprep.subr.bf16.mxu0 0
      %3138 = vmatpush2.bf16.msra.mxu0 0
      %3139 = vmatprep.subr.bf16.mxu0 0
      %3140 = vmatpush2.bf16.msra.mxu0 0
      %3141 = vmatprep.subr.bf16.mxu0 0
      %3142 = vmatpush2.bf16.msra.mxu0 0
      %3143 = vmatprep.subr.bf16.mxu0 0
      %3144 = vmatpush2.bf16.msra.mxu0 0
      %3145 = vmatprep.subr.bf16.mxu0 0
      %3146 = vmatpush2.bf16.msra.mxu0 0
      %3147 = vmatprep.subr.bf16.mxu0 0
      %3148 = vmatpush2.bf16.msra.mxu0 0
      %3149 = vmatprep.subr.bf16.mxu0 0
      %3150 = vmatpush2.bf16.msra.mxu0 0
      %3151 = vmatprep.mubr.bf16.mxu0 0
      %3152 = vmatmul.mubr.bf16.gmra.mxu0 %v3117
      %v3153 = vpop.f32.mrf.mxu0
      %v3154 = vadd.f32 0.0, %v3153
      %v3155 = vpop.f32.mrf.mxu0
      %v3156 = vpop.f32.mrf.mxu0
      %v3157 = vadd.f32 0.0, %v3156
      %v3158 = vpop.f32.mrf.mxu0
      %3159 = vmatprep.mubr.bf16.mxu0 0
      %3160 = vmatmul.mubr.bf16.gmra.mxu0 %v810
      %v3161 = vpop.f32.mrf.mxu0
      %v3162 = vadd.f32 0.0, %v3161
      %v3163 = vpop.f32.mrf.mxu0
      %v3164 = vpop.f32.mrf.mxu0
      %v3165 = vadd.f32 0.0, %v3164
      %v3166 = vpop.f32.mrf.mxu0
      %3167 = vmatprep.mubr.bf16.mxu0 0
      %3168 = vmatmul.mubr.bf16.gmra.mxu0 %v813
      %v3169 = vpop.f32.mrf.mxu0
      %v3170 = vadd.f32 0.0, %v3169
      %v3171 = vpop.f32.mrf.mxu0
      %v3172 = vpop.f32.mrf.mxu0
      %v3173 = vadd.f32 0.0, %v3172
      %v3174 = vpop.f32.mrf.mxu0
      %3175 = vmatprep.mubr.bf16.mxu0 0
      %3176 = vmatmul.mubr.bf16.gmra.mxu0 %v816
      %v3177 = vpop.f32.mrf.mxu0
      %v3178 = vadd.f32 0.0, %v3177
      %v3179 = vpop.f32.mrf.mxu0
      %v3180 = vpop.f32.mrf.mxu0
      %v3181 = vadd.f32 0.0, %v3180
      %v3182 = vpop.f32.mrf.mxu0
      %3183 = vmatprep.mubr.bf16.mxu0 0
      %3184 = vmatmul.mubr.bf16.gmra.mxu0 %v819
      %v3185 = vpop.f32.mrf.mxu0
      %v3186 = vadd.f32 0.0, %v3185
      %v3187 = vpop.f32.mrf.mxu0
      %v3188 = vpop.f32.mrf.mxu0
      %v3189 = vadd.f32 0.0, %v3188
      %v3190 = vpop.f32.mrf.mxu0
      %3191 = vmatprep.mubr.bf16.mxu0 0
      %3192 = vmatmul.mubr.bf16.gmra.mxu0 %v822
      %v3193 = vpop.f32.mrf.mxu0
      %v3194 = vadd.f32 0.0, %v3193
      %v3195 = vpop.f32.mrf.mxu0
      %v3196 = vpop.f32.mrf.mxu0
      %v3197 = vadd.f32 0.0, %v3196
      %v3198 = vpop.f32.mrf.mxu0
      %3199 = vmatprep.mubr.bf16.mxu0 0
      %3200 = vmatmul.mubr.bf16.gmra.mxu0 %v825
      %v3201 = vpop.f32.mrf.mxu0
      %v3202 = vadd.f32 0.0, %v3201
      %v3203 = vpop.f32.mrf.mxu0
      %v3204 = vpop.f32.mrf.mxu0
      %v3205 = vadd.f32 0.0, %v3204
      %v3206 = vpop.f32.mrf.mxu0
      %3207 = vmatprep.mubr.bf16.mxu0 0
      %3208 = vmatmul.mubr.bf16.gmra.mxu0 %v828
      %v3209 = vpop.f32.mrf.mxu0
      %v3210 = vadd.f32 0.0, %v3209
      %v3211 = vpop.f32.mrf.mxu0
      %v3212 = vpop.f32.mrf.mxu0
      %v3213 = vadd.f32 0.0, %v3212
      %v3214 = vpop.f32.mrf.mxu0
      %3215 = vmatprep.mubr.bf16.mxu0 0
      %3216 = vmatmul.mubr.bf16.gmra.mxu0 %v831
      %v3217 = vpop.f32.mrf.mxu0
      %v3218 = vadd.f32 0.0, %v3217
      %v3219 = vpop.f32.mrf.mxu0
      %v3220 = vpop.f32.mrf.mxu0
      %v3221 = vadd.f32 0.0, %v3220
      %v3222 = vpop.f32.mrf.mxu0
      %3223 = vmatprep.mubr.bf16.mxu0 0
      %3224 = vmatmul.mubr.bf16.gmra.mxu0 %v834
      %v3225 = vpop.f32.mrf.mxu0
      %v3226 = vadd.f32 0.0, %v3225
      %v3227 = vpop.f32.mrf.mxu0
      %v3228 = vpop.f32.mrf.mxu0
      %v3229 = vadd.f32 0.0, %v3228
      %v3230 = vpop.f32.mrf.mxu0
      %3231 = vmatprep.mubr.bf16.mxu0 0
      %3232 = vmatmul.mubr.bf16.gmra.mxu0 %v837
      %v3233 = vpop.f32.mrf.mxu0
      %v3234 = vadd.f32 0.0, %v3233
      %v3235 = vpop.f32.mrf.mxu0
      %v3236 = vpop.f32.mrf.mxu0
      %v3237 = vadd.f32 0.0, %v3236
      %v3238 = vpop.f32.mrf.mxu0
      %3239 = vmatprep.mubr.bf16.mxu0 0
      %3240 = vmatmul.mubr.bf16.gmra.mxu0 %v840
      %v3241 = vpop.f32.mrf.mxu0
      %v3242 = vadd.f32 0.0, %v3241
      %v3243 = vpop.f32.mrf.mxu0
      %v3244 = vpop.f32.mrf.mxu0
      %v3245 = vadd.f32 0.0, %v3244
      %v3246 = vpop.f32.mrf.mxu0
      %3247 = vmatprep.mubr.bf16.mxu0 0
      %3248 = vmatmul.mubr.bf16.gmra.mxu0 %v843
      %v3249 = vpop.f32.mrf.mxu0
      %v3250 = vadd.f32 0.0, %v3249
      %v3251 = vpop.f32.mrf.mxu0
      %v3252 = vpop.f32.mrf.mxu0
      %v3253 = vadd.f32 0.0, %v3252
      %v3254 = vpop.f32.mrf.mxu0
      %3255 = vmatprep.mubr.bf16.mxu0 0
      %3256 = vmatmul.mubr.bf16.gmra.mxu0 %v846
      %v3257 = vpop.f32.mrf.mxu0
      %v3258 = vadd.f32 0.0, %v3257
      %v3259 = vpop.f32.mrf.mxu0
      %v3260 = vpop.f32.mrf.mxu0
      %v3261 = vadd.f32 0.0, %v3260
      %v3262 = vpop.f32.mrf.mxu0
      %3263 = vmatprep.mubr.bf16.mxu0 0
      %3264 = vmatmul.mubr.bf16.gmra.mxu0 %v849
      %v3265 = vpop.f32.mrf.mxu0
      %v3266 = vadd.f32 0.0, %v3265
      %v3267 = vpop.f32.mrf.mxu0
      %v3268 = vpop.f32.mrf.mxu0
      %v3269 = vadd.f32 0.0, %v3268
      %v3270 = vpop.f32.mrf.mxu0
      %3271 = vmatprep.mubr.bf16.mxu0 0
      %3272 = vmatmul.mubr.bf16.gmra.mxu0 %v852
      %v3273 = vpop.f32.mrf.mxu0
      %v3274 = vadd.f32 0.0, %v3273
      %v3275 = vpop.f32.mrf.mxu0
      %v3276 = vpop.f32.mrf.mxu0
      %v3277 = vadd.f32 0.0, %v3276
      %v3278 = vpop.f32.mrf.mxu0
      %3279 = vdwg.mxu0
      %v3284 = vunpack.c.l.b16 %v3084
      %v3285 = vunpack.c.l.b16 %v3085
      %v3286 = vunpack.c.l.b16 %v3086
      %v3287 = vunpack.c.l.b16 %v3087
      %v3288 = vpack.c.b16 %v3285, %v3284
      %v3289 = vpack.c.b16 %v3287, %v3286
      %v3293 = vsel %vm808, %v3068, 0
      %v3296 = vsel %vm808, %v3069, 0
      %v3299 = vsel %vm808, %v3070, 0
      %v3302 = vsel %vm808, %v3071, 0
      %v3305 = vsel %vm808, %v3072, 0
      %v3308 = vsel %vm808, %v3073, 0
      %v3311 = vsel %vm808, %v3074, 0
      %v3314 = vsel %vm808, %v3075, 0
      %v3317 = vsel %vm808, %v3076, 0
      %v3320 = vsel %vm808, %v3077, 0
      %v3323 = vsel %vm808, %v3078, 0
      %v3326 = vsel %vm808, %v3079, 0
      %v3329 = vsel %vm808, %v3080, 0
      %v3332 = vsel %vm808, %v3081, 0
      %v3335 = vsel %vm808, %v3082, 0
      %v3338 = vsel %vm808, %v3083, 0
      %3340 = vmatprep.subr.bf16.mxu0 0
      %3341 = vmatpush1.bf16.msra.mxu0 0
      %3342 = vmatprep.subr.bf16.mxu0 0
      %3343 = vmatpush1.bf16.msra.mxu0 0
      %3344 = vmatprep.subr.bf16.mxu0 0
      %3345 = vmatpush1.bf16.msra.mxu0 0
      %3346 = vmatprep.subr.bf16.mxu0 0
      %3347 = vmatpush1.bf16.msra.mxu0 0
      %3348 = vmatprep.subr.bf16.mxu0 0
      %3349 = vmatpush1.bf16.msra.mxu0 0
      %3350 = vmatprep.subr.bf16.mxu0 0
      %3351 = vmatpush1.bf16.msra.mxu0 0
      %3352 = vmatprep.subr.bf16.mxu0 0
      %3353 = vmatpush1.bf16.msra.mxu0 %v3289
      %3354 = vmatprep.subr.bf16.mxu0 0
      %3355 = vmatpush1.bf16.msra.mxu0 %v3288
      %3356 = vmatprep.subr.bf16.mxu0 0
      %3357 = vmatpush2.bf16.msra.mxu0 0
      %3358 = vmatprep.subr.bf16.mxu0 0
      %3359 = vmatpush2.bf16.msra.mxu0 0
      %3360 = vmatprep.subr.bf16.mxu0 0
      %3361 = vmatpush2.bf16.msra.mxu0 0
      %3362 = vmatprep.subr.bf16.mxu0 0
      %3363 = vmatpush2.bf16.msra.mxu0 0
      %3364 = vmatprep.subr.bf16.mxu0 0
      %3365 = vmatpush2.bf16.msra.mxu0 0
      %3366 = vmatprep.subr.bf16.mxu0 0
      %3367 = vmatpush2.bf16.msra.mxu0 0
      %3368 = vmatprep.subr.bf16.mxu0 0
      %3369 = vmatpush2.bf16.msra.mxu0 0
      %3370 = vmatprep.subr.bf16.mxu0 0
      %3371 = vmatpush2.bf16.msra.mxu0 0
      %3372 = vmatprep.mubr.bf16.mxu0 0
      %3373 = vmatmul.mubr.bf16.gmra.mxu0 %v3293
      %v3374 = vpop.f32.mrf.mxu0
      %v3375 = vadd.f32 %v3154, %v3374
      %v3376 = vpop.f32.mrf.mxu0
      %v3377 = vpop.f32.mrf.mxu0
      %v3378 = vadd.f32 %v3157, %v3377
      %v3379 = vpop.f32.mrf.mxu0
      %3380 = vmatprep.mubr.bf16.mxu0 0
      %3381 = vmatmul.mubr.bf16.gmra.mxu0 %v3296
      %v3382 = vpop.f32.mrf.mxu0
      %v3383 = vadd.f32 %v3162, %v3382
      %v3384 = vpop.f32.mrf.mxu0
      %v3385 = vpop.f32.mrf.mxu0
      %v3386 = vadd.f32 %v3165, %v3385
      %v3387 = vpop.f32.mrf.mxu0
      %3388 = vmatprep.mubr.bf16.mxu0 0
      %3389 = vmatmul.mubr.bf16.gmra.mxu0 %v3299
      %v3390 = vpop.f32.mrf.mxu0
      %v3391 = vadd.f32 %v3170, %v3390
      %v3392 = vpop.f32.mrf.mxu0
      %v3393 = vpop.f32.mrf.mxu0
      %v3394 = vadd.f32 %v3173, %v3393
      %v3395 = vpop.f32.mrf.mxu0
      %3396 = vmatprep.mubr.bf16.mxu0 0
      %3397 = vmatmul.mubr.bf16.gmra.mxu0 %v3302
      %v3398 = vpop.f32.mrf.mxu0
      %v3399 = vadd.f32 %v3178, %v3398
      %v3400 = vpop.f32.mrf.mxu0
      %v3401 = vpop.f32.mrf.mxu0
      %v3402 = vadd.f32 %v3181, %v3401
      %v3403 = vpop.f32.mrf.mxu0
      %3404 = vmatprep.mubr.bf16.mxu0 0
      %3405 = vmatmul.mubr.bf16.gmra.mxu0 %v3305
      %v3406 = vpop.f32.mrf.mxu0
      %v3407 = vadd.f32 %v3186, %v3406
      %v3408 = vpop.f32.mrf.mxu0
      %v3409 = vpop.f32.mrf.mxu0
      %v3410 = vadd.f32 %v3189, %v3409
      %v3411 = vpop.f32.mrf.mxu0
      %3412 = vmatprep.mubr.bf16.mxu0 0
      %3413 = vmatmul.mubr.bf16.gmra.mxu0 %v3308
      %v3414 = vpop.f32.mrf.mxu0
      %v3415 = vadd.f32 %v3194, %v3414
      %v3416 = vpop.f32.mrf.mxu0
      %v3417 = vpop.f32.mrf.mxu0
      %v3418 = vadd.f32 %v3197, %v3417
      %v3419 = vpop.f32.mrf.mxu0
      %3420 = vmatprep.mubr.bf16.mxu0 0
      %3421 = vmatmul.mubr.bf16.gmra.mxu0 %v3311
      %v3422 = vpop.f32.mrf.mxu0
      %v3423 = vadd.f32 %v3202, %v3422
      %v3424 = vpop.f32.mrf.mxu0
      %v3425 = vpop.f32.mrf.mxu0
      %v3426 = vadd.f32 %v3205, %v3425
      %v3427 = vpop.f32.mrf.mxu0
      %3428 = vmatprep.mubr.bf16.mxu0 0
      %3429 = vmatmul.mubr.bf16.gmra.mxu0 %v3314
      %v3430 = vpop.f32.mrf.mxu0
      %v3431 = vadd.f32 %v3210, %v3430
      %v3432 = vpop.f32.mrf.mxu0
      %v3433 = vpop.f32.mrf.mxu0
      %v3434 = vadd.f32 %v3213, %v3433
      %v3435 = vpop.f32.mrf.mxu0
      %3436 = vmatprep.mubr.bf16.mxu0 0
      %3437 = vmatmul.mubr.bf16.gmra.mxu0 %v3317
      %v3438 = vpop.f32.mrf.mxu0
      %v3439 = vadd.f32 %v3218, %v3438
      %v3440 = vpop.f32.mrf.mxu0
      %v3441 = vpop.f32.mrf.mxu0
      %v3442 = vadd.f32 %v3221, %v3441
      %v3443 = vpop.f32.mrf.mxu0
      %3444 = vmatprep.mubr.bf16.mxu0 0
      %3445 = vmatmul.mubr.bf16.gmra.mxu0 %v3320
      %v3446 = vpop.f32.mrf.mxu0
      %v3447 = vadd.f32 %v3226, %v3446
      %v3448 = vpop.f32.mrf.mxu0
      %v3449 = vpop.f32.mrf.mxu0
      %v3450 = vadd.f32 %v3229, %v3449
      %v3451 = vpop.f32.mrf.mxu0
      %3452 = vmatprep.mubr.bf16.mxu0 0
      %3453 = vmatmul.mubr.bf16.gmra.mxu0 %v3323
      %v3454 = vpop.f32.mrf.mxu0
      %v3455 = vadd.f32 %v3234, %v3454
      %v3456 = vpop.f32.mrf.mxu0
      %v3457 = vpop.f32.mrf.mxu0
      %v3458 = vadd.f32 %v3237, %v3457
      %v3459 = vpop.f32.mrf.mxu0
      %3460 = vmatprep.mubr.bf16.mxu0 0
      %3461 = vmatmul.mubr.bf16.gmra.mxu0 %v3326
      %v3462 = vpop.f32.mrf.mxu0
      %v3463 = vadd.f32 %v3242, %v3462
      %v3464 = vpop.f32.mrf.mxu0
      %v3465 = vpop.f32.mrf.mxu0
      %v3466 = vadd.f32 %v3245, %v3465
      %v3467 = vpop.f32.mrf.mxu0
      %3468 = vmatprep.mubr.bf16.mxu0 0
      %3469 = vmatmul.mubr.bf16.gmra.mxu0 %v3329
      %v3470 = vpop.f32.mrf.mxu0
      %v3471 = vadd.f32 %v3250, %v3470
      %v3472 = vpop.f32.mrf.mxu0
      %v3473 = vpop.f32.mrf.mxu0
      %v3474 = vadd.f32 %v3253, %v3473
      %v3475 = vpop.f32.mrf.mxu0
      %3476 = vmatprep.mubr.bf16.mxu0 0
      %3477 = vmatmul.mubr.bf16.gmra.mxu0 %v3332
      %v3478 = vpop.f32.mrf.mxu0
      %v3479 = vadd.f32 %v3258, %v3478
      %v3480 = vpop.f32.mrf.mxu0
      %v3481 = vpop.f32.mrf.mxu0
      %v3482 = vadd.f32 %v3261, %v3481
      %v3483 = vpop.f32.mrf.mxu0
      %3484 = vmatprep.mubr.bf16.mxu0 0
      %3485 = vmatmul.mubr.bf16.gmra.mxu0 %v3335
      %v3486 = vpop.f32.mrf.mxu0
      %v3487 = vadd.f32 %v3266, %v3486
      %v3488 = vpop.f32.mrf.mxu0
      %v3489 = vpop.f32.mrf.mxu0
      %v3490 = vadd.f32 %v3269, %v3489
      %v3491 = vpop.f32.mrf.mxu0
      %3492 = vmatprep.mubr.bf16.mxu0 0
      %3493 = vmatmul.mubr.bf16.gmra.mxu0 %v3338
      %v3494 = vpop.f32.mrf.mxu0
      %v3495 = vadd.f32 %v3274, %v3494
      %v3496 = vpop.f32.mrf.mxu0
      %v3497 = vpop.f32.mrf.mxu0
      %v3498 = vadd.f32 %v3277, %v3497
      %v3499 = vpop.f32.mrf.mxu0
      %3500 = vdwg.mxu0
      %vm3501 = vcmask 1043456
      %v3502 = vrot.slane %v421, 4
      %v3503 = vrot.slane %v422, 4
      %v3504 = vsel %vm3501, %v3502, %v3503
      %v3505 = vrot.slane %v423, 4
      %v3506 = vsel %vm3501, %v3503, %v3505
      %v3507 = vrot.slane %v424, 4
      %v3508 = vrot.slane %v425, 4
      %v3509 = vsel %vm3501, %v3507, %v3508
      %v3510 = vrot.slane %v426, 4
      %v3511 = vsel %vm3501, %v3508, %v3510
      %v3512 = vrot.slane %v427, 4
      %v3513 = vrot.slane %v428, 4
      %v3514 = vsel %vm3501, %v3512, %v3513
      %v3515 = vrot.slane %v429, 4
      %v3516 = vsel %vm3501, %v3513, %v3515
      %v3517 = vrot.slane %v430, 4
      %v3518 = vrot.slane %v431, 4
      %v3519 = vsel %vm3501, %v3517, %v3518
      %v3520 = vrot.slane %v432, 4
      %v3521 = vsel %vm3501, %v3518, %v3520
      %v3522 = vrot.slane %v433, 4
      %v3523 = vrot.slane %v434, 4
      %v3524 = vsel %vm3501, %v3522, %v3523
      %v3525 = vrot.slane %v435, 4
      %v3526 = vsel %vm3501, %v3523, %v3525
      %v3527 = vrot.slane %v436, 4
      %v3528 = vrot.slane %v437, 4
      %v3529 = vsel %vm3501, %v3527, %v3528
      %v3530 = vrot.slane %v438, 4
      %v3531 = vsel %vm3501, %v3528, %v3530
      %v3532 = vrot.slane %v439, 4
      %v3533 = vrot.slane %v440, 4
      %v3534 = vsel %vm3501, %v3532, %v3533
      %v3535 = vrot.slane %v441, 4
      %v3536 = vsel %vm3501, %v3533, %v3535
      %v3537 = vrot.slane %v442, 4
      %v3538 = vrot.slane %v443, 4
      %v3539 = vsel %vm3501, %v3537, %v3538
      %v3540 = vrot.slane %v444, 4
      %v3541 = vsel %vm3501, %v3538, %v3540
      %v3542 = vrot.slane %v445, 4
      %v3543 = vrot.slane %v446, 4
      %v3544 = vsel %vm3501, %v3542, %v3543
      %v3545 = vrot.slane %v447, 4
      %v3546 = vsel %vm3501, %v3543, %v3545
      %v3547 = vrot.slane %v448, 4
      %v3548 = vrot.slane %v449, 4
      %v3549 = vsel %vm3501, %v3547, %v3548
      %v3550 = vrot.slane %v450, 4
      %v3551 = vsel %vm3501, %v3548, %v3550
      %v3552 = vrot.slane %v451, 4
      %v3553 = vrot.slane %v452, 4
      %v3554 = vsel %vm3501, %v3552, %v3553
      %v3555 = vrot.slane %v453, 4
      %v3556 = vsel %vm3501, %v3553, %v3555
      %v3557 = vrot.slane %v454, 4
      %v3558 = vrot.slane %v455, 4
      %v3559 = vsel %vm3501, %v3557, %v3558
      %v3560 = vrot.slane %v456, 4
      %v3561 = vsel %vm3501, %v3558, %v3560
      %v3562 = vrot.slane %v457, 4
      %v3563 = vrot.slane %v458, 4
      %v3564 = vsel %vm3501, %v3562, %v3563
      %v3565 = vrot.slane %v459, 4
      %v3566 = vsel %vm3501, %v3563, %v3565
      %v3567 = vrot.slane %v460, 4
      %v3568 = vrot.slane %v461, 4
      %v3569 = vsel %vm3501, %v3567, %v3568
      %v3570 = vrot.slane %v462, 4
      %v3571 = vsel %vm3501, %v3568, %v3570
      %v3572 = vrot.slane %v463, 4
      %v3573 = vrot.slane %v464, 4
      %v3574 = vsel %vm3501, %v3572, %v3573
      %v3575 = vrot.slane %v465, 4
      %v3576 = vsel %vm3501, %v3573, %v3575
      %v3577 = vrot.slane %v466, 4
      %v3578 = vrot.slane %v467, 4
      %v3579 = vsel %vm3501, %v3577, %v3578
      %v3580 = vrot.slane %v468, 4
      %v3581 = vsel %vm3501, %v3578, %v3580
      %v3614 = vpack.c.bf16 %v3506, %v3504
      %v3615 = vpack.c.bf16 %v3511, %v3509
      %v3616 = vpack.c.bf16 %v3516, %v3514
      %v3617 = vpack.c.bf16 %v3521, %v3519
      %v3618 = vpack.c.bf16 %v3526, %v3524
      %v3619 = vpack.c.bf16 %v3531, %v3529
      %v3620 = vpack.c.bf16 %v3536, %v3534
      %v3621 = vpack.c.bf16 %v3541, %v3539
      %v3622 = vpack.c.bf16 %v3546, %v3544
      %v3623 = vpack.c.bf16 %v3551, %v3549
      %v3624 = vpack.c.bf16 %v3556, %v3554
      %v3625 = vpack.c.bf16 %v3561, %v3559
      %v3626 = vpack.c.bf16 %v3566, %v3564
      %v3627 = vpack.c.bf16 %v3571, %v3569
      %v3628 = vpack.c.bf16 %v3576, %v3574
      %v3629 = vpack.c.bf16 %v3581, %v3579
      %s3630 = scalar_lea.vmem %s4, 32
      %v3631 = vld [vmem:[%s3630] sm:$0xf]
      %v3632 = vld [vmem:[%s3630 + $0x4] sm:$0xf]
      %v3633 = vld [vmem:[%s3630 + $0x8] sm:$0xf]
      %v3634 = vld [vmem:[%s3630 + $0xc] sm:$0xf]
      %v3639 = vunpack.c.l.b16 %v3631
      %v3640 = vunpack.c.l.b16 %v3632
      %v3641 = vunpack.c.l.b16 %v3633
      %v3642 = vunpack.c.l.b16 %v3634
      %v3643 = vpack.c.b16 %v3640, %v3639
      %v3644 = vpack.c.b16 %v3642, %v3641
      %v3648 = vsel %vm808, %v3614, 0
      %v3651 = vsel %vm808, %v3615, 0
      %v3654 = vsel %vm808, %v3616, 0
      %v3657 = vsel %vm808, %v3617, 0
      %v3660 = vsel %vm808, %v3618, 0
      %v3663 = vsel %vm808, %v3619, 0
      %v3666 = vsel %vm808, %v3620, 0
      %v3669 = vsel %vm808, %v3621, 0
      %v3672 = vsel %vm808, %v3622, 0
      %v3675 = vsel %vm808, %v3623, 0
      %v3678 = vsel %vm808, %v3624, 0
      %v3681 = vsel %vm808, %v3625, 0
      %v3684 = vsel %vm808, %v3626, 0
      %v3687 = vsel %vm808, %v3627, 0
      %v3690 = vsel %vm808, %v3628, 0
      %v3693 = vsel %vm808, %v3629, 0
      %3695 = vmatprep.subr.bf16.mxu0 0
      %3696 = vmatpush1.bf16.msra.mxu0 0
      %3697 = vmatprep.subr.bf16.mxu0 0
      %3698 = vmatpush1.bf16.msra.mxu0 0
      %3699 = vmatprep.subr.bf16.mxu0 0
      %3700 = vmatpush1.bf16.msra.mxu0 0
      %3701 = vmatprep.subr.bf16.mxu0 0
      %3702 = vmatpush1.bf16.msra.mxu0 0
      %3703 = vmatprep.subr.bf16.mxu0 0
      %3704 = vmatpush1.bf16.msra.mxu0 0
      %3705 = vmatprep.subr.bf16.mxu0 0
      %3706 = vmatpush1.bf16.msra.mxu0 0
      %3707 = vmatprep.subr.bf16.mxu0 0
      %3708 = vmatpush1.bf16.msra.mxu0 %v3644
      %3709 = vmatprep.subr.bf16.mxu0 0
      %3710 = vmatpush1.bf16.msra.mxu0 %v3643
      %3711 = vmatprep.subr.bf16.mxu0 0
      %3712 = vmatpush2.bf16.msra.mxu0 0
      %3713 = vmatprep.subr.bf16.mxu0 0
      %3714 = vmatpush2.bf16.msra.mxu0 0
      %3715 = vmatprep.subr.bf16.mxu0 0
      %3716 = vmatpush2.bf16.msra.mxu0 0
      %3717 = vmatprep.subr.bf16.mxu0 0
      %3718 = vmatpush2.bf16.msra.mxu0 0
      %3719 = vmatprep.subr.bf16.mxu0 0
      %3720 = vmatpush2.bf16.msra.mxu0 0
      %3721 = vmatprep.subr.bf16.mxu0 0
      %3722 = vmatpush2.bf16.msra.mxu0 0
      %3723 = vmatprep.subr.bf16.mxu0 0
      %3724 = vmatpush2.bf16.msra.mxu0 0
      %3725 = vmatprep.subr.bf16.mxu0 0
      %3726 = vmatpush2.bf16.msra.mxu0 0
      %3727 = vmatprep.mubr.bf16.mxu0 0
      %3728 = vmatmul.mubr.bf16.gmra.mxu0 %v3648
      %v3729 = vpop.f32.mrf.mxu0
      %v3730 = vadd.f32 0.0, %v3729
      %v3731 = vpop.f32.mrf.mxu0
      %v3732 = vpop.f32.mrf.mxu0
      %v3733 = vadd.f32 0.0, %v3732
      %v3734 = vpop.f32.mrf.mxu0
      %3735 = vmatprep.mubr.bf16.mxu0 0
      %3736 = vmatmul.mubr.bf16.gmra.mxu0 %v3651
      %v3737 = vpop.f32.mrf.mxu0
      %v3738 = vadd.f32 0.0, %v3737
      %v3739 = vpop.f32.mrf.mxu0
      %v3740 = vpop.f32.mrf.mxu0
      %v3741 = vadd.f32 0.0, %v3740
      %v3742 = vpop.f32.mrf.mxu0
      %3743 = vmatprep.mubr.bf16.mxu0 0
      %3744 = vmatmul.mubr.bf16.gmra.mxu0 %v3654
      %v3745 = vpop.f32.mrf.mxu0
      %v3746 = vadd.f32 0.0, %v3745
      %v3747 = vpop.f32.mrf.mxu0
      %v3748 = vpop.f32.mrf.mxu0
      %v3749 = vadd.f32 0.0, %v3748
      %v3750 = vpop.f32.mrf.mxu0
      %3751 = vmatprep.mubr.bf16.mxu0 0
      %3752 = vmatmul.mubr.bf16.gmra.mxu0 %v3657
      %v3753 = vpop.f32.mrf.mxu0
      %v3754 = vadd.f32 0.0, %v3753
      %v3755 = vpop.f32.mrf.mxu0
      %v3756 = vpop.f32.mrf.mxu0
      %v3757 = vadd.f32 0.0, %v3756
      %v3758 = vpop.f32.mrf.mxu0
      %3759 = vmatprep.mubr.bf16.mxu0 0
      %3760 = vmatmul.mubr.bf16.gmra.mxu0 %v3660
      %v3761 = vpop.f32.mrf.mxu0
      %v3762 = vadd.f32 0.0, %v3761
      %v3763 = vpop.f32.mrf.mxu0
      %v3764 = vpop.f32.mrf.mxu0
      %v3765 = vadd.f32 0.0, %v3764
      %v3766 = vpop.f32.mrf.mxu0
      %3767 = vmatprep.mubr.bf16.mxu0 0
      %3768 = vmatmul.mubr.bf16.gmra.mxu0 %v3663
      %v3769 = vpop.f32.mrf.mxu0
      %v3770 = vadd.f32 0.0, %v3769
      %v3771 = vpop.f32.mrf.mxu0
      %v3772 = vpop.f32.mrf.mxu0
      %v3773 = vadd.f32 0.0, %v3772
      %v3774 = vpop.f32.mrf.mxu0
      %3775 = vmatprep.mubr.bf16.mxu0 0
      %3776 = vmatmul.mubr.bf16.gmra.mxu0 %v3666
      %v3777 = vpop.f32.mrf.mxu0
      %v3778 = vadd.f32 0.0, %v3777
      %v3779 = vpop.f32.mrf.mxu0
      %v3780 = vpop.f32.mrf.mxu0
      %v3781 = vadd.f32 0.0, %v3780
      %v3782 = vpop.f32.mrf.mxu0
      %3783 = vmatprep.mubr.bf16.mxu0 0
      %3784 = vmatmul.mubr.bf16.gmra.mxu0 %v3669
      %v3785 = vpop.f32.mrf.mxu0
      %v3786 = vadd.f32 0.0, %v3785
      %v3787 = vpop.f32.mrf.mxu0
      %v3788 = vpop.f32.mrf.mxu0
      %v3789 = vadd.f32 0.0, %v3788
      %v3790 = vpop.f32.mrf.mxu0
      %3791 = vmatprep.mubr.bf16.mxu0 0
      %3792 = vmatmul.mubr.bf16.gmra.mxu0 %v3672
      %v3793 = vpop.f32.mrf.mxu0
      %v3794 = vadd.f32 0.0, %v3793
      %v3795 = vpop.f32.mrf.mxu0
      %v3796 = vpop.f32.mrf.mxu0
      %v3797 = vadd.f32 0.0, %v3796
      %v3798 = vpop.f32.mrf.mxu0
      %3799 = vmatprep.mubr.bf16.mxu0 0
      %3800 = vmatmul.mubr.bf16.gmra.mxu0 %v3675
      %v3801 = vpop.f32.mrf.mxu0
      %v3802 = vadd.f32 0.0, %v3801
      %v3803 = vpop.f32.mrf.mxu0
      %v3804 = vpop.f32.mrf.mxu0
      %v3805 = vadd.f32 0.0, %v3804
      %v3806 = vpop.f32.mrf.mxu0
      %3807 = vmatprep.mubr.bf16.mxu0 0
      %3808 = vmatmul.mubr.bf16.gmra.mxu0 %v3678
      %v3809 = vpop.f32.mrf.mxu0
      %v3810 = vadd.f32 0.0, %v3809
      %v3811 = vpop.f32.mrf.mxu0
      %v3812 = vpop.f32.mrf.mxu0
      %v3813 = vadd.f32 0.0, %v3812
      %v3814 = vpop.f32.mrf.mxu0
      %3815 = vmatprep.mubr.bf16.mxu0 0
      %3816 = vmatmul.mubr.bf16.gmra.mxu0 %v3681
      %v3817 = vpop.f32.mrf.mxu0
      %v3818 = vadd.f32 0.0, %v3817
      %v3819 = vpop.f32.mrf.mxu0
      %v3820 = vpop.f32.mrf.mxu0
      %v3821 = vadd.f32 0.0, %v3820
      %v3822 = vpop.f32.mrf.mxu0
      %3823 = vmatprep.mubr.bf16.mxu0 0
      %3824 = vmatmul.mubr.bf16.gmra.mxu0 %v3684
      %v3825 = vpop.f32.mrf.mxu0
      %v3826 = vadd.f32 0.0, %v3825
      %v3827 = vpop.f32.mrf.mxu0
      %v3828 = vpop.f32.mrf.mxu0
      %v3829 = vadd.f32 0.0, %v3828
      %v3830 = vpop.f32.mrf.mxu0
      %3831 = vmatprep.mubr.bf16.mxu0 0
      %3832 = vmatmul.mubr.bf16.gmra.mxu0 %v3687
      %v3833 = vpop.f32.mrf.mxu0
      %v3834 = vadd.f32 0.0, %v3833
      %v3835 = vpop.f32.mrf.mxu0
      %v3836 = vpop.f32.mrf.mxu0
      %v3837 = vadd.f32 0.0, %v3836
      %v3838 = vpop.f32.mrf.mxu0
      %3839 = vmatprep.mubr.bf16.mxu0 0
      %3840 = vmatmul.mubr.bf16.gmra.mxu0 %v3690
      %v3841 = vpop.f32.mrf.mxu0
      %v3842 = vadd.f32 0.0, %v3841
      %v3843 = vpop.f32.mrf.mxu0
      %v3844 = vpop.f32.mrf.mxu0
      %v3845 = vadd.f32 0.0, %v3844
      %v3846 = vpop.f32.mrf.mxu0
      %3847 = vmatprep.mubr.bf16.mxu0 0
      %3848 = vmatmul.mubr.bf16.gmra.mxu0 %v3693
      %v3849 = vpop.f32.mrf.mxu0
      %v3850 = vadd.f32 0.0, %v3849
      %v3851 = vpop.f32.mrf.mxu0
      %v3852 = vpop.f32.mrf.mxu0
      %v3853 = vadd.f32 0.0, %v3852
      %v3854 = vpop.f32.mrf.mxu0
      %3855 = vdwg.mxu0
      %v3856 = vadd.f32 %v3375, %v3730
      %v3857 = vadd.f32 %v3378, %v3733
      %v3858 = vadd.f32 %v3383, %v3738
      %v3859 = vadd.f32 %v3386, %v3741
      %v3860 = vadd.f32 %v3391, %v3746
      %v3861 = vadd.f32 %v3394, %v3749
      %v3862 = vadd.f32 %v3399, %v3754
      %v3863 = vadd.f32 %v3402, %v3757
      %v3864 = vadd.f32 %v3407, %v3762
      %v3865 = vadd.f32 %v3410, %v3765
      %v3866 = vadd.f32 %v3415, %v3770
      %v3867 = vadd.f32 %v3418, %v3773
      %v3868 = vadd.f32 %v3423, %v3778
      %v3869 = vadd.f32 %v3426, %v3781
      %v3870 = vadd.f32 %v3431, %v3786
      %v3871 = vadd.f32 %v3434, %v3789
      %v3872 = vadd.f32 %v3439, %v3794
      %v3873 = vadd.f32 %v3442, %v3797
      %v3874 = vadd.f32 %v3447, %v3802
      %v3875 = vadd.f32 %v3450, %v3805
      %v3876 = vadd.f32 %v3455, %v3810
      %v3877 = vadd.f32 %v3458, %v3813
      %v3878 = vadd.f32 %v3463, %v3818
      %v3879 = vadd.f32 %v3466, %v3821
      %v3880 = vadd.f32 %v3471, %v3826
      %v3881 = vadd.f32 %v3474, %v3829
      %v3882 = vadd.f32 %v3479, %v3834
      %v3883 = vadd.f32 %v3482, %v3837
      %v3884 = vadd.f32 %v3487, %v3842
      %v3885 = vadd.f32 %v3490, %v3845
      %v3886 = vadd.f32 %v3495, %v3850
      %v3887 = vadd.f32 %v3498, %v3853
      %v3888 = vpack.c.bf16 %v470, %v469
      %v3889 = vpack.c.bf16 %v473, %v472
      %s3890 = scalar_lea.vmem %s4, 48
      %v3891 = vld [vmem:[%s3890] sm:$0xf]
      %v3892 = vld [vmem:[%s3890 + $0x4] sm:$0xf]
      %v3893 = vld [vmem:[%s3890 + $0x8] sm:$0xf]
      %v3894 = vld [vmem:[%s3890 + $0xc] sm:$0xf]
      %v3899 = vunpack.c.l.b16 %v3891
      %v3900 = vunpack.c.l.b16 %v3892
      %v3901 = vunpack.c.l.b16 %v3893
      %v3902 = vunpack.c.l.b16 %v3894
      %v3903 = vpack.c.b16 %v3900, %v3899
      %v3904 = vpack.c.b16 %v3902, %v3901
      %v3908 = vsel %vm808, %v3888, 0
      %v3911 = vsel %vm808, %v3889, 0
      %3913 = vmatprep.subr.bf16.mxu0 0
      %3914 = vmatpush1.bf16.msra.mxu0 0
      %3915 = vmatprep.subr.bf16.mxu0 0
      %3916 = vmatpush1.bf16.msra.mxu0 0
      %3917 = vmatprep.subr.bf16.mxu0 0
      %3918 = vmatpush1.bf16.msra.mxu0 0
      %3919 = vmatprep.subr.bf16.mxu0 0
      %3920 = vmatpush1.bf16.msra.mxu0 0
      %3921 = vmatprep.subr.bf16.mxu0 0
      %3922 = vmatpush1.bf16.msra.mxu0 0
      %3923 = vmatprep.subr.bf16.mxu0 0
      %3924 = vmatpush1.bf16.msra.mxu0 0
      %3925 = vmatprep.subr.bf16.mxu0 0
      %3926 = vmatpush1.bf16.msra.mxu0 %v3904
      %3927 = vmatprep.subr.bf16.mxu0 0
      %3928 = vmatpush1.bf16.msra.mxu0 %v3903
      %3929 = vmatprep.subr.bf16.mxu0 0
      %3930 = vmatpush2.bf16.msra.mxu0 0
      %3931 = vmatprep.subr.bf16.mxu0 0
      %3932 = vmatpush2.bf16.msra.mxu0 0
      %3933 = vmatprep.subr.bf16.mxu0 0
      %3934 = vmatpush2.bf16.msra.mxu0 0
      %3935 = vmatprep.subr.bf16.mxu0 0
      %3936 = vmatpush2.bf16.msra.mxu0 0
      %3937 = vmatprep.subr.bf16.mxu0 0
      %3938 = vmatpush2.bf16.msra.mxu0 0
      %3939 = vmatprep.subr.bf16.mxu0 0
      %3940 = vmatpush2.bf16.msra.mxu0 0
      %3941 = vmatprep.subr.bf16.mxu0 0
      %3942 = vmatpush2.bf16.msra.mxu0 0
      %3943 = vmatprep.subr.bf16.mxu0 0
      %3944 = vmatpush2.bf16.msra.mxu0 0
      %3945 = vmatprep.mubr.bf16.mxu0 0
      %3946 = vmatmul.mubr.bf16.gmra.mxu0 %v3299
      %v3947 = vpop.f32.mrf.mxu0
      %v3948 = vadd.f32 0.0, %v3947
      %v3949 = vpop.f32.mrf.mxu0
      %v3950 = vpop.f32.mrf.mxu0
      %v3951 = vadd.f32 0.0, %v3950
      %v3952 = vpop.f32.mrf.mxu0
      %3953 = vmatprep.mubr.bf16.mxu0 0
      %3954 = vmatmul.mubr.bf16.gmra.mxu0 %v3302
      %v3955 = vpop.f32.mrf.mxu0
      %v3956 = vadd.f32 0.0, %v3955
      %v3957 = vpop.f32.mrf.mxu0
      %v3958 = vpop.f32.mrf.mxu0
      %v3959 = vadd.f32 0.0, %v3958
      %v3960 = vpop.f32.mrf.mxu0
      %3961 = vmatprep.mubr.bf16.mxu0 0
      %3962 = vmatmul.mubr.bf16.gmra.mxu0 %v3305
      %v3963 = vpop.f32.mrf.mxu0
      %v3964 = vadd.f32 0.0, %v3963
      %v3965 = vpop.f32.mrf.mxu0
      %v3966 = vpop.f32.mrf.mxu0
      %v3967 = vadd.f32 0.0, %v3966
      %v3968 = vpop.f32.mrf.mxu0
      %3969 = vmatprep.mubr.bf16.mxu0 0
      %3970 = vmatmul.mubr.bf16.gmra.mxu0 %v3308
      %v3971 = vpop.f32.mrf.mxu0
      %v3972 = vadd.f32 0.0, %v3971
      %v3973 = vpop.f32.mrf.mxu0
      %v3974 = vpop.f32.mrf.mxu0
      %v3975 = vadd.f32 0.0, %v3974
      %v3976 = vpop.f32.mrf.mxu0
      %3977 = vmatprep.mubr.bf16.mxu0 0
      %3978 = vmatmul.mubr.bf16.gmra.mxu0 %v3311
      %v3979 = vpop.f32.mrf.mxu0
      %v3980 = vadd.f32 0.0, %v3979
      %v3981 = vpop.f32.mrf.mxu0
      %v3982 = vpop.f32.mrf.mxu0
      %v3983 = vadd.f32 0.0, %v3982
      %v3984 = vpop.f32.mrf.mxu0
      %3985 = vmatprep.mubr.bf16.mxu0 0
      %3986 = vmatmul.mubr.bf16.gmra.mxu0 %v3314
      %v3987 = vpop.f32.mrf.mxu0
      %v3988 = vadd.f32 0.0, %v3987
      %v3989 = vpop.f32.mrf.mxu0
      %v3990 = vpop.f32.mrf.mxu0
      %v3991 = vadd.f32 0.0, %v3990
      %v3992 = vpop.f32.mrf.mxu0
      %3993 = vmatprep.mubr.bf16.mxu0 0
      %3994 = vmatmul.mubr.bf16.gmra.mxu0 %v3317
      %v3995 = vpop.f32.mrf.mxu0
      %v3996 = vadd.f32 0.0, %v3995
      %v3997 = vpop.f32.mrf.mxu0
      %v3998 = vpop.f32.mrf.mxu0
      %v3999 = vadd.f32 0.0, %v3998
      %v4000 = vpop.f32.mrf.mxu0
      %4001 = vmatprep.mubr.bf16.mxu0 0
      %4002 = vmatmul.mubr.bf16.gmra.mxu0 %v3320
      %v4003 = vpop.f32.mrf.mxu0
      %v4004 = vadd.f32 0.0, %v4003
      %v4005 = vpop.f32.mrf.mxu0
      %v4006 = vpop.f32.mrf.mxu0
      %v4007 = vadd.f32 0.0, %v4006
      %v4008 = vpop.f32.mrf.mxu0
      %4009 = vmatprep.mubr.bf16.mxu0 0
      %4010 = vmatmul.mubr.bf16.gmra.mxu0 %v3323
      %v4011 = vpop.f32.mrf.mxu0
      %v4012 = vadd.f32 0.0, %v4011
      %v4013 = vpop.f32.mrf.mxu0
      %v4014 = vpop.f32.mrf.mxu0
      %v4015 = vadd.f32 0.0, %v4014
      %v4016 = vpop.f32.mrf.mxu0
      %4017 = vmatprep.mubr.bf16.mxu0 0
      %4018 = vmatmul.mubr.bf16.gmra.mxu0 %v3326
      %v4019 = vpop.f32.mrf.mxu0
      %v4020 = vadd.f32 0.0, %v4019
      %v4021 = vpop.f32.mrf.mxu0
      %v4022 = vpop.f32.mrf.mxu0
      %v4023 = vadd.f32 0.0, %v4022
      %v4024 = vpop.f32.mrf.mxu0
      %4025 = vmatprep.mubr.bf16.mxu0 0
      %4026 = vmatmul.mubr.bf16.gmra.mxu0 %v3329
      %v4027 = vpop.f32.mrf.mxu0
      %v4028 = vadd.f32 0.0, %v4027
      %v4029 = vpop.f32.mrf.mxu0
      %v4030 = vpop.f32.mrf.mxu0
      %v4031 = vadd.f32 0.0, %v4030
      %v4032 = vpop.f32.mrf.mxu0
      %4033 = vmatprep.mubr.bf16.mxu0 0
      %4034 = vmatmul.mubr.bf16.gmra.mxu0 %v3332
      %v4035 = vpop.f32.mrf.mxu0
      %v4036 = vadd.f32 0.0, %v4035
      %v4037 = vpop.f32.mrf.mxu0
      %v4038 = vpop.f32.mrf.mxu0
      %v4039 = vadd.f32 0.0, %v4038
      %v4040 = vpop.f32.mrf.mxu0
      %4041 = vmatprep.mubr.bf16.mxu0 0
      %4042 = vmatmul.mubr.bf16.gmra.mxu0 %v3335
      %v4043 = vpop.f32.mrf.mxu0
      %v4044 = vadd.f32 0.0, %v4043
      %v4045 = vpop.f32.mrf.mxu0
      %v4046 = vpop.f32.mrf.mxu0
      %v4047 = vadd.f32 0.0, %v4046
      %v4048 = vpop.f32.mrf.mxu0
      %4049 = vmatprep.mubr.bf16.mxu0 0
      %4050 = vmatmul.mubr.bf16.gmra.mxu0 %v3338
      %v4051 = vpop.f32.mrf.mxu0
      %v4052 = vadd.f32 0.0, %v4051
      %v4053 = vpop.f32.mrf.mxu0
      %v4054 = vpop.f32.mrf.mxu0
      %v4055 = vadd.f32 0.0, %v4054
      %v4056 = vpop.f32.mrf.mxu0
      %4057 = vmatprep.mubr.bf16.mxu0 0
      %4058 = vmatmul.mubr.bf16.gmra.mxu0 %v3908
      %v4059 = vpop.f32.mrf.mxu0
      %v4060 = vadd.f32 0.0, %v4059
      %v4061 = vpop.f32.mrf.mxu0
      %v4062 = vpop.f32.mrf.mxu0
      %v4063 = vadd.f32 0.0, %v4062
      %v4064 = vpop.f32.mrf.mxu0
      %4065 = vmatprep.mubr.bf16.mxu0 0
      %4066 = vmatmul.mubr.bf16.gmra.mxu0 %v3911
      %v4067 = vpop.f32.mrf.mxu0
      %v4068 = vadd.f32 0.0, %v4067
      %v4069 = vpop.f32.mrf.mxu0
      %v4070 = vpop.f32.mrf.mxu0
      %v4071 = vadd.f32 0.0, %v4070
      %v4072 = vpop.f32.mrf.mxu0
      %4073 = vdwg.mxu0
      %v4074 = vadd.f32 %v3856, %v3948
      %v4075 = vadd.f32 %v3857, %v3951
      %v4076 = vadd.f32 %v3858, %v3956
      %v4077 = vadd.f32 %v3859, %v3959
      %v4078 = vadd.f32 %v3860, %v3964
      %v4079 = vadd.f32 %v3861, %v3967
      %v4080 = vadd.f32 %v3862, %v3972
      %v4081 = vadd.f32 %v3863, %v3975
      %v4082 = vadd.f32 %v3864, %v3980
      %v4083 = vadd.f32 %v3865, %v3983
      %v4084 = vadd.f32 %v3866, %v3988
      %v4085 = vadd.f32 %v3867, %v3991
      %v4086 = vadd.f32 %v3868, %v3996
      %v4087 = vadd.f32 %v3869, %v3999
      %v4088 = vadd.f32 %v3870, %v4004
      %v4089 = vadd.f32 %v3871, %v4007
      %v4090 = vadd.f32 %v3872, %v4012
      %v4091 = vadd.f32 %v3873, %v4015
      %v4092 = vadd.f32 %v3874, %v4020
      %v4093 = vadd.f32 %v3875, %v4023
      %v4094 = vadd.f32 %v3876, %v4028
      %v4095 = vadd.f32 %v3877, %v4031
      %v4096 = vadd.f32 %v3878, %v4036
      %v4097 = vadd.f32 %v3879, %v4039
      %v4098 = vadd.f32 %v3880, %v4044
      %v4099 = vadd.f32 %v3881, %v4047
      %v4100 = vadd.f32 %v3882, %v4052
      %v4101 = vadd.f32 %v3883, %v4055
      %v4102 = vadd.f32 %v3884, %v4060
      %v4103 = vadd.f32 %v3885, %v4063
      %v4104 = vadd.f32 %v3886, %v4068
      %v4105 = vadd.f32 %v3887, %v4071
      %s4106 = scalar_lea.vmem %s4, 64
      %v4107 = vld [vmem:[%s4106] sm:$0xf]
      %v4108 = vld [vmem:[%s4106 + $0x4] sm:$0xf]
      %v4109 = vld [vmem:[%s4106 + $0x8] sm:$0xf]
      %v4110 = vld [vmem:[%s4106 + $0xc] sm:$0xf]
      %v4115 = vunpack.c.l.b16 %v4107
      %v4116 = vunpack.c.l.b16 %v4108
      %v4117 = vunpack.c.l.b16 %v4109
      %v4118 = vunpack.c.l.b16 %v4110
      %v4119 = vpack.c.b16 %v4116, %v4115
      %v4120 = vpack.c.b16 %v4118, %v4117
      %4123 = vmatprep.subr.bf16.mxu0 0
      %4124 = vmatpush1.bf16.msra.mxu0 0
      %4125 = vmatprep.subr.bf16.mxu0 0
      %4126 = vmatpush1.bf16.msra.mxu0 0
      %4127 = vmatprep.subr.bf16.mxu0 0
      %4128 = vmatpush1.bf16.msra.mxu0 0
      %4129 = vmatprep.subr.bf16.mxu0 0
      %4130 = vmatpush1.bf16.msra.mxu0 0
      %4131 = vmatprep.subr.bf16.mxu0 0
      %4132 = vmatpush1.bf16.msra.mxu0 0
      %4133 = vmatprep.subr.bf16.mxu0 0
      %4134 = vmatpush1.bf16.msra.mxu0 0
      %4135 = vmatprep.subr.bf16.mxu0 0
      %4136 = vmatpush1.bf16.msra.mxu0 %v4120
      %4137 = vmatprep.subr.bf16.mxu0 0
      %4138 = vmatpush1.bf16.msra.mxu0 %v4119
      %4139 = vmatprep.subr.bf16.mxu0 0
      %4140 = vmatpush2.bf16.msra.mxu0 0
      %4141 = vmatprep.subr.bf16.mxu0 0
      %4142 = vmatpush2.bf16.msra.mxu0 0
      %4143 = vmatprep.subr.bf16.mxu0 0
      %4144 = vmatpush2.bf16.msra.mxu0 0
      %4145 = vmatprep.subr.bf16.mxu0 0
      %4146 = vmatpush2.bf16.msra.mxu0 0
      %4147 = vmatprep.subr.bf16.mxu0 0
      %4148 = vmatpush2.bf16.msra.mxu0 0
      %4149 = vmatprep.subr.bf16.mxu0 0
      %4150 = vmatpush2.bf16.msra.mxu0 0
      %4151 = vmatprep.subr.bf16.mxu0 0
      %4152 = vmatpush2.bf16.msra.mxu0 0
      %4153 = vmatprep.subr.bf16.mxu0 0
      %4154 = vmatpush2.bf16.msra.mxu0 0
      %4155 = vmatprep.mubr.bf16.mxu0 0
      %4156 = vmatmul.mubr.bf16.gmra.mxu0 %v813
      %v4157 = vpop.f32.mrf.mxu0
      %v4158 = vadd.f32 0.0, %v4157
      %v4159 = vpop.f32.mrf.mxu0
      %v4160 = vpop.f32.mrf.mxu0
      %v4161 = vadd.f32 0.0, %v4160
      %v4162 = vpop.f32.mrf.mxu0
      %4163 = vmatprep.mubr.bf16.mxu0 0
      %4164 = vmatmul.mubr.bf16.gmra.mxu0 %v816
      %v4165 = vpop.f32.mrf.mxu0
      %v4166 = vadd.f32 0.0, %v4165
      %v4167 = vpop.f32.mrf.mxu0
      %v4168 = vpop.f32.mrf.mxu0
      %v4169 = vadd.f32 0.0, %v4168
      %v4170 = vpop.f32.mrf.mxu0
      %4171 = vmatprep.mubr.bf16.mxu0 0
      %4172 = vmatmul.mubr.bf16.gmra.mxu0 %v819
      %v4173 = vpop.f32.mrf.mxu0
      %v4174 = vadd.f32 0.0, %v4173
      %v4175 = vpop.f32.mrf.mxu0
      %v4176 = vpop.f32.mrf.mxu0
      %v4177 = vadd.f32 0.0, %v4176
      %v4178 = vpop.f32.mrf.mxu0
      %4179 = vmatprep.mubr.bf16.mxu0 0
      %4180 = vmatmul.mubr.bf16.gmra.mxu0 %v822
      %v4181 = vpop.f32.mrf.mxu0
      %v4182 = vadd.f32 0.0, %v4181
      %v4183 = vpop.f32.mrf.mxu0
      %v4184 = vpop.f32.mrf.mxu0
      %v4185 = vadd.f32 0.0, %v4184
      %v4186 = vpop.f32.mrf.mxu0
      %4187 = vmatprep.mubr.bf16.mxu0 0
      %4188 = vmatmul.mubr.bf16.gmra.mxu0 %v825
      %v4189 = vpop.f32.mrf.mxu0
      %v4190 = vadd.f32 0.0, %v4189
      %v4191 = vpop.f32.mrf.mxu0
      %v4192 = vpop.f32.mrf.mxu0
      %v4193 = vadd.f32 0.0, %v4192
      %v4194 = vpop.f32.mrf.mxu0
      %4195 = vmatprep.mubr.bf16.mxu0 0
      %4196 = vmatmul.mubr.bf16.gmra.mxu0 %v828
      %v4197 = vpop.f32.mrf.mxu0
      %v4198 = vadd.f32 0.0, %v4197
      %v4199 = vpop.f32.mrf.mxu0
      %v4200 = vpop.f32.mrf.mxu0
      %v4201 = vadd.f32 0.0, %v4200
      %v4202 = vpop.f32.mrf.mxu0
      %4203 = vmatprep.mubr.bf16.mxu0 0
      %4204 = vmatmul.mubr.bf16.gmra.mxu0 %v831
      %v4205 = vpop.f32.mrf.mxu0
      %v4206 = vadd.f32 0.0, %v4205
      %v4207 = vpop.f32.mrf.mxu0
      %v4208 = vpop.f32.mrf.mxu0
      %v4209 = vadd.f32 0.0, %v4208
      %v4210 = vpop.f32.mrf.mxu0
      %4211 = vmatprep.mubr.bf16.mxu0 0
      %4212 = vmatmul.mubr.bf16.gmra.mxu0 %v834
      %v4213 = vpop.f32.mrf.mxu0
      %v4214 = vadd.f32 0.0, %v4213
      %v4215 = vpop.f32.mrf.mxu0
      %v4216 = vpop.f32.mrf.mxu0
      %v4217 = vadd.f32 0.0, %v4216
      %v4218 = vpop.f32.mrf.mxu0
      %4219 = vmatprep.mubr.bf16.mxu0 0
      %4220 = vmatmul.mubr.bf16.gmra.mxu0 %v837
      %v4221 = vpop.f32.mrf.mxu0
      %v4222 = vadd.f32 0.0, %v4221
      %v4223 = vpop.f32.mrf.mxu0
      %v4224 = vpop.f32.mrf.mxu0
      %v4225 = vadd.f32 0.0, %v4224
      %v4226 = vpop.f32.mrf.mxu0
      %4227 = vmatprep.mubr.bf16.mxu0 0
      %4228 = vmatmul.mubr.bf16.gmra.mxu0 %v840
      %v4229 = vpop.f32.mrf.mxu0
      %v4230 = vadd.f32 0.0, %v4229
      %v4231 = vpop.f32.mrf.mxu0
      %v4232 = vpop.f32.mrf.mxu0
      %v4233 = vadd.f32 0.0, %v4232
      %v4234 = vpop.f32.mrf.mxu0
      %4235 = vmatprep.mubr.bf16.mxu0 0
      %4236 = vmatmul.mubr.bf16.gmra.mxu0 %v843
      %v4237 = vpop.f32.mrf.mxu0
      %v4238 = vadd.f32 0.0, %v4237
      %v4239 = vpop.f32.mrf.mxu0
      %v4240 = vpop.f32.mrf.mxu0
      %v4241 = vadd.f32 0.0, %v4240
      %v4242 = vpop.f32.mrf.mxu0
      %4243 = vmatprep.mubr.bf16.mxu0 0
      %4244 = vmatmul.mubr.bf16.gmra.mxu0 %v846
      %v4245 = vpop.f32.mrf.mxu0
      %v4246 = vadd.f32 0.0, %v4245
      %v4247 = vpop.f32.mrf.mxu0
      %v4248 = vpop.f32.mrf.mxu0
      %v4249 = vadd.f32 0.0, %v4248
      %v4250 = vpop.f32.mrf.mxu0
      %4251 = vmatprep.mubr.bf16.mxu0 0
      %4252 = vmatmul.mubr.bf16.gmra.mxu0 %v849
      %v4253 = vpop.f32.mrf.mxu0
      %v4254 = vadd.f32 0.0, %v4253
      %v4255 = vpop.f32.mrf.mxu0
      %v4256 = vpop.f32.mrf.mxu0
      %v4257 = vadd.f32 0.0, %v4256
      %v4258 = vpop.f32.mrf.mxu0
      %4259 = vmatprep.mubr.bf16.mxu0 0
      %4260 = vmatmul.mubr.bf16.gmra.mxu0 %v852
      %v4261 = vpop.f32.mrf.mxu0
      %v4262 = vadd.f32 0.0, %v4261
      %v4263 = vpop.f32.mrf.mxu0
      %v4264 = vpop.f32.mrf.mxu0
      %v4265 = vadd.f32 0.0, %v4264
      %v4266 = vpop.f32.mrf.mxu0
      %4267 = vmatprep.mubr.bf16.mxu0 0
      %4268 = vmatmul.mubr.bf16.gmra.mxu0 %v855
      %v4269 = vpop.f32.mrf.mxu0
      %v4270 = vadd.f32 0.0, %v4269
      %v4271 = vpop.f32.mrf.mxu0
      %v4272 = vpop.f32.mrf.mxu0
      %v4273 = vadd.f32 0.0, %v4272
      %v4274 = vpop.f32.mrf.mxu0
      %4275 = vmatprep.mubr.bf16.mxu0 0
      %4276 = vmatmul.mubr.bf16.gmra.mxu0 %v1876
      %v4277 = vpop.f32.mrf.mxu0
      %v4278 = vadd.f32 0.0, %v4277
      %v4279 = vpop.f32.mrf.mxu0
      %v4280 = vpop.f32.mrf.mxu0
      %v4281 = vadd.f32 0.0, %v4280
      %v4282 = vpop.f32.mrf.mxu0
      %4283 = vdwg.mxu0
      %v4284 = vadd.f32 %v4074, %v4158
      %v4285 = vadd.f32 %v4075, %v4161
      %v4286 = vadd.f32 %v4076, %v4166
      %v4287 = vadd.f32 %v4077, %v4169
      %v4288 = vadd.f32 %v4078, %v4174
      %v4289 = vadd.f32 %v4079, %v4177
      %v4290 = vadd.f32 %v4080, %v4182
      %v4291 = vadd.f32 %v4081, %v4185
      %v4292 = vadd.f32 %v4082, %v4190
      %v4293 = vadd.f32 %v4083, %v4193
      %v4294 = vadd.f32 %v4084, %v4198
      %v4295 = vadd.f32 %v4085, %v4201
      %v4296 = vadd.f32 %v4086, %v4206
      %v4297 = vadd.f32 %v4087, %v4209
      %v4298 = vadd.f32 %v4088, %v4214
      %v4299 = vadd.f32 %v4089, %v4217
      %v4300 = vadd.f32 %v4090, %v4222
      %v4301 = vadd.f32 %v4091, %v4225
      %v4302 = vadd.f32 %v4092, %v4230
      %v4303 = vadd.f32 %v4093, %v4233
      %v4304 = vadd.f32 %v4094, %v4238
      %v4305 = vadd.f32 %v4095, %v4241
      %v4306 = vadd.f32 %v4096, %v4246
      %v4307 = vadd.f32 %v4097, %v4249
      %v4308 = vadd.f32 %v4098, %v4254
      %v4309 = vadd.f32 %v4099, %v4257
      %v4310 = vadd.f32 %v4100, %v4262
      %v4311 = vadd.f32 %v4101, %v4265
      %v4312 = vadd.f32 %v4102, %v4270
      %v4313 = vadd.f32 %v4103, %v4273
      %v4314 = vadd.f32 %v4104, %v4278
      %v4315 = vadd.f32 %v4105, %v4281
      %v4316 = vrot.slane %v469, 4
      %v4317 = vrot.slane %v470, 4
      %v4318 = vsel %vm3501, %v4316, %v4317
      %v4319 = vrot.slane %v471, 4
      %v4320 = vsel %vm3501, %v4317, %v4319
      %v4321 = vrot.slane %v472, 4
      %v4322 = vrot.slane %v473, 4
      %v4323 = vsel %vm3501, %v4321, %v4322
      %v4324 = vrot.slane %v474, 4
      %v4325 = vsel %vm3501, %v4322, %v4324
      %v4330 = vpack.c.bf16 %v4320, %v4318
      %v4331 = vpack.c.bf16 %v4325, %v4323
      %s4332 = scalar_lea.vmem %s4, 80
      %v4333 = vld [vmem:[%s4332] sm:$0xf]
      %v4334 = vld [vmem:[%s4332 + $0x4] sm:$0xf]
      %v4335 = vld [vmem:[%s4332 + $0x8] sm:$0xf]
      %v4336 = vld [vmem:[%s4332 + $0xc] sm:$0xf]
      %v4341 = vunpack.c.l.b16 %v4333
      %v4342 = vunpack.c.l.b16 %v4334
      %v4343 = vunpack.c.l.b16 %v4335
      %v4344 = vunpack.c.l.b16 %v4336
      %v4345 = vpack.c.b16 %v4342, %v4341
      %v4346 = vpack.c.b16 %v4344, %v4343
      %v4350 = vsel %vm808, %v4330, 0
      %v4353 = vsel %vm808, %v4331, 0
      %4355 = vmatprep.subr.bf16.mxu0 0
      %4356 = vmatpush1.bf16.msra.mxu0 0
      %4357 = vmatprep.subr.bf16.mxu0 0
      %4358 = vmatpush1.bf16.msra.mxu0 0
      %4359 = vmatprep.subr.bf16.mxu0 0
      %4360 = vmatpush1.bf16.msra.mxu0 0
      %4361 = vmatprep.subr.bf16.mxu0 0
      %4362 = vmatpush1.bf16.msra.mxu0 0
      %4363 = vmatprep.subr.bf16.mxu0 0
      %4364 = vmatpush1.bf16.msra.mxu0 0
      %4365 = vmatprep.subr.bf16.mxu0 0
      %4366 = vmatpush1.bf16.msra.mxu0 0
      %4367 = vmatprep.subr.bf16.mxu0 0
      %4368 = vmatpush1.bf16.msra.mxu0 %v4346
      %4369 = vmatprep.subr.bf16.mxu0 0
      %4370 = vmatpush1.bf16.msra.mxu0 %v4345
      %4371 = vmatprep.subr.bf16.mxu0 0
      %4372 = vmatpush2.bf16.msra.mxu0 0
      %4373 = vmatprep.subr.bf16.mxu0 0
      %4374 = vmatpush2.bf16.msra.mxu0 0
      %4375 = vmatprep.subr.bf16.mxu0 0
      %4376 = vmatpush2.bf16.msra.mxu0 0
      %4377 = vmatprep.subr.bf16.mxu0 0
      %4378 = vmatpush2.bf16.msra.mxu0 0
      %4379 = vmatprep.subr.bf16.mxu0 0
      %4380 = vmatpush2.bf16.msra.mxu0 0
      %4381 = vmatprep.subr.bf16.mxu0 0
      %4382 = vmatpush2.bf16.msra.mxu0 0
      %4383 = vmatprep.subr.bf16.mxu0 0
      %4384 = vmatpush2.bf16.msra.mxu0 0
      %4385 = vmatprep.subr.bf16.mxu0 0
      %4386 = vmatpush2.bf16.msra.mxu0 0
      %4387 = vmatprep.mubr.bf16.mxu0 0
      %4388 = vmatmul.mubr.bf16.gmra.mxu0 %v3654
      %v4389 = vpop.f32.mrf.mxu0
      %v4390 = vadd.f32 0.0, %v4389
      %v4391 = vpop.f32.mrf.mxu0
      %v4392 = vpop.f32.mrf.mxu0
      %v4393 = vadd.f32 0.0, %v4392
      %v4394 = vpop.f32.mrf.mxu0
      %4395 = vmatprep.mubr.bf16.mxu0 0
      %4396 = vmatmul.mubr.bf16.gmra.mxu0 %v3657
      %v4397 = vpop.f32.mrf.mxu0
      %v4398 = vadd.f32 0.0, %v4397
      %v4399 = vpop.f32.mrf.mxu0
      %v4400 = vpop.f32.mrf.mxu0
      %v4401 = vadd.f32 0.0, %v4400
      %v4402 = vpop.f32.mrf.mxu0
      %4403 = vmatprep.mubr.bf16.mxu0 0
      %4404 = vmatmul.mubr.bf16.gmra.mxu0 %v3660
      %v4405 = vpop.f32.mrf.mxu0
      %v4406 = vadd.f32 0.0, %v4405
      %v4407 = vpop.f32.mrf.mxu0
      %v4408 = vpop.f32.mrf.mxu0
      %v4409 = vadd.f32 0.0, %v4408
      %v4410 = vpop.f32.mrf.mxu0
      %4411 = vmatprep.mubr.bf16.mxu0 0
      %4412 = vmatmul.mubr.bf16.gmra.mxu0 %v3663
      %v4413 = vpop.f32.mrf.mxu0
      %v4414 = vadd.f32 0.0, %v4413
      %v4415 = vpop.f32.mrf.mxu0
      %v4416 = vpop.f32.mrf.mxu0
      %v4417 = vadd.f32 0.0, %v4416
      %v4418 = vpop.f32.mrf.mxu0
      %4419 = vmatprep.mubr.bf16.mxu0 0
      %4420 = vmatmul.mubr.bf16.gmra.mxu0 %v3666
      %v4421 = vpop.f32.mrf.mxu0
      %v4422 = vadd.f32 0.0, %v4421
      %v4423 = vpop.f32.mrf.mxu0
      %v4424 = vpop.f32.mrf.mxu0
      %v4425 = vadd.f32 0.0, %v4424
      %v4426 = vpop.f32.mrf.mxu0
      %4427 = vmatprep.mubr.bf16.mxu0 0
      %4428 = vmatmul.mubr.bf16.gmra.mxu0 %v3669
      %v4429 = vpop.f32.mrf.mxu0
      %v4430 = vadd.f32 0.0, %v4429
      %v4431 = vpop.f32.mrf.mxu0
      %v4432 = vpop.f32.mrf.mxu0
      %v4433 = vadd.f32 0.0, %v4432
      %v4434 = vpop.f32.mrf.mxu0
      %4435 = vmatprep.mubr.bf16.mxu0 0
      %4436 = vmatmul.mubr.bf16.gmra.mxu0 %v3672
      %v4437 = vpop.f32.mrf.mxu0
      %v4438 = vadd.f32 0.0, %v4437
      %v4439 = vpop.f32.mrf.mxu0
      %v4440 = vpop.f32.mrf.mxu0
      %v4441 = vadd.f32 0.0, %v4440
      %v4442 = vpop.f32.mrf.mxu0
      %4443 = vmatprep.mubr.bf16.mxu0 0
      %4444 = vmatmul.mubr.bf16.gmra.mxu0 %v3675
      %v4445 = vpop.f32.mrf.mxu0
      %v4446 = vadd.f32 0.0, %v4445
      %v4447 = vpop.f32.mrf.mxu0
      %v4448 = vpop.f32.mrf.mxu0
      %v4449 = vadd.f32 0.0, %v4448
      %v4450 = vpop.f32.mrf.mxu0
      %4451 = vmatprep.mubr.bf16.mxu0 0
      %4452 = vmatmul.mubr.bf16.gmra.mxu0 %v3678
      %v4453 = vpop.f32.mrf.mxu0
      %v4454 = vadd.f32 0.0, %v4453
      %v4455 = vpop.f32.mrf.mxu0
      %v4456 = vpop.f32.mrf.mxu0
      %v4457 = vadd.f32 0.0, %v4456
      %v4458 = vpop.f32.mrf.mxu0
      %4459 = vmatprep.mubr.bf16.mxu0 0
      %4460 = vmatmul.mubr.bf16.gmra.mxu0 %v3681
      %v4461 = vpop.f32.mrf.mxu0
      %v4462 = vadd.f32 0.0, %v4461
      %v4463 = vpop.f32.mrf.mxu0
      %v4464 = vpop.f32.mrf.mxu0
      %v4465 = vadd.f32 0.0, %v4464
      %v4466 = vpop.f32.mrf.mxu0
      %4467 = vmatprep.mubr.bf16.mxu0 0
      %4468 = vmatmul.mubr.bf16.gmra.mxu0 %v3684
      %v4469 = vpop.f32.mrf.mxu0
      %v4470 = vadd.f32 0.0, %v4469
      %v4471 = vpop.f32.mrf.mxu0
      %v4472 = vpop.f32.mrf.mxu0
      %v4473 = vadd.f32 0.0, %v4472
      %v4474 = vpop.f32.mrf.mxu0
      %4475 = vmatprep.mubr.bf16.mxu0 0
      %4476 = vmatmul.mubr.bf16.gmra.mxu0 %v3687
      %v4477 = vpop.f32.mrf.mxu0
      %v4478 = vadd.f32 0.0, %v4477
      %v4479 = vpop.f32.mrf.mxu0
      %v4480 = vpop.f32.mrf.mxu0
      %v4481 = vadd.f32 0.0, %v4480
      %v4482 = vpop.f32.mrf.mxu0
      %4483 = vmatprep.mubr.bf16.mxu0 0
      %4484 = vmatmul.mubr.bf16.gmra.mxu0 %v3690
      %v4485 = vpop.f32.mrf.mxu0
      %v4486 = vadd.f32 0.0, %v4485
      %v4487 = vpop.f32.mrf.mxu0
      %v4488 = vpop.f32.mrf.mxu0
      %v4489 = vadd.f32 0.0, %v4488
      %v4490 = vpop.f32.mrf.mxu0
      %4491 = vmatprep.mubr.bf16.mxu0 0
      %4492 = vmatmul.mubr.bf16.gmra.mxu0 %v3693
      %v4493 = vpop.f32.mrf.mxu0
      %v4494 = vadd.f32 0.0, %v4493
      %v4495 = vpop.f32.mrf.mxu0
      %v4496 = vpop.f32.mrf.mxu0
      %v4497 = vadd.f32 0.0, %v4496
      %v4498 = vpop.f32.mrf.mxu0
      %4499 = vmatprep.mubr.bf16.mxu0 0
      %4500 = vmatmul.mubr.bf16.gmra.mxu0 %v4350
      %v4501 = vpop.f32.mrf.mxu0
      %v4502 = vadd.f32 0.0, %v4501
      %v4503 = vpop.f32.mrf.mxu0
      %v4504 = vpop.f32.mrf.mxu0
      %v4505 = vadd.f32 0.0, %v4504
      %v4506 = vpop.f32.mrf.mxu0
      %4507 = vmatprep.mubr.bf16.mxu0 0
      %4508 = vmatmul.mubr.bf16.gmra.mxu0 %v4353
      %v4509 = vpop.f32.mrf.mxu0
      %v4510 = vadd.f32 0.0, %v4509
      %v4511 = vpop.f32.mrf.mxu0
      %v4512 = vpop.f32.mrf.mxu0
      %v4513 = vadd.f32 0.0, %v4512
      %v4514 = vpop.f32.mrf.mxu0
      %4515 = vdwg.mxu0
      %v4516 = vadd.f32 %v4284, %v4390
      %v4517 = vadd.f32 %v4285, %v4393
      %v4518 = vadd.f32 %v4286, %v4398
      %v4519 = vadd.f32 %v4287, %v4401
      %v4520 = vadd.f32 %v4288, %v4406
      %v4521 = vadd.f32 %v4289, %v4409
      %v4522 = vadd.f32 %v4290, %v4414
      %v4523 = vadd.f32 %v4291, %v4417
      %v4524 = vadd.f32 %v4292, %v4422
      %v4525 = vadd.f32 %v4293, %v4425
      %v4526 = vadd.f32 %v4294, %v4430
      %v4527 = vadd.f32 %v4295, %v4433
      %v4528 = vadd.f32 %v4296, %v4438
      %v4529 = vadd.f32 %v4297, %v4441
      %v4530 = vadd.f32 %v4298, %v4446
      %v4531 = vadd.f32 %v4299, %v4449
      %v4532 = vadd.f32 %v4300, %v4454
      %v4533 = vadd.f32 %v4301, %v4457
      %v4534 = vadd.f32 %v4302, %v4462
      %v4535 = vadd.f32 %v4303, %v4465
      %v4536 = vadd.f32 %v4304, %v4470
      %v4537 = vadd.f32 %v4305, %v4473
      %v4538 = vadd.f32 %v4306, %v4478
      %v4539 = vadd.f32 %v4307, %v4481
      %v4540 = vadd.f32 %v4308, %v4486
      %v4541 = vadd.f32 %v4309, %v4489
      %v4542 = vadd.f32 %v4310, %v4494
      %v4543 = vadd.f32 %v4311, %v4497
      %v4544 = vadd.f32 %v4312, %v4502
      %v4545 = vadd.f32 %v4313, %v4505
      %v4546 = vadd.f32 %v4314, %v4510
      %v4547 = vadd.f32 %v4315, %v4513
      %v4548 = vpack.c.bf16 %v476, %v475
      %v4549 = vpack.c.bf16 %v479, %v478
      %s4550 = scalar_lea.vmem %s4, 96
      %v4551 = vld [vmem:[%s4550] sm:$0xf]
      %v4552 = vld [vmem:[%s4550 + $0x4] sm:$0xf]
      %v4553 = vld [vmem:[%s4550 + $0x8] sm:$0xf]
      %v4554 = vld [vmem:[%s4550 + $0xc] sm:$0xf]
      %v4559 = vunpack.c.l.b16 %v4551
      %v4560 = vunpack.c.l.b16 %v4552
      %v4561 = vunpack.c.l.b16 %v4553
      %v4562 = vunpack.c.l.b16 %v4554
      %v4563 = vpack.c.b16 %v4560, %v4559
      %v4564 = vpack.c.b16 %v4562, %v4561
      %v4568 = vsel %vm808, %v4548, 0
      %v4571 = vsel %vm808, %v4549, 0
      %4573 = vmatprep.subr.bf16.mxu0 0
      %4574 = vmatpush1.bf16.msra.mxu0 0
      %4575 = vmatprep.subr.bf16.mxu0 0
      %4576 = vmatpush1.bf16.msra.mxu0 0
      %4577 = vmatprep.subr.bf16.mxu0 0
      %4578 = vmatpush1.bf16.msra.mxu0 0
      %4579 = vmatprep.subr.bf16.mxu0 0
      %4580 = vmatpush1.bf16.msra.mxu0 0
      %4581 = vmatprep.subr.bf16.mxu0 0
      %4582 = vmatpush1.bf16.msra.mxu0 0
      %4583 = vmatprep.subr.bf16.mxu0 0
      %4584 = vmatpush1.bf16.msra.mxu0 0
      %4585 = vmatprep.subr.bf16.mxu0 0
      %4586 = vmatpush1.bf16.msra.mxu0 %v4564
      %4587 = vmatprep.subr.bf16.mxu0 0
      %4588 = vmatpush1.bf16.msra.mxu0 %v4563
      %4589 = vmatprep.subr.bf16.mxu0 0
      %4590 = vmatpush2.bf16.msra.mxu0 0
      %4591 = vmatprep.subr.bf16.mxu0 0
      %4592 = vmatpush2.bf16.msra.mxu0 0
      %4593 = vmatprep.subr.bf16.mxu0 0
      %4594 = vmatpush2.bf16.msra.mxu0 0
      %4595 = vmatprep.subr.bf16.mxu0 0
      %4596 = vmatpush2.bf16.msra.mxu0 0
      %4597 = vmatprep.subr.bf16.mxu0 0
      %4598 = vmatpush2.bf16.msra.mxu0 0
      %4599 = vmatprep.subr.bf16.mxu0 0
      %4600 = vmatpush2.bf16.msra.mxu0 0
      %4601 = vmatprep.subr.bf16.mxu0 0
      %4602 = vmatpush2.bf16.msra.mxu0 0
      %4603 = vmatprep.subr.bf16.mxu0 0
      %4604 = vmatpush2.bf16.msra.mxu0 0
      %4605 = vmatprep.mubr.bf16.mxu0 0
      %4606 = vmatmul.mubr.bf16.gmra.mxu0 %v3305
      %v4607 = vpop.f32.mrf.mxu0
      %v4608 = vadd.f32 0.0, %v4607
      %v4609 = vpop.f32.mrf.mxu0
      %v4610 = vpop.f32.mrf.mxu0
      %v4611 = vadd.f32 0.0, %v4610
      %v4612 = vpop.f32.mrf.mxu0
      %4613 = vmatprep.mubr.bf16.mxu0 0
      %4614 = vmatmul.mubr.bf16.gmra.mxu0 %v3308
      %v4615 = vpop.f32.mrf.mxu0
      %v4616 = vadd.f32 0.0, %v4615
      %v4617 = vpop.f32.mrf.mxu0
      %v4618 = vpop.f32.mrf.mxu0
      %v4619 = vadd.f32 0.0, %v4618
      %v4620 = vpop.f32.mrf.mxu0
      %4621 = vmatprep.mubr.bf16.mxu0 0
      %4622 = vmatmul.mubr.bf16.gmra.mxu0 %v3311
      %v4623 = vpop.f32.mrf.mxu0
      %v4624 = vadd.f32 0.0, %v4623
      %v4625 = vpop.f32.mrf.mxu0
      %v4626 = vpop.f32.mrf.mxu0
      %v4627 = vadd.f32 0.0, %v4626
      %v4628 = vpop.f32.mrf.mxu0
      %4629 = vmatprep.mubr.bf16.mxu0 0
      %4630 = vmatmul.mubr.bf16.gmra.mxu0 %v3314
      %v4631 = vpop.f32.mrf.mxu0
      %v4632 = vadd.f32 0.0, %v4631
      %v4633 = vpop.f32.mrf.mxu0
      %v4634 = vpop.f32.mrf.mxu0
      %v4635 = vadd.f32 0.0, %v4634
      %v4636 = vpop.f32.mrf.mxu0
      %4637 = vmatprep.mubr.bf16.mxu0 0
      %4638 = vmatmul.mubr.bf16.gmra.mxu0 %v3317
      %v4639 = vpop.f32.mrf.mxu0
      %v4640 = vadd.f32 0.0, %v4639
      %v4641 = vpop.f32.mrf.mxu0
      %v4642 = vpop.f32.mrf.mxu0
      %v4643 = vadd.f32 0.0, %v4642
      %v4644 = vpop.f32.mrf.mxu0
      %4645 = vmatprep.mubr.bf16.mxu0 0
      %4646 = vmatmul.mubr.bf16.gmra.mxu0 %v3320
      %v4647 = vpop.f32.mrf.mxu0
      %v4648 = vadd.f32 0.0, %v4647
      %v4649 = vpop.f32.mrf.mxu0
      %v4650 = vpop.f32.mrf.mxu0
      %v4651 = vadd.f32 0.0, %v4650
      %v4652 = vpop.f32.mrf.mxu0
      %4653 = vmatprep.mubr.bf16.mxu0 0
      %4654 = vmatmul.mubr.bf16.gmra.mxu0 %v3323
      %v4655 = vpop.f32.mrf.mxu0
      %v4656 = vadd.f32 0.0, %v4655
      %v4657 = vpop.f32.mrf.mxu0
      %v4658 = vpop.f32.mrf.mxu0
      %v4659 = vadd.f32 0.0, %v4658
      %v4660 = vpop.f32.mrf.mxu0
      %4661 = vmatprep.mubr.bf16.mxu0 0
      %4662 = vmatmul.mubr.bf16.gmra.mxu0 %v3326
      %v4663 = vpop.f32.mrf.mxu0
      %v4664 = vadd.f32 0.0, %v4663
      %v4665 = vpop.f32.mrf.mxu0
      %v4666 = vpop.f32.mrf.mxu0
      %v4667 = vadd.f32 0.0, %v4666
      %v4668 = vpop.f32.mrf.mxu0
      %4669 = vmatprep.mubr.bf16.mxu0 0
      %4670 = vmatmul.mubr.bf16.gmra.mxu0 %v3329
      %v4671 = vpop.f32.mrf.mxu0
      %v4672 = vadd.f32 0.0, %v4671
      %v4673 = vpop.f32.mrf.mxu0
      %v4674 = vpop.f32.mrf.mxu0
      %v4675 = vadd.f32 0.0, %v4674
      %v4676 = vpop.f32.mrf.mxu0
      %4677 = vmatprep.mubr.bf16.mxu0 0
      %4678 = vmatmul.mubr.bf16.gmra.mxu0 %v3332
      %v4679 = vpop.f32.mrf.mxu0
      %v4680 = vadd.f32 0.0, %v4679
      %v4681 = vpop.f32.mrf.mxu0
      %v4682 = vpop.f32.mrf.mxu0
      %v4683 = vadd.f32 0.0, %v4682
      %v4684 = vpop.f32.mrf.mxu0
      %4685 = vmatprep.mubr.bf16.mxu0 0
      %4686 = vmatmul.mubr.bf16.gmra.mxu0 %v3335
      %v4687 = vpop.f32.mrf.mxu0
      %v4688 = vadd.f32 0.0, %v4687
      %v4689 = vpop.f32.mrf.mxu0
      %v4690 = vpop.f32.mrf.mxu0
      %v4691 = vadd.f32 0.0, %v4690
      %v4692 = vpop.f32.mrf.mxu0
      %4693 = vmatprep.mubr.bf16.mxu0 0
      %4694 = vmatmul.mubr.bf16.gmra.mxu0 %v3338
      %v4695 = vpop.f32.mrf.mxu0
      %v4696 = vadd.f32 0.0, %v4695
      %v4697 = vpop.f32.mrf.mxu0
      %v4698 = vpop.f32.mrf.mxu0
      %v4699 = vadd.f32 0.0, %v4698
      %v4700 = vpop.f32.mrf.mxu0
      %4701 = vmatprep.mubr.bf16.mxu0 0
      %4702 = vmatmul.mubr.bf16.gmra.mxu0 %v3908
      %v4703 = vpop.f32.mrf.mxu0
      %v4704 = vadd.f32 0.0, %v4703
      %v4705 = vpop.f32.mrf.mxu0
      %v4706 = vpop.f32.mrf.mxu0
      %v4707 = vadd.f32 0.0, %v4706
      %v4708 = vpop.f32.mrf.mxu0
      %4709 = vmatprep.mubr.bf16.mxu0 0
      %4710 = vmatmul.mubr.bf16.gmra.mxu0 %v3911
      %v4711 = vpop.f32.mrf.mxu0
      %v4712 = vadd.f32 0.0, %v4711
      %v4713 = vpop.f32.mrf.mxu0
      %v4714 = vpop.f32.mrf.mxu0
      %v4715 = vadd.f32 0.0, %v4714
      %v4716 = vpop.f32.mrf.mxu0
      %4717 = vmatprep.mubr.bf16.mxu0 0
      %4718 = vmatmul.mubr.bf16.gmra.mxu0 %v4568
      %v4719 = vpop.f32.mrf.mxu0
      %v4720 = vadd.f32 0.0, %v4719
      %v4721 = vpop.f32.mrf.mxu0
      %v4722 = vpop.f32.mrf.mxu0
      %v4723 = vadd.f32 0.0, %v4722
      %v4724 = vpop.f32.mrf.mxu0
      %4725 = vmatprep.mubr.bf16.mxu0 0
      %4726 = vmatmul.mubr.bf16.gmra.mxu0 %v4571
      %v4727 = vpop.f32.mrf.mxu0
      %v4728 = vadd.f32 0.0, %v4727
      %v4729 = vpop.f32.mrf.mxu0
      %v4730 = vpop.f32.mrf.mxu0
      %v4731 = vadd.f32 0.0, %v4730
      %v4732 = vpop.f32.mrf.mxu0
      %4733 = vdwg.mxu0
      %v4734 = vadd.f32 %v4516, %v4608
      %v4735 = vadd.f32 %v4517, %v4611
      %v4736 = vadd.f32 %v4518, %v4616
      %v4737 = vadd.f32 %v4519, %v4619
      %v4738 = vadd.f32 %v4520, %v4624
      %v4739 = vadd.f32 %v4521, %v4627
      %v4740 = vadd.f32 %v4522, %v4632
      %v4741 = vadd.f32 %v4523, %v4635
      %v4742 = vadd.f32 %v4524, %v4640
      %v4743 = vadd.f32 %v4525, %v4643
      %v4744 = vadd.f32 %v4526, %v4648
      %v4745 = vadd.f32 %v4527, %v4651
      %v4746 = vadd.f32 %v4528, %v4656
      %v4747 = vadd.f32 %v4529, %v4659
      %v4748 = vadd.f32 %v4530, %v4664
      %v4749 = vadd.f32 %v4531, %v4667
      %v4750 = vadd.f32 %v4532, %v4672
      %v4751 = vadd.f32 %v4533, %v4675
      %v4752 = vadd.f32 %v4534, %v4680
      %v4753 = vadd.f32 %v4535, %v4683
      %v4754 = vadd.f32 %v4536, %v4688
      %v4755 = vadd.f32 %v4537, %v4691
      %v4756 = vadd.f32 %v4538, %v4696
      %v4757 = vadd.f32 %v4539, %v4699
      %v4758 = vadd.f32 %v4540, %v4704
      %v4759 = vadd.f32 %v4541, %v4707
      %v4760 = vadd.f32 %v4542, %v4712
      %v4761 = vadd.f32 %v4543, %v4715
      %v4762 = vadd.f32 %v4544, %v4720
      %v4763 = vadd.f32 %v4545, %v4723
      %v4764 = vadd.f32 %v4546, %v4728
      %v4765 = vadd.f32 %v4547, %v4731
      %v4769 = vrot.slane %v478, 2
      %v4770 = vrot.slane %v479, 2
      %v4771 = vsel %vm662, %v4769, %v4770
      %v4772 = vrot.slane %v480, 2
      %v4773 = vsel %vm662, %v4770, %v4772
      %v4776 = vpack.c.bf16 %v4773, %v4771
      %s4777 = scalar_lea.vmem %s4, 112
      %v4778 = vld [vmem:[%s4777] sm:$0xf]
      %v4779 = vld [vmem:[%s4777 + $0x4] sm:$0xf]
      %v4780 = vld [vmem:[%s4777 + $0x8] sm:$0xf]
      %v4781 = vld [vmem:[%s4777 + $0xc] sm:$0xf]
      %v4786 = vunpack.c.l.b16 %v4778
      %v4787 = vunpack.c.l.b16 %v4779
      %v4788 = vunpack.c.l.b16 %v4780
      %v4789 = vunpack.c.l.b16 %v4781
      %v4790 = vpack.c.b16 %v4787, %v4786
      %v4791 = vpack.c.b16 %v4789, %v4788
      %v4795 = vsel %vm808, %v4776, 0
      %4797 = vmatprep.subr.bf16.mxu0 0
      %4798 = vmatpush1.bf16.msra.mxu0 0
      %4799 = vmatprep.subr.bf16.mxu0 0
      %4800 = vmatpush1.bf16.msra.mxu0 0
      %4801 = vmatprep.subr.bf16.mxu0 0
      %4802 = vmatpush1.bf16.msra.mxu0 0
      %4803 = vmatprep.subr.bf16.mxu0 0
      %4804 = vmatpush1.bf16.msra.mxu0 0
      %4805 = vmatprep.subr.bf16.mxu0 0
      %4806 = vmatpush1.bf16.msra.mxu0 0
      %4807 = vmatprep.subr.bf16.mxu0 0
      %4808 = vmatpush1.bf16.msra.mxu0 0
      %4809 = vmatprep.subr.bf16.mxu0 0
      %4810 = vmatpush1.bf16.msra.mxu0 %v4791
      %4811 = vmatprep.subr.bf16.mxu0 0
      %4812 = vmatpush1.bf16.msra.mxu0 %v4790
      %4813 = vmatprep.subr.bf16.mxu0 0
      %4814 = vmatpush2.bf16.msra.mxu0 0
      %4815 = vmatprep.subr.bf16.mxu0 0
      %4816 = vmatpush2.bf16.msra.mxu0 0
      %4817 = vmatprep.subr.bf16.mxu0 0
      %4818 = vmatpush2.bf16.msra.mxu0 0
      %4819 = vmatprep.subr.bf16.mxu0 0
      %4820 = vmatpush2.bf16.msra.mxu0 0
      %4821 = vmatprep.subr.bf16.mxu0 0
      %4822 = vmatpush2.bf16.msra.mxu0 0
      %4823 = vmatprep.subr.bf16.mxu0 0
      %4824 = vmatpush2.bf16.msra.mxu0 0
      %4825 = vmatprep.subr.bf16.mxu0 0
      %4826 = vmatpush2.bf16.msra.mxu0 0
      %4827 = vmatprep.subr.bf16.mxu0 0
      %4828 = vmatpush2.bf16.msra.mxu0 0
      %4829 = vmatprep.mubr.bf16.mxu0 0
      %4830 = vmatmul.mubr.bf16.gmra.mxu0 %v819
      %v4831 = vpop.f32.mrf.mxu0
      %v4832 = vadd.f32 0.0, %v4831
      %v4833 = vpop.f32.mrf.mxu0
      %v4834 = vpop.f32.mrf.mxu0
      %v4835 = vadd.f32 0.0, %v4834
      %v4836 = vpop.f32.mrf.mxu0
      %4837 = vmatprep.mubr.bf16.mxu0 0
      %4838 = vmatmul.mubr.bf16.gmra.mxu0 %v822
      %v4839 = vpop.f32.mrf.mxu0
      %v4840 = vadd.f32 0.0, %v4839
      %v4841 = vpop.f32.mrf.mxu0
      %v4842 = vpop.f32.mrf.mxu0
      %v4843 = vadd.f32 0.0, %v4842
      %v4844 = vpop.f32.mrf.mxu0
      %4845 = vmatprep.mubr.bf16.mxu0 0
      %4846 = vmatmul.mubr.bf16.gmra.mxu0 %v825
      %v4847 = vpop.f32.mrf.mxu0
      %v4848 = vadd.f32 0.0, %v4847
      %v4849 = vpop.f32.mrf.mxu0
      %v4850 = vpop.f32.mrf.mxu0
      %v4851 = vadd.f32 0.0, %v4850
      %v4852 = vpop.f32.mrf.mxu0
      %4853 = vmatprep.mubr.bf16.mxu0 0
      %4854 = vmatmul.mubr.bf16.gmra.mxu0 %v828
      %v4855 = vpop.f32.mrf.mxu0
      %v4856 = vadd.f32 0.0, %v4855
      %v4857 = vpop.f32.mrf.mxu0
      %v4858 = vpop.f32.mrf.mxu0
      %v4859 = vadd.f32 0.0, %v4858
      %v4860 = vpop.f32.mrf.mxu0
      %4861 = vmatprep.mubr.bf16.mxu0 0
      %4862 = vmatmul.mubr.bf16.gmra.mxu0 %v831
      %v4863 = vpop.f32.mrf.mxu0
      %v4864 = vadd.f32 0.0, %v4863
      %v4865 = vpop.f32.mrf.mxu0
      %v4866 = vpop.f32.mrf.mxu0
      %v4867 = vadd.f32 0.0, %v4866
      %v4868 = vpop.f32.mrf.mxu0
      %4869 = vmatprep.mubr.bf16.mxu0 0
      %4870 = vmatmul.mubr.bf16.gmra.mxu0 %v834
      %v4871 = vpop.f32.mrf.mxu0
      %v4872 = vadd.f32 0.0, %v4871
      %v4873 = vpop.f32.mrf.mxu0
      %v4874 = vpop.f32.mrf.mxu0
      %v4875 = vadd.f32 0.0, %v4874
      %v4876 = vpop.f32.mrf.mxu0
      %4877 = vmatprep.mubr.bf16.mxu0 0
      %4878 = vmatmul.mubr.bf16.gmra.mxu0 %v837
      %v4879 = vpop.f32.mrf.mxu0
      %v4880 = vadd.f32 0.0, %v4879
      %v4881 = vpop.f32.mrf.mxu0
      %v4882 = vpop.f32.mrf.mxu0
      %v4883 = vadd.f32 0.0, %v4882
      %v4884 = vpop.f32.mrf.mxu0
      %4885 = vmatprep.mubr.bf16.mxu0 0
      %4886 = vmatmul.mubr.bf16.gmra.mxu0 %v840
      %v4887 = vpop.f32.mrf.mxu0
      %v4888 = vadd.f32 0.0, %v4887
      %v4889 = vpop.f32.mrf.mxu0
      %v4890 = vpop.f32.mrf.mxu0
      %v4891 = vadd.f32 0.0, %v4890
      %v4892 = vpop.f32.mrf.mxu0
      %4893 = vmatprep.mubr.bf16.mxu0 0
      %4894 = vmatmul.mubr.bf16.gmra.mxu0 %v843
      %v4895 = vpop.f32.mrf.mxu0
      %v4896 = vadd.f32 0.0, %v4895
      %v4897 = vpop.f32.mrf.mxu0
      %v4898 = vpop.f32.mrf.mxu0
      %v4899 = vadd.f32 0.0, %v4898
      %v4900 = vpop.f32.mrf.mxu0
      %4901 = vmatprep.mubr.bf16.mxu0 0
      %4902 = vmatmul.mubr.bf16.gmra.mxu0 %v846
      %v4903 = vpop.f32.mrf.mxu0
      %v4904 = vadd.f32 0.0, %v4903
      %v4905 = vpop.f32.mrf.mxu0
      %v4906 = vpop.f32.mrf.mxu0
      %v4907 = vadd.f32 0.0, %v4906
      %v4908 = vpop.f32.mrf.mxu0
      %4909 = vmatprep.mubr.bf16.mxu0 0
      %4910 = vmatmul.mubr.bf16.gmra.mxu0 %v849
      %v4911 = vpop.f32.mrf.mxu0
      %v4912 = vadd.f32 0.0, %v4911
      %v4913 = vpop.f32.mrf.mxu0
      %v4914 = vpop.f32.mrf.mxu0
      %v4915 = vadd.f32 0.0, %v4914
      %v4916 = vpop.f32.mrf.mxu0
      %4917 = vmatprep.mubr.bf16.mxu0 0
      %4918 = vmatmul.mubr.bf16.gmra.mxu0 %v852
      %v4919 = vpop.f32.mrf.mxu0
      %v4920 = vadd.f32 0.0, %v4919
      %v4921 = vpop.f32.mrf.mxu0
      %v4922 = vpop.f32.mrf.mxu0
      %v4923 = vadd.f32 0.0, %v4922
      %v4924 = vpop.f32.mrf.mxu0
      %4925 = vmatprep.mubr.bf16.mxu0 0
      %4926 = vmatmul.mubr.bf16.gmra.mxu0 %v855
      %v4927 = vpop.f32.mrf.mxu0
      %v4928 = vadd.f32 0.0, %v4927
      %v4929 = vpop.f32.mrf.mxu0
      %v4930 = vpop.f32.mrf.mxu0
      %v4931 = vadd.f32 0.0, %v4930
      %v4932 = vpop.f32.mrf.mxu0
      %4933 = vmatprep.mubr.bf16.mxu0 0
      %4934 = vmatmul.mubr.bf16.gmra.mxu0 %v1876
      %v4935 = vpop.f32.mrf.mxu0
      %v4936 = vadd.f32 0.0, %v4935
      %v4937 = vpop.f32.mrf.mxu0
      %v4938 = vpop.f32.mrf.mxu0
      %v4939 = vadd.f32 0.0, %v4938
      %v4940 = vpop.f32.mrf.mxu0
      %4941 = vmatprep.mubr.bf16.mxu0 0
      %4942 = vmatmul.mubr.bf16.gmra.mxu0 %v2542
      %v4943 = vpop.f32.mrf.mxu0
      %v4944 = vadd.f32 0.0, %v4943
      %v4945 = vpop.f32.mrf.mxu0
      %v4946 = vpop.f32.mrf.mxu0
      %v4947 = vadd.f32 0.0, %v4946
      %v4948 = vpop.f32.mrf.mxu0
      %4949 = vmatprep.mubr.bf16.mxu0 0
      %4950 = vmatmul.mubr.bf16.gmra.mxu0 %v4795
      %v4951 = vpop.f32.mrf.mxu0
      %v4952 = vadd.f32 0.0, %v4951
      %v4953 = vpop.f32.mrf.mxu0
      %v4954 = vpop.f32.mrf.mxu0
      %v4955 = vadd.f32 0.0, %v4954
      %v4956 = vpop.f32.mrf.mxu0
      %4957 = vdwg.mxu0
      %v4958 = vadd.f32 %v4734, %v4832
      %v4959 = vadd.f32 %v4735, %v4835
      %v4960 = vadd.f32 %v4736, %v4840
      %v4961 = vadd.f32 %v4737, %v4843
      %v4962 = vadd.f32 %v4738, %v4848
      %v4963 = vadd.f32 %v4739, %v4851
      %v4964 = vadd.f32 %v4740, %v4856
      %v4965 = vadd.f32 %v4741, %v4859
      %v4966 = vadd.f32 %v4742, %v4864
      %v4967 = vadd.f32 %v4743, %v4867
      %v4968 = vadd.f32 %v4744, %v4872
      %v4969 = vadd.f32 %v4745, %v4875
      %v4970 = vadd.f32 %v4746, %v4880
      %v4971 = vadd.f32 %v4747, %v4883
      %v4972 = vadd.f32 %v4748, %v4888
      %v4973 = vadd.f32 %v4749, %v4891
      %v4974 = vadd.f32 %v4750, %v4896
      %v4975 = vadd.f32 %v4751, %v4899
      %v4976 = vadd.f32 %v4752, %v4904
      %v4977 = vadd.f32 %v4753, %v4907
      %v4978 = vadd.f32 %v4754, %v4912
      %v4979 = vadd.f32 %v4755, %v4915
      %v4980 = vadd.f32 %v4756, %v4920
      %v4981 = vadd.f32 %v4757, %v4923
      %v4982 = vadd.f32 %v4758, %v4928
      %v4983 = vadd.f32 %v4759, %v4931
      %v4984 = vadd.f32 %v4760, %v4936
      %v4985 = vadd.f32 %v4761, %v4939
      %v4986 = vadd.f32 %v4762, %v4944
      %v4987 = vadd.f32 %v4763, %v4947
      %v4988 = vadd.f32 %v4764, %v4952
      %v4989 = vadd.f32 %v4765, %v4955
      %v4990 = vrot.slane %v475, 4
      %v4991 = vrot.slane %v476, 4
      %v4992 = vsel %vm3501, %v4990, %v4991
      %v4993 = vrot.slane %v477, 4
      %v4994 = vsel %vm3501, %v4991, %v4993
      %v4995 = vrot.slane %v478, 4
      %v4996 = vrot.slane %v479, 4
      %v4997 = vsel %vm3501, %v4995, %v4996
      %v4998 = vrot.slane %v480, 4
      %v4999 = vsel %vm3501, %v4996, %v4998
      %v5004 = vpack.c.bf16 %v4994, %v4992
      %v5005 = vpack.c.bf16 %v4999, %v4997
      %s5006 = scalar_lea.vmem %s4, 128
      %v5007 = vld [vmem:[%s5006] sm:$0xf]
      %v5008 = vld [vmem:[%s5006 + $0x4] sm:$0xf]
      %v5009 = vld [vmem:[%s5006 + $0x8] sm:$0xf]
      %v5010 = vld [vmem:[%s5006 + $0xc] sm:$0xf]
      %v5015 = vunpack.c.l.b16 %v5007
      %v5016 = vunpack.c.l.b16 %v5008
      %v5017 = vunpack.c.l.b16 %v5009
      %v5018 = vunpack.c.l.b16 %v5010
      %v5019 = vpack.c.b16 %v5016, %v5015
      %v5020 = vpack.c.b16 %v5018, %v5017
      %v5024 = vsel %vm808, %v5004, 0
      %v5027 = vsel %vm808, %v5005, 0
      %5029 = vmatprep.subr.bf16.mxu0 0
      %5030 = vmatpush1.bf16.msra.mxu0 0
      %5031 = vmatprep.subr.bf16.mxu0 0
      %5032 = vmatpush1.bf16.msra.mxu0 0
      %5033 = vmatprep.subr.bf16.mxu0 0
      %5034 = vmatpush1.bf16.msra.mxu0 0
      %5035 = vmatprep.subr.bf16.mxu0 0
      %5036 = vmatpush1.bf16.msra.mxu0 0
      %5037 = vmatprep.subr.bf16.mxu0 0
      %5038 = vmatpush1.bf16.msra.mxu0 0
      %5039 = vmatprep.subr.bf16.mxu0 0
      %5040 = vmatpush1.bf16.msra.mxu0 0
      %5041 = vmatprep.subr.bf16.mxu0 0
      %5042 = vmatpush1.bf16.msra.mxu0 %v5020
      %5043 = vmatprep.subr.bf16.mxu0 0
      %5044 = vmatpush1.bf16.msra.mxu0 %v5019
      %5045 = vmatprep.subr.bf16.mxu0 0
      %5046 = vmatpush2.bf16.msra.mxu0 0
      %5047 = vmatprep.subr.bf16.mxu0 0
      %5048 = vmatpush2.bf16.msra.mxu0 0
      %5049 = vmatprep.subr.bf16.mxu0 0
      %5050 = vmatpush2.bf16.msra.mxu0 0
      %5051 = vmatprep.subr.bf16.mxu0 0
      %5052 = vmatpush2.bf16.msra.mxu0 0
      %5053 = vmatprep.subr.bf16.mxu0 0
      %5054 = vmatpush2.bf16.msra.mxu0 0
      %5055 = vmatprep.subr.bf16.mxu0 0
      %5056 = vmatpush2.bf16.msra.mxu0 0
      %5057 = vmatprep.subr.bf16.mxu0 0
      %5058 = vmatpush2.bf16.msra.mxu0 0
      %5059 = vmatprep.subr.bf16.mxu0 0
      %5060 = vmatpush2.bf16.msra.mxu0 0
      %5061 = vmatprep.mubr.bf16.mxu0 0
      %5062 = vmatmul.mubr.bf16.gmra.mxu0 %v3660
      %v5063 = vpop.f32.mrf.mxu0
      %v5064 = vadd.f32 0.0, %v5063
      %v5065 = vpop.f32.mrf.mxu0
      %v5066 = vpop.f32.mrf.mxu0
      %v5067 = vadd.f32 0.0, %v5066
      %v5068 = vpop.f32.mrf.mxu0
      %5069 = vmatprep.mubr.bf16.mxu0 0
      %5070 = vmatmul.mubr.bf16.gmra.mxu0 %v3663
      %v5071 = vpop.f32.mrf.mxu0
      %v5072 = vadd.f32 0.0, %v5071
      %v5073 = vpop.f32.mrf.mxu0
      %v5074 = vpop.f32.mrf.mxu0
      %v5075 = vadd.f32 0.0, %v5074
      %v5076 = vpop.f32.mrf.mxu0
      %5077 = vmatprep.mubr.bf16.mxu0 0
      %5078 = vmatmul.mubr.bf16.gmra.mxu0 %v3666
      %v5079 = vpop.f32.mrf.mxu0
      %v5080 = vadd.f32 0.0, %v5079
      %v5081 = vpop.f32.mrf.mxu0
      %v5082 = vpop.f32.mrf.mxu0
      %v5083 = vadd.f32 0.0, %v5082
      %v5084 = vpop.f32.mrf.mxu0
      %5085 = vmatprep.mubr.bf16.mxu0 0
      %5086 = vmatmul.mubr.bf16.gmra.mxu0 %v3669
      %v5087 = vpop.f32.mrf.mxu0
      %v5088 = vadd.f32 0.0, %v5087
      %v5089 = vpop.f32.mrf.mxu0
      %v5090 = vpop.f32.mrf.mxu0
      %v5091 = vadd.f32 0.0, %v5090
      %v5092 = vpop.f32.mrf.mxu0
      %5093 = vmatprep.mubr.bf16.mxu0 0
      %5094 = vmatmul.mubr.bf16.gmra.mxu0 %v3672
      %v5095 = vpop.f32.mrf.mxu0
      %v5096 = vadd.f32 0.0, %v5095
      %v5097 = vpop.f32.mrf.mxu0
      %v5098 = vpop.f32.mrf.mxu0
      %v5099 = vadd.f32 0.0, %v5098
      %v5100 = vpop.f32.mrf.mxu0
      %5101 = vmatprep.mubr.bf16.mxu0 0
      %5102 = vmatmul.mubr.bf16.gmra.mxu0 %v3675
      %v5103 = vpop.f32.mrf.mxu0
      %v5104 = vadd.f32 0.0, %v5103
      %v5105 = vpop.f32.mrf.mxu0
      %v5106 = vpop.f32.mrf.mxu0
      %v5107 = vadd.f32 0.0, %v5106
      %v5108 = vpop.f32.mrf.mxu0
      %5109 = vmatprep.mubr.bf16.mxu0 0
      %5110 = vmatmul.mubr.bf16.gmra.mxu0 %v3678
      %v5111 = vpop.f32.mrf.mxu0
      %v5112 = vadd.f32 0.0, %v5111
      %v5113 = vpop.f32.mrf.mxu0
      %v5114 = vpop.f32.mrf.mxu0
      %v5115 = vadd.f32 0.0, %v5114
      %v5116 = vpop.f32.mrf.mxu0
      %5117 = vmatprep.mubr.bf16.mxu0 0
      %5118 = vmatmul.mubr.bf16.gmra.mxu0 %v3681
      %v5119 = vpop.f32.mrf.mxu0
      %v5120 = vadd.f32 0.0, %v5119
      %v5121 = vpop.f32.mrf.mxu0
      %v5122 = vpop.f32.mrf.mxu0
      %v5123 = vadd.f32 0.0, %v5122
      %v5124 = vpop.f32.mrf.mxu0
      %5125 = vmatprep.mubr.bf16.mxu0 0
      %5126 = vmatmul.mubr.bf16.gmra.mxu0 %v3684
      %v5127 = vpop.f32.mrf.mxu0
      %v5128 = vadd.f32 0.0, %v5127
      %v5129 = vpop.f32.mrf.mxu0
      %v5130 = vpop.f32.mrf.mxu0
      %v5131 = vadd.f32 0.0, %v5130
      %v5132 = vpop.f32.mrf.mxu0
      %5133 = vmatprep.mubr.bf16.mxu0 0
      %5134 = vmatmul.mubr.bf16.gmra.mxu0 %v3687
      %v5135 = vpop.f32.mrf.mxu0
      %v5136 = vadd.f32 0.0, %v5135
      %v5137 = vpop.f32.mrf.mxu0
      %v5138 = vpop.f32.mrf.mxu0
      %v5139 = vadd.f32 0.0, %v5138
      %v5140 = vpop.f32.mrf.mxu0
      %5141 = vmatprep.mubr.bf16.mxu0 0
      %5142 = vmatmul.mubr.bf16.gmra.mxu0 %v3690
      %v5143 = vpop.f32.mrf.mxu0
      %v5144 = vadd.f32 0.0, %v5143
      %v5145 = vpop.f32.mrf.mxu0
      %v5146 = vpop.f32.mrf.mxu0
      %v5147 = vadd.f32 0.0, %v5146
      %v5148 = vpop.f32.mrf.mxu0
      %5149 = vmatprep.mubr.bf16.mxu0 0
      %5150 = vmatmul.mubr.bf16.gmra.mxu0 %v3693
      %v5151 = vpop.f32.mrf.mxu0
      %v5152 = vadd.f32 0.0, %v5151
      %v5153 = vpop.f32.mrf.mxu0
      %v5154 = vpop.f32.mrf.mxu0
      %v5155 = vadd.f32 0.0, %v5154
      %v5156 = vpop.f32.mrf.mxu0
      %5157 = vmatprep.mubr.bf16.mxu0 0
      %5158 = vmatmul.mubr.bf16.gmra.mxu0 %v4350
      %v5159 = vpop.f32.mrf.mxu0
      %v5160 = vadd.f32 0.0, %v5159
      %v5161 = vpop.f32.mrf.mxu0
      %v5162 = vpop.f32.mrf.mxu0
      %v5163 = vadd.f32 0.0, %v5162
      %v5164 = vpop.f32.mrf.mxu0
      %5165 = vmatprep.mubr.bf16.mxu0 0
      %5166 = vmatmul.mubr.bf16.gmra.mxu0 %v4353
      %v5167 = vpop.f32.mrf.mxu0
      %v5168 = vadd.f32 0.0, %v5167
      %v5169 = vpop.f32.mrf.mxu0
      %v5170 = vpop.f32.mrf.mxu0
      %v5171 = vadd.f32 0.0, %v5170
      %v5172 = vpop.f32.mrf.mxu0
      %5173 = vmatprep.mubr.bf16.mxu0 0
      %5174 = vmatmul.mubr.bf16.gmra.mxu0 %v5024
      %v5175 = vpop.f32.mrf.mxu0
      %v5176 = vadd.f32 0.0, %v5175
      %v5177 = vpop.f32.mrf.mxu0
      %v5178 = vpop.f32.mrf.mxu0
      %v5179 = vadd.f32 0.0, %v5178
      %v5180 = vpop.f32.mrf.mxu0
      %5181 = vmatprep.mubr.bf16.mxu0 0
      %5182 = vmatmul.mubr.bf16.gmra.mxu0 %v5027
      %v5183 = vpop.f32.mrf.mxu0
      %v5184 = vadd.f32 0.0, %v5183
      %v5185 = vpop.f32.mrf.mxu0
      %v5186 = vpop.f32.mrf.mxu0
      %v5187 = vadd.f32 0.0, %v5186
      %v5188 = vpop.f32.mrf.mxu0
      %5189 = vdwg.mxu0
      %v5190 = vadd.f32 %v4958, %v5064
      %v5191 = vadd.f32 %v4959, %v5067
      %v5192 = vadd.f32 %v4960, %v5072
      %v5193 = vadd.f32 %v4961, %v5075
      %v5194 = vadd.f32 %v4962, %v5080
      %v5195 = vadd.f32 %v4963, %v5083
      %v5196 = vadd.f32 %v4964, %v5088
      %v5197 = vadd.f32 %v4965, %v5091
      %v5198 = vadd.f32 %v4966, %v5096
      %v5199 = vadd.f32 %v4967, %v5099
      %v5200 = vadd.f32 %v4968, %v5104
      %v5201 = vadd.f32 %v4969, %v5107
      %v5202 = vadd.f32 %v4970, %v5112
      %v5203 = vadd.f32 %v4971, %v5115
      %v5204 = vadd.f32 %v4972, %v5120
      %v5205 = vadd.f32 %v4973, %v5123
      %v5206 = vadd.f32 %v4974, %v5128
      %v5207 = vadd.f32 %v4975, %v5131
      %v5208 = vadd.f32 %v4976, %v5136
      %v5209 = vadd.f32 %v4977, %v5139
      %v5210 = vadd.f32 %v4978, %v5144
      %v5211 = vadd.f32 %v4979, %v5147
      %v5212 = vadd.f32 %v4980, %v5152
      %v5213 = vadd.f32 %v4981, %v5155
      %v5214 = vadd.f32 %v4982, %v5160
      %v5215 = vadd.f32 %v4983, %v5163
      %v5216 = vadd.f32 %v4984, %v5168
      %v5217 = vadd.f32 %v4985, %v5171
      %v5218 = vadd.f32 %v4986, %v5176
      %v5219 = vadd.f32 %v4987, %v5179
      %v5220 = vadd.f32 %v4988, %v5184
      %v5221 = vadd.f32 %v4989, %v5187
      %v5222 = vld [vmem:[%s5] sm:$0x1]
      %v5224 = vlaneseq
      %v5225 = vshrl.u32 %v5224, 7
      %v5226 = vsub.s32 0, %v5225
      %v5227 = vrot.slane %v5222, %v5226
      %v5229 = vmul.f32 %v5190, %v5227
      %v5230 = vmul.f32 %v5191, %v5227
      %v5231 = vmul.f32 %v5192, %v5227
      %v5232 = vmul.f32 %v5193, %v5227
      %v5233 = vmul.f32 %v5194, %v5227
      %v5234 = vmul.f32 %v5195, %v5227
      %v5235 = vmul.f32 %v5196, %v5227
      %v5236 = vmul.f32 %v5197, %v5227
      %v5237 = vmul.f32 %v5198, %v5227
      %v5238 = vmul.f32 %v5199, %v5227
      %v5239 = vmul.f32 %v5200, %v5227
      %v5240 = vmul.f32 %v5201, %v5227
      %v5241 = vmul.f32 %v5202, %v5227
      %v5242 = vmul.f32 %v5203, %v5227
      %v5243 = vmul.f32 %v5204, %v5227
      %v5244 = vmul.f32 %v5205, %v5227
      %v5245 = vmul.f32 %v5206, %v5227
      %v5246 = vmul.f32 %v5207, %v5227
      %v5247 = vmul.f32 %v5208, %v5227
      %v5248 = vmul.f32 %v5209, %v5227
      %v5249 = vmul.f32 %v5210, %v5227
      %v5250 = vmul.f32 %v5211, %v5227
      %v5251 = vmul.f32 %v5212, %v5227
      %v5252 = vmul.f32 %v5213, %v5227
      %v5253 = vmul.f32 %v5214, %v5227
      %v5254 = vmul.f32 %v5215, %v5227
      %v5255 = vmul.f32 %v5216, %v5227
      %v5256 = vmul.f32 %v5217, %v5227
      %v5257 = vmul.f32 %v5218, %v5227
      %v5258 = vmul.f32 %v5219, %v5227
      %v5259 = vmul.f32 %v5220, %v5227
      %v5260 = vmul.f32 %v5221, %v5227
      %v5261 = vld [vmem:[%s6] sm:$0x1]
      %v5263 = vlaneseq
      %v5264 = vshrl.u32 %v5263, 7
      %v5265 = vsub.s32 0, %v5264
      %v5266 = vrot.slane %v5261, %v5265
      %v5268 = vadd.f32 %v5229, %v5266
      %v5269 = vadd.f32 %v5230, %v5266
      %v5270 = vadd.f32 %v5231, %v5266
      %v5271 = vadd.f32 %v5232, %v5266
      %v5272 = vadd.f32 %v5233, %v5266
      %v5273 = vadd.f32 %v5234, %v5266
      %v5274 = vadd.f32 %v5235, %v5266
      %v5275 = vadd.f32 %v5236, %v5266
      %v5276 = vadd.f32 %v5237, %v5266
      %v5277 = vadd.f32 %v5238, %v5266
      %v5278 = vadd.f32 %v5239, %v5266
      %v5279 = vadd.f32 %v5240, %v5266
      %v5280 = vadd.f32 %v5241, %v5266
      %v5281 = vadd.f32 %v5242, %v5266
      %v5282 = vadd.f32 %v5243, %v5266
      %v5283 = vadd.f32 %v5244, %v5266
      %v5284 = vadd.f32 %v5245, %v5266
      %v5285 = vadd.f32 %v5246, %v5266
      %v5286 = vadd.f32 %v5247, %v5266
      %v5287 = vadd.f32 %v5248, %v5266
      %v5288 = vadd.f32 %v5249, %v5266
      %v5289 = vadd.f32 %v5250, %v5266
      %v5290 = vadd.f32 %v5251, %v5266
      %v5291 = vadd.f32 %v5252, %v5266
      %v5292 = vadd.f32 %v5253, %v5266
      %v5293 = vadd.f32 %v5254, %v5266
      %v5294 = vadd.f32 %v5255, %v5266
      %v5295 = vadd.f32 %v5256, %v5266
      %v5296 = vadd.f32 %v5257, %v5266
      %v5297 = vadd.f32 %v5258, %v5266
      %v5298 = vadd.f32 %v5259, %v5266
      %v5299 = vadd.f32 %v5260, %v5266
      %v5300 = vmax.f32 %v5268, 0.0
      %v5301 = vmax.f32 %v5269, 0.0
      %v5302 = vmax.f32 %v5270, 0.0
      %v5303 = vmax.f32 %v5271, 0.0
      %v5304 = vmax.f32 %v5272, 0.0
      %v5305 = vmax.f32 %v5273, 0.0
      %v5306 = vmax.f32 %v5274, 0.0
      %v5307 = vmax.f32 %v5275, 0.0
      %v5308 = vmax.f32 %v5276, 0.0
      %v5309 = vmax.f32 %v5277, 0.0
      %v5310 = vmax.f32 %v5278, 0.0
      %v5311 = vmax.f32 %v5279, 0.0
      %v5312 = vmax.f32 %v5280, 0.0
      %v5313 = vmax.f32 %v5281, 0.0
      %v5314 = vmax.f32 %v5282, 0.0
      %v5315 = vmax.f32 %v5283, 0.0
      %v5316 = vmax.f32 %v5284, 0.0
      %v5317 = vmax.f32 %v5285, 0.0
      %v5318 = vmax.f32 %v5286, 0.0
      %v5319 = vmax.f32 %v5287, 0.0
      %v5320 = vmax.f32 %v5288, 0.0
      %v5321 = vmax.f32 %v5289, 0.0
      %v5322 = vmax.f32 %v5290, 0.0
      %v5323 = vmax.f32 %v5291, 0.0
      %v5324 = vmax.f32 %v5292, 0.0
      %v5325 = vmax.f32 %v5293, 0.0
      %v5326 = vmax.f32 %v5294, 0.0
      %v5327 = vmax.f32 %v5295, 0.0
      %v5328 = vmax.f32 %v5296, 0.0
      %v5329 = vmax.f32 %v5297, 0.0
      %v5330 = vmax.f32 %v5298, 0.0
      %v5331 = vmax.f32 %v5299, 0.0
      %v5332 = vadd.f32 %v3036, %v5300
      %v5333 = vadd.f32 %v3037, %v5301
      %v5334 = vadd.f32 %v3038, %v5302
      %v5335 = vadd.f32 %v3039, %v5303
      %v5336 = vadd.f32 %v3040, %v5304
      %v5337 = vadd.f32 %v3041, %v5305
      %v5338 = vadd.f32 %v3042, %v5306
      %v5339 = vadd.f32 %v3043, %v5307
      %v5340 = vadd.f32 %v3044, %v5308
      %v5341 = vadd.f32 %v3045, %v5309
      %v5342 = vadd.f32 %v3046, %v5310
      %v5343 = vadd.f32 %v3047, %v5311
      %v5344 = vadd.f32 %v3048, %v5312
      %v5345 = vadd.f32 %v3049, %v5313
      %v5346 = vadd.f32 %v3050, %v5314
      %v5347 = vadd.f32 %v3051, %v5315
      %v5348 = vadd.f32 %v3052, %v5316
      %v5349 = vadd.f32 %v3053, %v5317
      %v5350 = vadd.f32 %v3054, %v5318
      %v5351 = vadd.f32 %v3055, %v5319
      %v5352 = vadd.f32 %v3056, %v5320
      %v5353 = vadd.f32 %v3057, %v5321
      %v5354 = vadd.f32 %v3058, %v5322
      %v5355 = vadd.f32 %v3059, %v5323
      %v5356 = vadd.f32 %v3060, %v5324
      %v5357 = vadd.f32 %v3061, %v5325
      %v5358 = vadd.f32 %v3062, %v5326
      %v5359 = vadd.f32 %v3063, %v5327
      %v5360 = vadd.f32 %v3064, %v5328
      %v5361 = vadd.f32 %v3065, %v5329
      %v5362 = vadd.f32 %v3066, %v5330
      %v5363 = vadd.f32 %v3067, %v5331
      %v5364 = vsel %vm808, %v5332, 0.0
      %v5365 = vsel %vm808, %v5333, 0.0
      %v5366 = vadd.f32 %v5364, %v5365
      %v5367 = vsel %vm808, %v5334, 0.0
      %v5368 = vadd.f32 %v5366, %v5367
      %v5369 = vsel %vm808, %v5335, 0.0
      %v5370 = vadd.f32 %v5368, %v5369
      %v5371 = vsel %vm808, %v5336, 0.0
      %v5372 = vadd.f32 %v5370, %v5371
      %v5373 = vsel %vm808, %v5337, 0.0
      %v5374 = vadd.f32 %v5372, %v5373
      %v5375 = vsel %vm808, %v5338, 0.0
      %v5376 = vadd.f32 %v5374, %v5375
      %v5377 = vsel %vm808, %v5339, 0.0
      %v5378 = vadd.f32 %v5376, %v5377
      %v5379 = vsel %vm808, %v5340, 0.0
      %v5380 = vadd.f32 %v5378, %v5379
      %v5381 = vsel %vm808, %v5341, 0.0
      %v5382 = vadd.f32 %v5380, %v5381
      %v5383 = vsel %vm808, %v5342, 0.0
      %v5384 = vadd.f32 %v5382, %v5383
      %v5385 = vsel %vm808, %v5343, 0.0
      %v5386 = vadd.f32 %v5384, %v5385
      %v5387 = vsel %vm808, %v5344, 0.0
      %v5388 = vadd.f32 %v5386, %v5387
      %v5389 = vsel %vm808, %v5345, 0.0
      %v5390 = vadd.f32 %v5388, %v5389
      %v5391 = vsel %vm808, %v5346, 0.0
      %v5392 = vadd.f32 %v5390, %v5391
      %v5393 = vsel %vm808, %v5347, 0.0
      %v5394 = vadd.f32 %v5392, %v5393
      %v5395 = vsel %vm808, %v5348, 0.0
      %v5396 = vadd.f32 %v5394, %v5395
      %v5397 = vsel %vm808, %v5349, 0.0
      %v5398 = vadd.f32 %v5396, %v5397
      %v5399 = vsel %vm808, %v5350, 0.0
      %v5400 = vadd.f32 %v5398, %v5399
      %v5401 = vsel %vm808, %v5351, 0.0
      %v5402 = vadd.f32 %v5400, %v5401
      %v5403 = vsel %vm808, %v5352, 0.0
      %v5404 = vadd.f32 %v5402, %v5403
      %v5405 = vsel %vm808, %v5353, 0.0
      %v5406 = vadd.f32 %v5404, %v5405
      %v5407 = vsel %vm808, %v5354, 0.0
      %v5408 = vadd.f32 %v5406, %v5407
      %v5409 = vsel %vm808, %v5355, 0.0
      %v5410 = vadd.f32 %v5408, %v5409
      %v5411 = vsel %vm808, %v5356, 0.0
      %v5412 = vadd.f32 %v5410, %v5411
      %v5413 = vsel %vm808, %v5357, 0.0
      %v5414 = vadd.f32 %v5412, %v5413
      %v5415 = vsel %vm808, %v5358, 0.0
      %v5416 = vadd.f32 %v5414, %v5415
      %v5417 = vsel %vm808, %v5359, 0.0
      %v5418 = vadd.f32 %v5416, %v5417
      %v5419 = vsel %vm808, %v5360, 0.0
      %v5420 = vadd.f32 %v5418, %v5419
      %v5421 = vsel %vm808, %v5361, 0.0
      %v5422 = vadd.f32 %v5420, %v5421
      %v5423 = vsel %vm808, %v5362, 0.0
      %v5424 = vadd.f32 %v5422, %v5423
      %v5425 = vsel %vm808, %v5363, 0.0
      %v5426 = vadd.f32 %v5424, %v5425
      %v5427 = vrot.slane %v5426, 4
      %v5428 = vadd.f32 %v5426, %v5427
      %v5429 = vrot.slane %v5428, 2
      %v5430 = vadd.f32 %v5428, %v5429
      %v5431 = vrot.slane %v5430, 1
      %v5432 = vadd.f32 %v5430, %v5431
      %v5433 = vld [vmem:[%s7] sm:$0xff]
      %v5434 = vld [vmem:[%s7 + $0x8] sm:$0xff]
      %v5435 = vld [vmem:[%s7 + $0x10] sm:$0xff]
      %v5436 = vld [vmem:[%s7 + $0x18] sm:$0xff]
      %v5438 = vsel %vm808, %v5432, 0
      %5440 = vmatprep.subr.mxu0 0.0
      %5441 = vmatpush1.msra.mxu0 0.0
      %5442 = vmatprep.subr.mxu0 0.0
      %5443 = vmatpush1.msra.mxu0 0.0
      %5444 = vmatprep.subr.mxu0 0.0
      %5445 = vmatpush1.msra.mxu0 0.0
      %5446 = vmatprep.subr.mxu0 0.0
      %5447 = vmatpush1.msra.mxu0 0.0
      %5448 = vmatprep.subr.mxu0 0.0
      %5449 = vmatpush1.msra.mxu0 0.0
      %5450 = vmatprep.subr.mxu0 0.0
      %5451 = vmatpush1.msra.mxu0 0.0
      %5452 = vmatprep.subr.mxu0 0.0
      %5453 = vmatpush1.msra.mxu0 0.0
      %5454 = vmatprep.subr.mxu0 0.0
      %5455 = vmatpush1.msra.mxu0 0.0
      %5456 = vmatprep.subr.mxu0 0.0
      %5457 = vmatpush1.msra.mxu0 0.0
      %5458 = vmatprep.subr.mxu0 0.0
      %5459 = vmatpush1.msra.mxu0 0.0
      %5460 = vmatprep.subr.mxu0 0.0
      %5461 = vmatpush1.msra.mxu0 0.0
      %5462 = vmatprep.subr.mxu0 0.0
      %5463 = vmatpush1.msra.mxu0 0.0
      %5464 = vmatprep.subr.mxu0 0.0
      %5465 = vmatpush1.msra.mxu0 %v5436
      %5466 = vmatprep.subr.mxu0 0.0
      %5467 = vmatpush1.msra.mxu0 %v5435
      %5468 = vmatprep.subr.mxu0 0.0
      %5469 = vmatpush1.msra.mxu0 %v5434
      %5470 = vmatprep.subr.mxu0 0.0
      %5471 = vmatpush1.msra.mxu0 %v5433
      %5472 = vmatprep.subr.mxu0 0.0
      %5473 = vmatpush2.msra.mxu0 0.0
      %5474 = vmatprep.subr.mxu0 0.0
      %5475 = vmatpush2.msra.mxu0 0.0
      %5476 = vmatprep.subr.mxu0 0.0
      %5477 = vmatpush2.msra.mxu0 0.0
      %5478 = vmatprep.subr.mxu0 0.0
      %5479 = vmatpush2.msra.mxu0 0.0
      %5480 = vmatprep.subr.mxu0 0.0
      %5481 = vmatpush2.msra.mxu0 0.0
      %5482 = vmatprep.subr.mxu0 0.0
      %5483 = vmatpush2.msra.mxu0 0.0
      %5484 = vmatprep.subr.mxu0 0.0
      %5485 = vmatpush2.msra.mxu0 0.0
      %5486 = vmatprep.subr.mxu0 0.0
      %5487 = vmatpush2.msra.mxu0 0.0
      %5488 = vmatprep.subr.mxu0 0.0
      %5489 = vmatpush2.msra.mxu0 0.0
      %5490 = vmatprep.subr.mxu0 0.0
      %5491 = vmatpush2.msra.mxu0 0.0
      %5492 = vmatprep.subr.mxu0 0.0
      %5493 = vmatpush2.msra.mxu0 0.0
      %5494 = vmatprep.subr.mxu0 0.0
      %5495 = vmatpush2.msra.mxu0 0.0
      %5496 = vmatprep.subr.mxu0 0.0
      %5497 = vmatpush2.msra.mxu0 0.0
      %5498 = vmatprep.subr.mxu0 0.0
      %5499 = vmatpush2.msra.mxu0 0.0
      %5500 = vmatprep.subr.mxu0 0.0
      %5501 = vmatpush2.msra.mxu0 0.0
      %5502 = vmatprep.subr.mxu0 0.0
      %5503 = vmatpush2.msra.mxu0 0.0
      %5504 = vmatprep.mubr.f32.mxu0 0.0
      %5505 = vmatmul.mubr.f32.gmra.mxu0 %v5438
      %v5506 = vpop.f32.mrf.mxu0
      %v5507 = vadd.f32 0.0, %v5506
      %v5508 = vpop.f32.mrf.mxu0
      %5509 = vdwg.mxu0
      %v5510 = vmax.f32 %v5507, 0.0
      %v5511 = vld [vmem:[%s8] sm:$0x3]
      %vm5512 = vcmask 15360
      %v5514 = vsel %vm5512, %v5510, 0
      %vm5516 = vcmask 1041408
      %v5518 = vsel %vm5516, %v5511, 0
      %5520 = vmatprep.subr.mxu0 0.0
      %5521 = vmatpush1.msra.mxu0 0.0
      %5522 = vmatprep.subr.mxu0 0.0
      %5523 = vmatpush1.msra.mxu0 0.0
      %5524 = vmatprep.subr.mxu0 0.0
      %5525 = vmatpush1.msra.mxu0 0.0
      %5526 = vmatprep.subr.mxu0 0.0
      %5527 = vmatpush1.msra.mxu0 0.0
      %5528 = vmatprep.subr.mxu0 0.0
      %5529 = vmatpush1.msra.mxu0 0.0
      %5530 = vmatprep.subr.mxu0 0.0
      %5531 = vmatpush1.msra.mxu0 0.0
      %5532 = vmatprep.subr.mxu0 0.0
      %5533 = vmatpush1.msra.mxu0 0.0
      %5534 = vmatprep.subr.mxu0 0.0
      %5535 = vmatpush1.msra.mxu0 0.0
      %5536 = vmatprep.subr.mxu0 0.0
      %5537 = vmatpush1.msra.mxu0 0.0
      %5538 = vmatprep.subr.mxu0 0.0
      %5539 = vmatpush1.msra.mxu0 0.0
      %5540 = vmatprep.subr.mxu0 0.0
      %5541 = vmatpush1.msra.mxu0 0.0
      %5542 = vmatprep.subr.mxu0 0.0
      %5543 = vmatpush1.msra.mxu0 0.0
      %5544 = vmatprep.subr.mxu0 0.0
      %5545 = vmatpush1.msra.mxu0 0.0
      %5546 = vmatprep.subr.mxu0 0.0
      %5547 = vmatpush1.msra.mxu0 0.0
      %5548 = vmatprep.subr.mxu0 0.0
      %5549 = vmatpush1.msra.mxu0 0.0
      %5550 = vmatprep.subr.mxu0 0.0
      %5551 = vmatpush1.msra.mxu0 %v5518
      %5552 = vmatprep.subr.mxu0 0.0
      %5553 = vmatpush2.msra.mxu0 0.0
      %5554 = vmatprep.subr.mxu0 0.0
      %5555 = vmatpush2.msra.mxu0 0.0
      %5556 = vmatprep.subr.mxu0 0.0
      %5557 = vmatpush2.msra.mxu0 0.0
      %5558 = vmatprep.subr.mxu0 0.0
      %5559 = vmatpush2.msra.mxu0 0.0
      %5560 = vmatprep.subr.mxu0 0.0
      %5561 = vmatpush2.msra.mxu0 0.0
      %5562 = vmatprep.subr.mxu0 0.0
      %5563 = vmatpush2.msra.mxu0 0.0
      %5564 = vmatprep.subr.mxu0 0.0
      %5565 = vmatpush2.msra.mxu0 0.0
      %5566 = vmatprep.subr.mxu0 0.0
      %5567 = vmatpush2.msra.mxu0 0.0
      %5568 = vmatprep.subr.mxu0 0.0
      %5569 = vmatpush2.msra.mxu0 0.0
      %5570 = vmatprep.subr.mxu0 0.0
      %5571 = vmatpush2.msra.mxu0 0.0
      %5572 = vmatprep.subr.mxu0 0.0
      %5573 = vmatpush2.msra.mxu0 0.0
      %5574 = vmatprep.subr.mxu0 0.0
      %5575 = vmatpush2.msra.mxu0 0.0
      %5576 = vmatprep.subr.mxu0 0.0
      %5577 = vmatpush2.msra.mxu0 0.0
      %5578 = vmatprep.subr.mxu0 0.0
      %5579 = vmatpush2.msra.mxu0 0.0
      %5580 = vmatprep.subr.mxu0 0.0
      %5581 = vmatpush2.msra.mxu0 0.0
      %5582 = vmatprep.subr.mxu0 0.0
      %5583 = vmatpush2.msra.mxu0 0.0
      %5584 = vmatprep.mubr.f32.mxu0 0.0
      %5585 = vmatmul.mubr.f32.gmra.mxu0 %v5514
      %v5586 = vpop.f32.mrf.mxu0
      %v5587 = vadd.f32 0.0, %v5586
      %v5588 = vpop.f32.mrf.mxu0
      %5589 = vdwg.mxu0
      %v5590 = vld [vmem:[%s9] sm:$0x3]
      %v5592 = vsel %vm5516, %v5590, 0
      %5594 = vmatprep.subr.mxu0 0.0
      %5595 = vmatpush1.msra.mxu0 0.0
      %5596 = vmatprep.subr.mxu0 0.0
      %5597 = vmatpush1.msra.mxu0 0.0
      %5598 = vmatprep.subr.mxu0 0.0
      %5599 = vmatpush1.msra.mxu0 0.0
      %5600 = vmatprep.subr.mxu0 0.0
      %5601 = vmatpush1.msra.mxu0 0.0
      %5602 = vmatprep.subr.mxu0 0.0
      %5603 = vmatpush1.msra.mxu0 0.0
      %5604 = vmatprep.subr.mxu0 0.0
      %5605 = vmatpush1.msra.mxu0 0.0
      %5606 = vmatprep.subr.mxu0 0.0
      %5607 = vmatpush1.msra.mxu0 0.0
      %5608 = vmatprep.subr.mxu0 0.0
      %5609 = vmatpush1.msra.mxu0 0.0
      %5610 = vmatprep.subr.mxu0 0.0
      %5611 = vmatpush1.msra.mxu0 0.0
      %5612 = vmatprep.subr.mxu0 0.0
      %5613 = vmatpush1.msra.mxu0 0.0
      %5614 = vmatprep.subr.mxu0 0.0
      %5615 = vmatpush1.msra.mxu0 0.0
      %5616 = vmatprep.subr.mxu0 0.0
      %5617 = vmatpush1.msra.mxu0 0.0
      %5618 = vmatprep.subr.mxu0 0.0
      %5619 = vmatpush1.msra.mxu0 0.0
      %5620 = vmatprep.subr.mxu0 0.0
      %5621 = vmatpush1.msra.mxu0 0.0
      %5622 = vmatprep.subr.mxu0 0.0
      %5623 = vmatpush1.msra.mxu0 0.0
      %5624 = vmatprep.subr.mxu0 0.0
      %5625 = vmatpush1.msra.mxu0 %v5592
      %5626 = vmatprep.subr.mxu0 0.0
      %5627 = vmatpush2.msra.mxu0 0.0
      %5628 = vmatprep.subr.mxu0 0.0
      %5629 = vmatpush2.msra.mxu0 0.0
      %5630 = vmatprep.subr.mxu0 0.0
      %5631 = vmatpush2.msra.mxu0 0.0
      %5632 = vmatprep.subr.mxu0 0.0
      %5633 = vmatpush2.msra.mxu0 0.0
      %5634 = vmatprep.subr.mxu0 0.0
      %5635 = vmatpush2.msra.mxu0 0.0
      %5636 = vmatprep.subr.mxu0 0.0
      %5637 = vmatpush2.msra.mxu0 0.0
      %5638 = vmatprep.subr.mxu0 0.0
      %5639 = vmatpush2.msra.mxu0 0.0
      %5640 = vmatprep.subr.mxu0 0.0
      %5641 = vmatpush2.msra.mxu0 0.0
      %5642 = vmatprep.subr.mxu0 0.0
      %5643 = vmatpush2.msra.mxu0 0.0
      %5644 = vmatprep.subr.mxu0 0.0
      %5645 = vmatpush2.msra.mxu0 0.0
      %5646 = vmatprep.subr.mxu0 0.0
      %5647 = vmatpush2.msra.mxu0 0.0
      %5648 = vmatprep.subr.mxu0 0.0
      %5649 = vmatpush2.msra.mxu0 0.0
      %5650 = vmatprep.subr.mxu0 0.0
      %5651 = vmatpush2.msra.mxu0 0.0
      %5652 = vmatprep.subr.mxu0 0.0
      %5653 = vmatpush2.msra.mxu0 0.0
      %5654 = vmatprep.subr.mxu0 0.0
      %5655 = vmatpush2.msra.mxu0 0.0
      %5656 = vmatprep.subr.mxu0 0.0
      %5657 = vmatpush2.msra.mxu0 0.0
      %5658 = vmatprep.mubr.f32.mxu0 0.0
      %5659 = vmatmul.mubr.f32.gmra.mxu0 %v5514
      %v5660 = vpop.f32.mrf.mxu0
      %v5661 = vadd.f32 0.0, %v5660
      %v5662 = vpop.f32.mrf.mxu0
      %5663 = vdwg.mxu0
      %v5664 = vmax.f32 %v5587, %v5661
      %v5665 = vsub.f32 %v5587, %v5664
      %v5666 = vmul.f32 %v5665, 1.442695
      %v5667 = vpow.pop %v5666
      %v5668 = vsub.f32 %v5661, %v5664
      %v5669 = vmul.f32 %v5668, 1.442695
      %v5670 = vpow.pop %v5669
      %v5671 = vadd.f32 %v5667, %v5670
      %v5672 = vrcp.pop %v5671
      %v5673 = vmul.f32 1.0, %v5672
      %v5674 = vmul.f32 %v5667, %v5673
      %v5675 = vlaneseq
      %v5676 = vshrl.u32 %v5675, 7
      %v5677 = vsub.s32 0, %v5676
      %v5678 = vrot.slane %v5674, %v5677
      %v5679 = vmul.f32 %v5678, %v3036
      %v5680 = vmul.f32 %v5678, %v3037
      %v5681 = vmul.f32 %v5678, %v3038
      %v5682 = vmul.f32 %v5678, %v3039
      %v5683 = vmul.f32 %v5678, %v3040
      %v5684 = vmul.f32 %v5678, %v3041
      %v5685 = vmul.f32 %v5678, %v3042
      %v5686 = vmul.f32 %v5678, %v3043
      %v5687 = vmul.f32 %v5678, %v3044
      %v5688 = vmul.f32 %v5678, %v3045
      %v5689 = vmul.f32 %v5678, %v3046
      %v5690 = vmul.f32 %v5678, %v3047
      %v5691 = vmul.f32 %v5678, %v3048
      %v5692 = vmul.f32 %v5678, %v3049
      %v5693 = vmul.f32 %v5678, %v3050
      %v5694 = vmul.f32 %v5678, %v3051
      %v5695 = vmul.f32 %v5678, %v3052
      %v5696 = vmul.f32 %v5678, %v3053
      %v5697 = vmul.f32 %v5678, %v3054
      %v5698 = vmul.f32 %v5678, %v3055
      %v5699 = vmul.f32 %v5678, %v3056
      %v5700 = vmul.f32 %v5678, %v3057
      %v5701 = vmul.f32 %v5678, %v3058
      %v5702 = vmul.f32 %v5678, %v3059
      %v5703 = vmul.f32 %v5678, %v3060
      %v5704 = vmul.f32 %v5678, %v3061
      %v5705 = vmul.f32 %v5678, %v3062
      %v5706 = vmul.f32 %v5678, %v3063
      %v5707 = vmul.f32 %v5678, %v3064
      %v5708 = vmul.f32 %v5678, %v3065
      %v5709 = vmul.f32 %v5678, %v3066
      %v5710 = vmul.f32 %v5678, %v3067
      %v5711 = vmul.f32 %v5670, %v5673
      %v5712 = vlaneseq
      %v5713 = vshrl.u32 %v5712, 7
      %v5714 = vsub.s32 0, %v5713
      %v5715 = vrot.slane %v5711, %v5714
      %v5716 = vmul.f32 %v5715, %v5300
      %v5717 = vmul.f32 %v5715, %v5301
      %v5718 = vmul.f32 %v5715, %v5302
      %v5719 = vmul.f32 %v5715, %v5303
      %v5720 = vmul.f32 %v5715, %v5304
      %v5721 = vmul.f32 %v5715, %v5305
      %v5722 = vmul.f32 %v5715, %v5306
      %v5723 = vmul.f32 %v5715, %v5307
      %v5724 = vmul.f32 %v5715, %v5308
      %v5725 = vmul.f32 %v5715, %v5309
      %v5726 = vmul.f32 %v5715, %v5310
      %v5727 = vmul.f32 %v5715, %v5311
      %v5728 = vmul.f32 %v5715, %v5312
      %v5729 = vmul.f32 %v5715, %v5313
      %v5730 = vmul.f32 %v5715, %v5314
      %v5731 = vmul.f32 %v5715, %v5315
      %v5732 = vmul.f32 %v5715, %v5316
      %v5733 = vmul.f32 %v5715, %v5317
      %v5734 = vmul.f32 %v5715, %v5318
      %v5735 = vmul.f32 %v5715, %v5319
      %v5736 = vmul.f32 %v5715, %v5320
      %v5737 = vmul.f32 %v5715, %v5321
      %v5738 = vmul.f32 %v5715, %v5322
      %v5739 = vmul.f32 %v5715, %v5323
      %v5740 = vmul.f32 %v5715, %v5324
      %v5741 = vmul.f32 %v5715, %v5325
      %v5742 = vmul.f32 %v5715, %v5326
      %v5743 = vmul.f32 %v5715, %v5327
      %v5744 = vmul.f32 %v5715, %v5328
      %v5745 = vmul.f32 %v5715, %v5329
      %v5746 = vmul.f32 %v5715, %v5330
      %v5747 = vmul.f32 %v5715, %v5331
      %v5748 = vadd.f32 %v5679, %v5716
      %v5749 = vadd.f32 %v5680, %v5717
      %v5750 = vadd.f32 %v5681, %v5718
      %v5751 = vadd.f32 %v5682, %v5719
      %v5752 = vadd.f32 %v5683, %v5720
      %v5753 = vadd.f32 %v5684, %v5721
      %v5754 = vadd.f32 %v5685, %v5722
      %v5755 = vadd.f32 %v5686, %v5723
      %v5756 = vadd.f32 %v5687, %v5724
      %v5757 = vadd.f32 %v5688, %v5725
      %v5758 = vadd.f32 %v5689, %v5726
      %v5759 = vadd.f32 %v5690, %v5727
      %v5760 = vadd.f32 %v5691, %v5728
      %v5761 = vadd.f32 %v5692, %v5729
      %v5762 = vadd.f32 %v5693, %v5730
      %v5763 = vadd.f32 %v5694, %v5731
      %v5764 = vadd.f32 %v5695, %v5732
      %v5765 = vadd.f32 %v5696, %v5733
      %v5766 = vadd.f32 %v5697, %v5734
      %v5767 = vadd.f32 %v5698, %v5735
      %v5768 = vadd.f32 %v5699, %v5736
      %v5769 = vadd.f32 %v5700, %v5737
      %v5770 = vadd.f32 %v5701, %v5738
      %v5771 = vadd.f32 %v5702, %v5739
      %v5772 = vadd.f32 %v5703, %v5740
      %v5773 = vadd.f32 %v5704, %v5741
      %v5774 = vadd.f32 %v5705, %v5742
      %v5775 = vadd.f32 %v5706, %v5743
      %v5776 = vadd.f32 %v5707, %v5744
      %v5777 = vadd.f32 %v5708, %v5745
      %v5778 = vadd.f32 %v5709, %v5746
      %v5779 = vadd.f32 %v5710, %v5747
      %5780 = vst.msk [vmem:[%s359] sm:$0xff] %vm808, %v5748
      %5781 = vst.msk [vmem:[%s359 + $0x8] sm:$0xff] %vm808, %v5749
      %5782 = vst.msk [vmem:[%s359 + $0x10] sm:$0xff] %vm808, %v5750
      %5783 = vst.msk [vmem:[%s359 + $0x18] sm:$0xff] %vm808, %v5751
      %5784 = vst.msk [vmem:[%s359 + $0x20] sm:$0xff] %vm808, %v5752
      %5785 = vst.msk [vmem:[%s359 + $0x28] sm:$0xff] %vm808, %v5753
      %5786 = vst.msk [vmem:[%s359 + $0x30] sm:$0xff] %vm808, %v5754
      %5787 = vst.msk [vmem:[%s359 + $0x38] sm:$0xff] %vm808, %v5755
      %5788 = vst.msk [vmem:[%s359 + $0x40] sm:$0xff] %vm808, %v5756
      %5789 = vst.msk [vmem:[%s359 + $0x48] sm:$0xff] %vm808, %v5757
      %5790 = vst.msk [vmem:[%s359 + $0x50] sm:$0xff] %vm808, %v5758
      %5791 = vst.msk [vmem:[%s359 + $0x58] sm:$0xff] %vm808, %v5759
      %5792 = vst.msk [vmem:[%s359 + $0x60] sm:$0xff] %vm808, %v5760
      %5793 = vst.msk [vmem:[%s359 + $0x68] sm:$0xff] %vm808, %v5761
      %5794 = vst.msk [vmem:[%s359 + $0x70] sm:$0xff] %vm808, %v5762
      %5795 = vst.msk [vmem:[%s359 + $0x78] sm:$0xff] %vm808, %v5763
      %5796 = vst.msk [vmem:[%s359 + $0x80] sm:$0xff] %vm808, %v5764
      %5797 = vst.msk [vmem:[%s359 + $0x88] sm:$0xff] %vm808, %v5765
      %5798 = vst.msk [vmem:[%s359 + $0x90] sm:$0xff] %vm808, %v5766
      %5799 = vst.msk [vmem:[%s359 + $0x98] sm:$0xff] %vm808, %v5767
      %5800 = vst.msk [vmem:[%s359 + $0xa0] sm:$0xff] %vm808, %v5768
      %5801 = vst.msk [vmem:[%s359 + $0xa8] sm:$0xff] %vm808, %v5769
      %5802 = vst.msk [vmem:[%s359 + $0xb0] sm:$0xff] %vm808, %v5770
      %5803 = vst.msk [vmem:[%s359 + $0xb8] sm:$0xff] %vm808, %v5771
      %5804 = vst.msk [vmem:[%s359 + $0xc0] sm:$0xff] %vm808, %v5772
      %5805 = vst.msk [vmem:[%s359 + $0xc8] sm:$0xff] %vm808, %v5773
      %5806 = vst.msk [vmem:[%s359 + $0xd0] sm:$0xff] %vm808, %v5774
      %5807 = vst.msk [vmem:[%s359 + $0xd8] sm:$0xff] %vm808, %v5775
      %5808 = vst.msk [vmem:[%s359 + $0xe0] sm:$0xff] %vm808, %v5776
      %5809 = vst.msk [vmem:[%s359 + $0xe8] sm:$0xff] %vm808, %v5777
      %5810 = vst.msk [vmem:[%s359 + $0xf0] sm:$0xff] %vm808, %v5778
      %5811 = vst.msk [vmem:[%s359 + $0xf8] sm:$0xff] %vm808, %v5779
      %p5812 = scmp.lt.s32.totalorder %s21, 1
      %s5813 = scalar_select %p5812, %s21, 1
      %s5814 = smul.addr %s5813, 32
      %s5815 = smul.addr %s5814, 8
      %s5816 = scalar_lea.vmem %s10, %s5815
      // Predicated region
      $region61: #{tpu_custom_call.1} parent=59 // pred_check
        %p5817 = pneg %p254
      $region62: #{tpu_custom_call.1} parent=59 // pred_check_branch
        %5819 = sbr.rel (%p5817) target = $region64
      $region63: #{tpu_custom_call.1} parent=59 // pred_region
        _
      $region64: #{tpu_custom_call.1} parent=59 // pred_fallthru
        _
    $region60: #{tpu_custom_call.1} parent=5 // pred_fallthru
      _
    %p5820 = scmp.le.s32.totalorder 2, %s16
    // Predicated region
    $region65: #{tpu_custom_call.1} parent=5 // pred_check
      %p5821 = pneg %p5820
    $region66: #{tpu_custom_call.1} parent=5 // pred_check_branch
      %5823 = sbr.rel (%p5821) target = $region68
    $region67: #{tpu_custom_call.1} parent=5 // pred_region
      %s5824 = ssub.s32 %s16, 2
      // Predicated region
      $region69: #{tpu_custom_call.1} parent=67 // pred_check
        %p5825 = pneg %p260
      $region70: #{tpu_custom_call.1} parent=67 // pred_check_branch
        %5827 = sbr.rel (%p5825) target = $region72
      $region71: #{tpu_custom_call.1} parent=67 // pred_region
        %p5828 = scmp.lt.s32.totalorder %s22, 1
        %s5829 = scalar_select %p5828, %s22, 1
        %s5830 = smul.addr %s5829, 32
        %s5831 = smul.addr %s5830, 8
        %s5832 = scalar_lea.vmem %s10, %s5831
      $region72: #{tpu_custom_call.1} parent=67 // pred_fallthru
        _
    $region68: #{tpu_custom_call.1} parent=5 // pred_fallthru
      _
  $region6: #{tpu_custom_call.1} parent=0 // loop_footer
    %s20 = sadd.s32 1, %s16
  $region7: #{tpu_custom_call.1} parent=0 // loop_footer_branch
    %15 = sbr.rel target = $region3
  $region8: #{tpu_custom_call.1} parent=0 // loop_exit
    _

</llo_original>
